<compile_context>
chip_gen: v7x
topology: tpu7x:2x2x1
jax: 0.10.0
libtpu: 0.0.40
codegen_flags: <defaults>
</compile_context>

<pallas_src>
import math

import jax
import jax.numpy as jnp
from jax.experimental import pallas as pl
from jax.experimental.pallas import tpu as pltpu


# ----------------------------------------------------------------------------
# Batch tiling policy: fill the MXU M dim but keep >= 2 parallel grid steps
# (v7x has two TensorCores sharded over "parallel" axes; v5e/v6e ignore this).
# ----------------------------------------------------------------------------
def _pick_batch_tile(B, L):
    max_rows = 256                                    # target rows per grid step
    bt = max(1, min(B, max_rows // max(L, 1)))
    if B >= 2:
        bt = min(bt, max(1, B // 2))                  # keep >= 2 grid steps
    while B % bt != 0:
        bt -= 1
    return bt


# ----------------------------------------------------------------------------
# Fused Conv1d stack kernel:
#   'same' zero padding via pltpu.roll-shifted views + edge mask (no concats),
#   K accumulating dots per conv layer, ReLU, 1x1 projection, optional PE / tanh.
# ----------------------------------------------------------------------------
def _make_conv_stack_kernel(conv_cfg, Bt, L, final_act, has_pe):
    """conv_cfg: tuple of (kernel_size, dilation) per hidden conv layer."""
    rows = Bt * L

    def kernel(*refs):
        x_ref = refs[0]
        o_ref = refs[-1]
        h = x_ref[...].astype(jnp.float32).reshape(rows, x_ref.shape[-1])

        # local position inside each sequence, used to mask the circular shift
        row_local = jax.lax.broadcasted_iota(jnp.int32, (Bt, L, 1), 1).reshape(rows, 1)

        idx = 1
        for (K, dil) in conv_cfg:
            w_ref = refs[idx]                              # (K, Cin, Cout) bf16
            b_ref = refs[idx + 1]                          # (1, Cout) f32
            idx += 2
            cin = h.shape[-1]
            cout = w_ref.shape[-1]
            pad = dil * (K - 1) // 2                       # 'same' for odd K
            acc = jnp.zeros((rows, cout), jnp.float32)
            for t in range(K):
                off = t * dil - pad
                # per-tap contribution computed on unshifted rows ...
                if cin == 1:
                    # degenerate contraction dim: broadcast multiply, no matmul
                    y_t = h * w_ref[t].astype(jnp.float32)
                else:
                    y_t = jnp.dot(h.astype(jnp.bfloat16), w_ref[t],
                                  preferred_element_type=jnp.float32)
                # ... then shifted into place with an XLU roll + edge mask
                if off != 0:
                    y_t = pltpu.roll(y_t, shift=(-off) % rows, axis=0)
                    valid = jnp.logical_and(row_local + off >= 0,
                                            row_local + off < L)
                    y_t = jnp.where(valid, y_t, 0.0)
                acc = acc + y_t
            h = jnp.maximum(acc + b_ref[...], 0.0)         # ReLU between convs

        # final 1x1 projection conv (plain matmul); output lanes pre-padded to
        # a lane-dense width in the wrapper when needed.
        wp = refs[idx][...]                                # (Cl, Cout_p) bf16
        bp = refs[idx + 1][...]                            # (1, Cout_p) f32
        idx += 2
        y = jnp.dot(h.astype(jnp.bfloat16), wp,
                    preferred_element_type=jnp.float32) + bp
        y = y.reshape(Bt, L, wp.shape[-1])
        if has_pe:
            y = y + refs[idx][...][None]                   # positional embedding
            idx += 1
        if final_act == "tanh":
            y = jnp.tanh(y)                                # fused model-level tanh
        o_ref[...] = y

    return kernel


def conv_stack(x, conv_ws, conv_bs, proj_w, proj_b, dilations,
               final_act=None, pe=None, pad_out_to=None):
    B, L, Cin = x.shape
    Cout = proj_w.shape[1]
    out_C = Cout
    if pad_out_to is not None and Cout < pad_out_to:
        # Lane-dense output store: pad the projection's output lanes at trace
        # time (free) and slice back in the wrapper.
        proj_w = jnp.pad(proj_w, ((0, 0), (0, pad_out_to - Cout)))
        proj_b = jnp.pad(proj_b, ((0, 0), (0, pad_out_to - Cout)))
        out_C = pad_out_to

    Bt = _pick_batch_tile(B, L)
    conv_cfg = tuple((w.shape[0], d) for w, d in zip(conv_ws, dilations))
    kernel = _make_conv_stack_kernel(conv_cfg, Bt, L, final_act, pe is not None)

    args = [x]
    in_specs = [pl.BlockSpec((Bt, L, Cin), lambda i: (i, 0, 0))]
    for w, b in zip(conv_ws, conv_bs):
        args += [w, b]
        in_specs += [pl.BlockSpec(w.shape, lambda i: (0, 0, 0)),
                     pl.BlockSpec(b.shape, lambda i: (0, 0))]
    args += [proj_w, proj_b]
    in_specs += [pl.BlockSpec(proj_w.shape, lambda i: (0, 0)),
                 pl.BlockSpec(proj_b.shape, lambda i: (0, 0))]
    if pe is not None:
        args.append(pe)
        in_specs.append(pl.BlockSpec(pe.shape, lambda i: (0, 0)))

    out = pl.pallas_call(
        kernel,
        out_shape=jax.ShapeDtypeStruct((B, L, out_C), jnp.float32),
        grid=(B // Bt,),
        in_specs=in_specs,
        out_specs=pl.BlockSpec((Bt, L, out_C), lambda i: (i, 0, 0)),
        compiler_params=pltpu.CompilerParams(dimension_semantics=("parallel",)),
    )(*args)

    if out_C != Cout:
        out = out[..., :Cout]
    return out


# ----------------------------------------------------------------------------
# Fully fused transformer kernel: grid=(B/Bt, n_layer), residual resident in
# the revisited output VMEM block across the layer axis.
# ----------------------------------------------------------------------------
def _make_transformer_kernel(Bt, L, C, H, causal):
    Dh = C // H
    scale = 1.0 / math.sqrt(Dh)
    rows = Bt * L

    def ln(z, g, b, eps=1e-5):
        mu = jnp.mean(z, axis=-1, keepdims=True)
        zc = z - mu
        var = jnp.mean(zc * zc, axis=-1, keepdims=True)
        return zc * jax.lax.rsqrt(var + eps) * g + b

    def gelu(z):
        return 0.5 * z * (1.0 + jnp.tanh(0.7978845608028654 * (z + 0.044715 * z * z * z)))

    def mm(a, w):     # weights already bf16; only the activation is cast
        return jnp.dot(a.astype(jnp.bfloat16), w, preferred_element_type=jnp.float32)

    def kernel(x_ref, ln1g, ln1b, wq, bq, wk, bk, wv, bv, wproj, bproj,
               ln2g, ln2b, wfc, bfc, wfc2, bfc2, lnfg, lnfb, o_ref):
        layer = pl.program_id(1)
        n_layer = pl.num_programs(1)

        # x's index_map is layer-independent, so its block is DMA'd only once
        # per batch block; this copies it into the resident residual block.
        @pl.when(layer == 0)
        def _():
            o_ref[...] = x_ref[...]

        h = o_ref[...].reshape(rows, C)                     # (Bt*L, C) f32

        # ---- attention ----
        a = ln(h, ln1g[0], ln1b[0])
        if causal:
            ri = jax.lax.broadcasted_iota(jnp.int32, (L, L), 0)
            ci = jax.lax.broadcasted_iota(jnp.int32, (L, L), 1)
            bias2d = jnp.where(ci <= ri, 0.0, -1e30).astype(jnp.float32)

        attn = jnp.zeros((rows, C), jnp.float32)
        for head in range(H):                               # static loop, major-dim
            qh = (mm(a, wq[0, head]) + bq[0, head]).reshape(Bt, L, Dh)
            kh = (mm(a, wk[0, head]) + bk[0, head]).reshape(Bt, L, Dh)
            vh = (mm(a, wv[0, head]) + bv[0, head]).reshape(Bt, L, Dh)
            s = jnp.einsum("bld,bmd->blm",
                           qh.astype(jnp.bfloat16), kh.astype(jnp.bfloat16),
                           preferred_element_type=jnp.float32) * scale
            if causal:
                s = s + bias2d[None]
            m = jnp.max(s, axis=-1, keepdims=True)
            p = jnp.exp(s - m)
            # approx reciprocal (EUP slot, ~1e-3 rel error); use approx=False
            # if exact parity with the f32 PyTorch reference is required.
            p = p * pl.reciprocal(jnp.sum(p, axis=-1, keepdims=True), approx=True)
            oh = jnp.einsum("blm,bmd->bld",
                            p.astype(jnp.bfloat16), vh.astype(jnp.bfloat16),
                            preferred_element_type=jnp.float32)
            # accumulate each head straight through the output projection
            attn = attn + mm(oh.reshape(rows, Dh), wproj[0, head])
        h = h + attn + bproj[0]

        # ---- MLP ----
        a2 = ln(h, ln2g[0], ln2b[0])
        f = gelu(mm(a2, wfc[0]) + bfc[0])
        h = h + mm(f, wfc2[0]) + bfc2[0]

        @pl.when(layer < n_layer - 1)
        def _():
            o_ref[...] = h.reshape(Bt, L, C)

        # final LayerNorm fused into the last layer's iteration
        @pl.when(layer == n_layer - 1)
        def _():
            o_ref[...] = ln(h, lnfg[...], lnfb[...]).reshape(Bt, L, C)

    return kernel


def transformer(x, tp, lnf_g, lnf_b, *, n_head, causal):
    B, L, C = x.shape
    nL = tp["wq"].shape[0]
    Bt = _pick_batch_tile(B, L)
    kernel = _make_transformer_kernel(Bt, L, C, n_head, causal)

    def perlayer(arr):
        blk = (1,) + tuple(arr.shape[1:])
        if arr.ndim == 3:
            return pl.BlockSpec(blk, lambda b, l: (l, 0, 0))
        return pl.BlockSpec(blk, lambda b, l: (l, 0, 0, 0))

    seq_spec = pl.BlockSpec((Bt, L, C), lambda b, l: (b, 0, 0))
    in_specs = [
        seq_spec,
        perlayer(tp["ln1_g"]), perlayer(tp["ln1_b"]),
        perlayer(tp["wq"]), perlayer(tp["bq"]),
        perlayer(tp["wk"]), perlayer(tp["bk"]),
        perlayer(tp["wv"]), perlayer(tp["bv"]),
        perlayer(tp["wproj"]), perlayer(tp["bproj"]),
        perlayer(tp["ln2_g"]), perlayer(tp["ln2_b"]),
        perlayer(tp["wfc"]), perlayer(tp["bfc"]),
        perlayer(tp["wfc2"]), perlayer(tp["bfc2"]),
        pl.BlockSpec(lnf_g.shape, lambda b, l: (0, 0)),
        pl.BlockSpec(lnf_b.shape, lambda b, l: (0, 0)),
    ]

    return pl.pallas_call(
        kernel,
        out_shape=jax.ShapeDtypeStruct((B, L, C), jnp.float32),
        grid=(B // Bt, nL),
        in_specs=in_specs,
        out_specs=seq_spec,
        compiler_params=pltpu.CompilerParams(
            dimension_semantics=("parallel", "arbitrary"),
            vmem_limit_bytes=48 * 1024 * 1024),       # headroom within v7x 64 MiB
    )(x, tp["ln1_g"], tp["ln1_b"], tp["wq"], tp["bq"], tp["wk"], tp["bk"],
      tp["wv"], tp["bv"], tp["wproj"], tp["bproj"], tp["ln2_g"], tp["ln2_b"],
      tp["wfc"], tp["bfc"], tp["wfc2"], tp["bfc2"], lnf_g, lnf_b)


# ----------------------------------------------------------------------------
# Parameter initialization (arrays only — static config lives in cfg).
# Matmul weights are stored in bfloat16; biases / LN params / PE in float32.
# ----------------------------------------------------------------------------
def init_params(key, cfg):
    C = cfg["n_embd"]
    nL = cfg["n_layer"]
    H = cfg["n_head"]
    Dh = C // H

    def nrm(k, shape, dtype=jnp.bfloat16, std=0.02):
        return (jax.random.normal(k, shape, jnp.float32) * std).astype(dtype)

    keys = iter(jax.random.split(key, 64))
    p = {}

    # Encoder convs + 1x1 projection to n_embd
    enc_dims = [cfg["input_channels"]] + cfg["encoder_hidden_dims"]
    p["enc_w"] = [nrm(next(keys),
                      (cfg["encoder_kernel_sizes"][i], enc_dims[i], enc_dims[i + 1]))
                  for i in range(len(cfg["encoder_hidden_dims"]))]
    p["enc_b"] = [nrm(next(keys), (1, enc_dims[i + 1]), jnp.float32)
                  for i in range(len(cfg["encoder_hidden_dims"]))]
    p["enc_proj_w"] = nrm(next(keys), (enc_dims[-1], C))
    p["enc_proj_b"] = nrm(next(keys), (1, C), jnp.float32)

    # Transformer (per-layer stacks; attention weights pre-split per head)
    p["wpe"] = nrm(next(keys), (cfg["block_size"], C), jnp.float32)
    p["tr"] = dict(
        ln1_g=jnp.ones((nL, 1, C), jnp.float32), ln1_b=jnp.zeros((nL, 1, C), jnp.float32),
        wq=nrm(next(keys), (nL, H, C, Dh)), bq=jnp.zeros((nL, H, 1, Dh), jnp.float32),
        wk=nrm(next(keys), (nL, H, C, Dh)), bk=jnp.zeros((nL, H, 1, Dh), jnp.float32),
        wv=nrm(next(keys), (nL, H, C, Dh)), bv=jnp.zeros((nL, H, 1, Dh), jnp.float32),
        wproj=nrm(next(keys), (nL, H, Dh, C)), bproj=jnp.zeros((nL, 1, C), jnp.float32),
        ln2_g=jnp.ones((nL, 1, C), jnp.float32), ln2_b=jnp.zeros((nL, 1, C), jnp.float32),
        wfc=nrm(next(keys), (nL, C, 4 * C)), bfc=jnp.zeros((nL, 1, 4 * C), jnp.float32),
        wfc2=nrm(next(keys), (nL, 4 * C, C)), bfc2=jnp.zeros((nL, 1, C), jnp.float32),
    )
    p["lnf_g"] = jnp.ones((1, C), jnp.float32)
    p["lnf_b"] = jnp.zeros((1, C), jnp.float32)

    # Decoder convs + 1x1 projection to output channels
    dec_dims = [C] + cfg["decoder_hidden_dims"]
    p["dec_w"] = [nrm(next(keys),
                      (cfg["decoder_kernel_sizes"][i], dec_dims[i], dec_dims[i + 1]))
                  for i in range(len(cfg["decoder_hidden_dims"]))]
    p["dec_b"] = [nrm(next(keys), (1, dec_dims[i + 1]), jnp.float32)
                  for i in range(len(cfg["decoder_hidden_dims"]))]
    p["dec_proj_w"] = nrm(next(keys), (dec_dims[-1], cfg["output_channels"]))
    p["dec_proj_b"] = nrm(next(keys), (1, cfg["output_channels"]), jnp.float32)
    return p


# ----------------------------------------------------------------------------
# Forward pass
# ----------------------------------------------------------------------------
def brainformer_forward(params, x, cfg):
    B, L, _ = x.shape
    causal = not cfg["bidirectional"]

    # ---- Conv1DEncoder (fused convs + ReLU + 1x1 proj + positional embedding) ----
    pe = params["wpe"][:L]
    h = conv_stack(x.astype(jnp.float32), params["enc_w"], params["enc_b"],
                   params["enc_proj_w"], params["enc_proj_b"],
                   cfg["encoder_dilations"], final_act=None, pe=pe)

    # ---- SimplifiedDecoder (fused transformer: all layers + final LN) ----
    h = transformer(h, params["tr"], params["lnf_g"], params["lnf_b"],
                    n_head=cfg["n_head"], causal=causal)

    # ---- Conv1DDecoder (fused convs + ReLU + 1x1 proj + model-level tanh),
    #      output lanes padded to 128 in the wrapper for dense stores ----
    y = conv_stack(h, params["dec_w"], params["dec_b"],
                   params["dec_proj_w"], params["dec_proj_b"],
                   cfg["decoder_dilations"], final_act="tanh", pe=None,
                   pad_out_to=128)
    return y


# ----------------------------------------------------------------------------
# Main
# ----------------------------------------------------------------------------
if __name__ == "__main__":
    cfg = dict(
        input_channels=1,
        encoder_hidden_dims=[8, 16], encoder_kernel_sizes=[3, 3], encoder_dilations=[1, 1],
        block_size=64, n_layer=2, n_head=4, n_embd=32,
        bidirectional=False,
        decoder_hidden_dims=[16, 8], decoder_kernel_sizes=[3, 3], decoder_dilations=[1, 1],
        output_channels=1,
    )

    key = jax.random.PRNGKey(0)
    pkey, xkey = jax.random.split(key)
    params = init_params(pkey, cfg)

    B, L = 2, 16
    x = jax.random.normal(xkey, (B, L, cfg["input_channels"]), jnp.float32)

    fwd = jax.jit(lambda p, xx: brainformer_forward(p, xx, cfg))
    out = fwd(params, x)
    out = jax.block_until_ready(out)

    assert out.shape == (B, L, cfg["output_channels"]), out.shape
    assert bool(jnp.all(jnp.isfinite(out)))
    print("KERNEL_OK")
</pallas_src>

<mosaic_0001>
module attributes {stable_mosaic.version = 11 : i64} {
  func.func @kernel(%arg0: i32, %arg1: memref<1x16x1xf32, #tpu.memory_space<vmem>>, %arg2: memref<3x1x8xbf16, #tpu.memory_space<vmem>>, %arg3: memref<1x8xf32, #tpu.memory_space<vmem>>, %arg4: memref<3x8x16xbf16, #tpu.memory_space<vmem>>, %arg5: memref<1x16xf32, #tpu.memory_space<vmem>>, %arg6: memref<16x32xbf16, #tpu.memory_space<vmem>>, %arg7: memref<1x32xf32, #tpu.memory_space<vmem>>, %arg8: memref<16x32xf32, #tpu.memory_space<vmem>>, %arg9: memref<1x16x32xf32, #tpu.memory_space<vmem>>) attributes {dimension_semantics = [#tpu.dimension_semantics<parallel>], iteration_bounds = array<i64: 2>, scalar_prefetch = 0 : i64, scratch_operands = 0 : i64, tpu.core_type = #tpu.core_type<tc>, window_params = [{transform_indices = @transform_0, window_bounds = array<i64: 1, 16, 1>}, {pipeline_mode = #tpu.pipeline_mode<synchronous>, transform_indices = @transform_1, window_bounds = array<i64: 3, 1, 8>}, {pipeline_mode = #tpu.pipeline_mode<synchronous>, transform_indices = @transform_2, window_bounds = array<i64: 1, 8>}, {pipeline_mode = #tpu.pipeline_mode<synchronous>, transform_indices = @transform_3, window_bounds = array<i64: 3, 8, 16>}, {pipeline_mode = #tpu.pipeline_mode<synchronous>, transform_indices = @transform_4, window_bounds = array<i64: 1, 16>}, {pipeline_mode = #tpu.pipeline_mode<synchronous>, transform_indices = @transform_5, window_bounds = array<i64: 16, 32>}, {pipeline_mode = #tpu.pipeline_mode<synchronous>, transform_indices = @transform_6, window_bounds = array<i64: 1, 32>}, {pipeline_mode = #tpu.pipeline_mode<synchronous>, transform_indices = @transform_7, window_bounds = array<i64: 16, 32>}, {transform_indices = @transform_8, window_bounds = array<i64: 1, 16, 32>}]} {
    %c0 = arith.constant 0 : index
    %c0_0 = arith.constant 0 : index
    %c0_1 = arith.constant 0 : index
    %0 = vector.load %arg1[%c0, %c0_0, %c0_1] : memref<1x16x1xf32, #tpu.memory_space<vmem>>, vector<1x16x1xf32>
    %1 = vector.shape_cast %0 : vector<1x16x1xf32> to vector<16x1xf32>
    %2 = tpu.iota {dimensions = array<i32: 1>} : vector<1x16x1xi32>
    %3 = vector.shape_cast %2 : vector<1x16x1xi32> to vector<16x1xi32>
    %cst = arith.constant 0.000000e+00 : f32
    %4 = vector.broadcast %cst : f32 to vector<16x8xf32>
    %c0_2 = arith.constant 0 : index
    %c0_3 = arith.constant 0 : index
    %c0_4 = arith.constant 0 : index
    %5 = vector.load %arg2[%c0_2, %c0_3, %c0_4] : memref<3x1x8xbf16, #tpu.memory_space<vmem>>, vector<1x1x8xbf16>
    %6 = vector.shape_cast %5 : vector<1x1x8xbf16> to vector<1x8xbf16>
    %7 = arith.extf %6 : vector<1x8xbf16> to vector<1x8xf32>
    %8 = vector.broadcast %1 : vector<16x1xf32> to vector<16x8xf32>
    %9 = vector.broadcast %7 : vector<1x8xf32> to vector<16x8xf32>
    %10 = arith.mulf %8, %9 : vector<16x8xf32>
    %c1_i32 = arith.constant 1 : i32
    %11 = tpu.dynamic_rotate %10 by %c1_i32 dim 0 : vector<16x8xf32>, i32 -> vector<16x8xf32>
    %c-1_i32 = arith.constant -1 : i32
    %12 = vector.broadcast %c-1_i32 : i32 to vector<16x1xi32>
    %13 = arith.addi %3, %12 : vector<16x1xi32>
    %c0_i32 = arith.constant 0 : i32
    %14 = vector.broadcast %c0_i32 : i32 to vector<16x1xi32>
    %15 = arith.cmpi sge, %13, %14 : vector<16x1xi32>
    %c-1_i32_5 = arith.constant -1 : i32
    %16 = vector.broadcast %c-1_i32_5 : i32 to vector<16x1xi32>
    %17 = arith.addi %3, %16 : vector<16x1xi32>
    %c16_i32 = arith.constant 16 : i32
    %18 = vector.broadcast %c16_i32 : i32 to vector<16x1xi32>
    %19 = arith.cmpi slt, %17, %18 : vector<16x1xi32>
    %20 = arith.andi %15, %19 : vector<16x1xi1>
    %cst_6 = arith.constant 0.000000e+00 : f32
    %21 = vector.shape_cast %20 : vector<16x1xi1> to vector<16x1xi1>
    %22 = vector.broadcast %21 : vector<16x1xi1> to vector<16x8xi1>
    %23 = vector.broadcast %cst_6 : f32 to vector<16x8xf32>
    %24 = arith.select %22, %11, %23 : vector<16x8xi1>, vector<16x8xf32>
    %25 = arith.addf %4, %24 : vector<16x8xf32>
    %c1 = arith.constant 1 : index
    %c0_7 = arith.constant 0 : index
    %c0_8 = arith.constant 0 : index
    %26 = vector.load %arg2[%c1, %c0_7, %c0_8] : memref<3x1x8xbf16, #tpu.memory_space<vmem>>, vector<1x1x8xbf16>
    %27 = vector.shape_cast %26 : vector<1x1x8xbf16> to vector<1x8xbf16>
    %28 = arith.extf %27 : vector<1x8xbf16> to vector<1x8xf32>
    %29 = vector.broadcast %1 : vector<16x1xf32> to vector<16x8xf32>
    %30 = vector.broadcast %28 : vector<1x8xf32> to vector<16x8xf32>
    %31 = arith.mulf %29, %30 : vector<16x8xf32>
    %32 = arith.addf %25, %31 : vector<16x8xf32>
    %c2 = arith.constant 2 : index
    %c0_9 = arith.constant 0 : index
    %c0_10 = arith.constant 0 : index
    %33 = vector.load %arg2[%c2, %c0_9, %c0_10] : memref<3x1x8xbf16, #tpu.memory_space<vmem>>, vector<1x1x8xbf16>
    %34 = vector.shape_cast %33 : vector<1x1x8xbf16> to vector<1x8xbf16>
    %35 = arith.extf %34 : vector<1x8xbf16> to vector<1x8xf32>
    %36 = vector.broadcast %1 : vector<16x1xf32> to vector<16x8xf32>
    %37 = vector.broadcast %35 : vector<1x8xf32> to vector<16x8xf32>
    %38 = arith.mulf %36, %37 : vector<16x8xf32>
    %c15_i32 = arith.constant 15 : i32
    %39 = tpu.dynamic_rotate %38 by %c15_i32 dim 0 : vector<16x8xf32>, i32 -> vector<16x8xf32>
    %c1_i32_11 = arith.constant 1 : i32
    %40 = vector.broadcast %c1_i32_11 : i32 to vector<16x1xi32>
    %41 = arith.addi %3, %40 : vector<16x1xi32>
    %c0_i32_12 = arith.constant 0 : i32
    %42 = vector.broadcast %c0_i32_12 : i32 to vector<16x1xi32>
    %43 = arith.cmpi sge, %41, %42 : vector<16x1xi32>
    %c1_i32_13 = arith.constant 1 : i32
    %44 = vector.broadcast %c1_i32_13 : i32 to vector<16x1xi32>
    %45 = arith.addi %3, %44 : vector<16x1xi32>
    %c16_i32_14 = arith.constant 16 : i32
    %46 = vector.broadcast %c16_i32_14 : i32 to vector<16x1xi32>
    %47 = arith.cmpi slt, %45, %46 : vector<16x1xi32>
    %48 = arith.andi %43, %47 : vector<16x1xi1>
    %cst_15 = arith.constant 0.000000e+00 : f32
    %49 = vector.shape_cast %48 : vector<16x1xi1> to vector<16x1xi1>
    %50 = vector.broadcast %49 : vector<16x1xi1> to vector<16x8xi1>
    %51 = vector.broadcast %cst_15 : f32 to vector<16x8xf32>
    %52 = arith.select %50, %39, %51 : vector<16x8xi1>, vector<16x8xf32>
    %53 = arith.addf %32, %52 : vector<16x8xf32>
    %c0_16 = arith.constant 0 : index
    %c0_17 = arith.constant 0 : index
    %54 = vector.load %arg3[%c0_16, %c0_17] : memref<1x8xf32, #tpu.memory_space<vmem>>, vector<1x8xf32>
    %55 = vector.broadcast %54 : vector<1x8xf32> to vector<16x8xf32>
    %56 = arith.addf %53, %55 : vector<16x8xf32>
    %cst_18 = arith.constant 0.000000e+00 : f32
    %57 = vector.broadcast %cst_18 : f32 to vector<16x8xf32>
    %58 = arith.maximumf %56, %57 : vector<16x8xf32>
    %cst_19 = arith.constant 0.000000e+00 : f32
    %59 = vector.broadcast %cst_19 : f32 to vector<16x16xf32>
    %60 = arith.truncf %58 : vector<16x8xf32> to vector<16x8xbf16>
    %c0_20 = arith.constant 0 : index
    %c0_21 = arith.constant 0 : index
    %c0_22 = arith.constant 0 : index
    %61 = vector.load %arg4[%c0_20, %c0_21, %c0_22] : memref<3x8x16xbf16, #tpu.memory_space<vmem>>, vector<1x8x16xbf16>
    %62 = vector.shape_cast %61 : vector<1x8x16xbf16> to vector<8x16xbf16>
    %cst_23 = arith.constant dense<0.000000e+00> : vector<16x16xf32>
    %63 = tpu.matmul %60, %62, %cst_23 {dimension_numbers = #tpu.dot_dimension_numbers<[1], [0], [0], [1], [0, 0, 1, 1], [], []>} : vector<16x8xbf16>, vector<8x16xbf16>, vector<16x16xf32> -> vector<16x16xf32>
    %c1_i32_24 = arith.constant 1 : i32
    %64 = tpu.dynamic_rotate %63 by %c1_i32_24 dim 0 : vector<16x16xf32>, i32 -> vector<16x16xf32>
    %c-1_i32_25 = arith.constant -1 : i32
    %65 = vector.broadcast %c-1_i32_25 : i32 to vector<16x1xi32>
    %66 = arith.addi %3, %65 : vector<16x1xi32>
    %c0_i32_26 = arith.constant 0 : i32
    %67 = vector.broadcast %c0_i32_26 : i32 to vector<16x1xi32>
    %68 = arith.cmpi sge, %66, %67 : vector<16x1xi32>
    %c-1_i32_27 = arith.constant -1 : i32
    %69 = vector.broadcast %c-1_i32_27 : i32 to vector<16x1xi32>
    %70 = arith.addi %3, %69 : vector<16x1xi32>
    %c16_i32_28 = arith.constant 16 : i32
    %71 = vector.broadcast %c16_i32_28 : i32 to vector<16x1xi32>
    %72 = arith.cmpi slt, %70, %71 : vector<16x1xi32>
    %73 = arith.andi %68, %72 : vector<16x1xi1>
    %cst_29 = arith.constant 0.000000e+00 : f32
    %74 = vector.shape_cast %73 : vector<16x1xi1> to vector<16x1xi1>
    %75 = vector.broadcast %74 : vector<16x1xi1> to vector<16x16xi1>
    %76 = vector.broadcast %cst_29 : f32 to vector<16x16xf32>
    %77 = arith.select %75, %64, %76 : vector<16x16xi1>, vector<16x16xf32>
    %78 = arith.addf %59, %77 : vector<16x16xf32>
    %79 = arith.truncf %58 : vector<16x8xf32> to vector<16x8xbf16>
    %c1_30 = arith.constant 1 : index
    %c0_31 = arith.constant 0 : index
    %c0_32 = arith.constant 0 : index
    %80 = vector.load %arg4[%c1_30, %c0_31, %c0_32] : memref<3x8x16xbf16, #tpu.memory_space<vmem>>, vector<1x8x16xbf16>
    %81 = vector.shape_cast %80 : vector<1x8x16xbf16> to vector<8x16xbf16>
    %cst_33 = arith.constant dense<0.000000e+00> : vector<16x16xf32>
    %82 = tpu.matmul %79, %81, %cst_33 {dimension_numbers = #tpu.dot_dimension_numbers<[1], [0], [0], [1], [0, 0, 1, 1], [], []>} : vector<16x8xbf16>, vector<8x16xbf16>, vector<16x16xf32> -> vector<16x16xf32>
    %83 = arith.addf %78, %82 : vector<16x16xf32>
    %84 = arith.truncf %58 : vector<16x8xf32> to vector<16x8xbf16>
    %c2_34 = arith.constant 2 : index
    %c0_35 = arith.constant 0 : index
    %c0_36 = arith.constant 0 : index
    %85 = vector.load %arg4[%c2_34, %c0_35, %c0_36] : memref<3x8x16xbf16, #tpu.memory_space<vmem>>, vector<1x8x16xbf16>
    %86 = vector.shape_cast %85 : vector<1x8x16xbf16> to vector<8x16xbf16>
    %cst_37 = arith.constant dense<0.000000e+00> : vector<16x16xf32>
    %87 = tpu.matmul %84, %86, %cst_37 {dimension_numbers = #tpu.dot_dimension_numbers<[1], [0], [0], [1], [0, 0, 1, 1], [], []>} : vector<16x8xbf16>, vector<8x16xbf16>, vector<16x16xf32> -> vector<16x16xf32>
    %c15_i32_38 = arith.constant 15 : i32
    %88 = tpu.dynamic_rotate %87 by %c15_i32_38 dim 0 : vector<16x16xf32>, i32 -> vector<16x16xf32>
    %c1_i32_39 = arith.constant 1 : i32
    %89 = vector.broadcast %c1_i32_39 : i32 to vector<16x1xi32>
    %90 = arith.addi %3, %89 : vector<16x1xi32>
    %c0_i32_40 = arith.constant 0 : i32
    %91 = vector.broadcast %c0_i32_40 : i32 to vector<16x1xi32>
    %92 = arith.cmpi sge, %90, %91 : vector<16x1xi32>
    %c1_i32_41 = arith.constant 1 : i32
    %93 = vector.broadcast %c1_i32_41 : i32 to vector<16x1xi32>
    %94 = arith.addi %3, %93 : vector<16x1xi32>
    %c16_i32_42 = arith.constant 16 : i32
    %95 = vector.broadcast %c16_i32_42 : i32 to vector<16x1xi32>
    %96 = arith.cmpi slt, %94, %95 : vector<16x1xi32>
    %97 = arith.andi %92, %96 : vector<16x1xi1>
    %cst_43 = arith.constant 0.000000e+00 : f32
    %98 = vector.shape_cast %97 : vector<16x1xi1> to vector<16x1xi1>
    %99 = vector.broadcast %98 : vector<16x1xi1> to vector<16x16xi1>
    %100 = vector.broadcast %cst_43 : f32 to vector<16x16xf32>
    %101 = arith.select %99, %88, %100 : vector<16x16xi1>, vector<16x16xf32>
    %102 = arith.addf %83, %101 : vector<16x16xf32>
    %c0_44 = arith.constant 0 : index
    %c0_45 = arith.constant 0 : index
    %103 = vector.load %arg5[%c0_44, %c0_45] : memref<1x16xf32, #tpu.memory_space<vmem>>, vector<1x16xf32>
    %104 = vector.broadcast %103 : vector<1x16xf32> to vector<16x16xf32>
    %105 = arith.addf %102, %104 : vector<16x16xf32>
    %cst_46 = arith.constant 0.000000e+00 : f32
    %106 = vector.broadcast %cst_46 : f32 to vector<16x16xf32>
    %107 = arith.maximumf %105, %106 : vector<16x16xf32>
    %c0_47 = arith.constant 0 : index
    %c0_48 = arith.constant 0 : index
    %108 = vector.load %arg6[%c0_47, %c0_48] : memref<16x32xbf16, #tpu.memory_space<vmem>>, vector<16x32xbf16>
    %c0_49 = arith.constant 0 : index
    %c0_50 = arith.constant 0 : index
    %109 = vector.load %arg7[%c0_49, %c0_50] : memref<1x32xf32, #tpu.memory_space<vmem>>, vector<1x32xf32>
    %110 = arith.truncf %107 : vector<16x16xf32> to vector<16x16xbf16>
    %cst_51 = arith.constant dense<0.000000e+00> : vector<16x32xf32>
    %111 = tpu.matmul %110, %108, %cst_51 {dimension_numbers = #tpu.dot_dimension_numbers<[1], [0], [0], [1], [0, 0, 1, 1], [], []>} : vector<16x16xbf16>, vector<16x32xbf16>, vector<16x32xf32> -> vector<16x32xf32>
    %112 = vector.broadcast %109 : vector<1x32xf32> to vector<16x32xf32>
    %113 = arith.addf %111, %112 : vector<16x32xf32>
    %114 = vector.shape_cast %113 : vector<16x32xf32> to vector<1x16x32xf32>
    %c0_52 = arith.constant 0 : index
    %c0_53 = arith.constant 0 : index
    %115 = vector.load %arg8[%c0_52, %c0_53] : memref<16x32xf32, #tpu.memory_space<vmem>>, vector<16x32xf32>
    %116 = vector.shape_cast %115 : vector<16x32xf32> to vector<1x16x32xf32>
    %117 = arith.addf %114, %116 : vector<1x16x32xf32>
    %c0_54 = arith.constant 0 : index
    %c0_55 = arith.constant 0 : index
    %c0_56 = arith.constant 0 : index
    %118 = vector.load %arg9[%c0_54, %c0_55, %c0_56] : memref<1x16x32xf32, #tpu.memory_space<vmem>>, vector<1x16x32xf32>
    tpu.vector_store %arg9[%c0_54, %c0_55, %c0_56], %117 {strides = array<i32>} : memref<1x16x32xf32, #tpu.memory_space<vmem>>, vector<1x16x32xf32>,
    return
  }
  func.func @transform_0(%arg0: i32) -> (i32, i32, i32) {
    %c0_i32 = arith.constant 0 : i32
    %c0_i32_0 = arith.constant 0 : i32
    %c0_i32_1 = arith.constant 0 : i32
    return %arg0, %c0_i32, %c0_i32_0 : i32, i32, i32
  }
  func.func @transform_1(%arg0: i32) -> (i32, i32, i32) {
    %c0_i32 = arith.constant 0 : i32
    %c0_i32_0 = arith.constant 0 : i32
    %c0_i32_1 = arith.constant 0 : i32
    %c0_i32_2 = arith.constant 0 : i32
    return %c0_i32, %c0_i32_0, %c0_i32_1 : i32, i32, i32
  }
  func.func @transform_2(%arg0: i32) -> (i32, i32) {
    %c0_i32 = arith.constant 0 : i32
    %c0_i32_0 = arith.constant 0 : i32
    %c0_i32_1 = arith.constant 0 : i32
    return %c0_i32, %c0_i32_0 : i32, i32
  }
  func.func @transform_3(%arg0: i32) -> (i32, i32, i32) {
    %c0_i32 = arith.constant 0 : i32
    %c0_i32_0 = arith.constant 0 : i32
    %c0_i32_1 = arith.constant 0 : i32
    %c0_i32_2 = arith.constant 0 : i32
    return %c0_i32, %c0_i32_0, %c0_i32_1 : i32, i32, i32
  }
  func.func @transform_4(%arg0: i32) -> (i32, i32) {
    %c0_i32 = arith.constant 0 : i32
    %c0_i32_0 = arith.constant 0 : i32
    %c0_i32_1 = arith.constant 0 : i32
    return %c0_i32, %c0_i32_0 : i32, i32
  }
  func.func @transform_5(%arg0: i32) -> (i32, i32) {
    %c0_i32 = arith.constant 0 : i32
    %c0_i32_0 = arith.constant 0 : i32
    %c0_i32_1 = arith.constant 0 : i32
    return %c0_i32, %c0_i32_0 : i32, i32
  }
  func.func @transform_6(%arg0: i32) -> (i32, i32) {
    %c0_i32 = arith.constant 0 : i32
    %c0_i32_0 = arith.constant 0 : i32
    %c0_i32_1 = arith.constant 0 : i32
    return %c0_i32, %c0_i32_0 : i32, i32
  }
  func.func @transform_7(%arg0: i32) -> (i32, i32) {
    %c0_i32 = arith.constant 0 : i32
    %c0_i32_0 = arith.constant 0 : i32
    %c0_i32_1 = arith.constant 0 : i32
    return %c0_i32, %c0_i32_0 : i32, i32
  }
  func.func @transform_8(%arg0: i32) -> (i32, i32, i32) {
    %c0_i32 = arith.constant 0 : i32
    %c0_i32_0 = arith.constant 0 : i32
    %c0_i32_1 = arith.constant 0 : i32
    return %arg0, %c0_i32, %c0_i32_0 : i32, i32, i32
  }
}

module attributes {stable_mosaic.version = 11 : i64} {
  func.func @kernel(%arg0: i32, %arg1: i32, %arg2: memref<1x16x32xf32, #tpu.memory_space<vmem>>, %arg3: memref<1x1x32xf32, #tpu.memory_space<vmem>>, %arg4: memref<1x1x32xf32, #tpu.memory_space<vmem>>, %arg5: memref<1x4x32x8xbf16, #tpu.memory_space<vmem>>, %arg6: memref<1x4x1x8xf32, #tpu.memory_space<vmem>>, %arg7: memref<1x4x32x8xbf16, #tpu.memory_space<vmem>>, %arg8: memref<1x4x1x8xf32, #tpu.memory_space<vmem>>, %arg9: memref<1x4x32x8xbf16, #tpu.memory_space<vmem>>, %arg10: memref<1x4x1x8xf32, #tpu.memory_space<vmem>>, %arg11: memref<1x4x8x32xbf16, #tpu.memory_space<vmem>>, %arg12: memref<1x1x32xf32, #tpu.memory_space<vmem>>, %arg13: memref<1x1x32xf32, #tpu.memory_space<vmem>>, %arg14: memref<1x1x32xf32, #tpu.memory_space<vmem>>, %arg15: memref<1x32x128xbf16, #tpu.memory_space<vmem>>, %arg16: memref<1x1x128xf32, #tpu.memory_space<vmem>>, %arg17: memref<1x128x32xbf16, #tpu.memory_space<vmem>>, %arg18: memref<1x1x32xf32, #tpu.memory_space<vmem>>, %arg19: memref<1x32xf32, #tpu.memory_space<vmem>>, %arg20: memref<1x32xf32, #tpu.memory_space<vmem>>, %arg21: memref<1x16x32xf32, #tpu.memory_space<vmem>>) attributes {dimension_semantics = [#tpu.dimension_semantics<parallel>, #tpu.dimension_semantics<arbitrary>], iteration_bounds = array<i64: 2, 2>, scalar_prefetch = 0 : i64, scratch_operands = 0 : i64, tpu.core_type = #tpu.core_type<tc>, window_params = [{transform_indices = @transform_0, window_bounds = array<i64: 1, 16, 32>}, {transform_indices = @transform_1, window_bounds = array<i64: 1, 1, 32>}, {transform_indices = @transform_2, window_bounds = array<i64: 1, 1, 32>}, {transform_indices = @transform_3, window_bounds = array<i64: 1, 4, 32, 8>}, {transform_indices = @transform_4, window_bounds = array<i64: 1, 4, 1, 8>}, {transform_indices = @transform_5, window_bounds = array<i64: 1, 4, 32, 8>}, {transform_indices = @transform_6, window_bounds = array<i64: 1, 4, 1, 8>}, {transform_indices = @transform_7, window_bounds = array<i64: 1, 4, 32, 8>}, {transform_indices = @transform_8, window_bounds = array<i64: 1, 4, 1, 8>}, {transform_indices = @transform_9, window_bounds = array<i64: 1, 4, 8, 32>}, {transform_indices = @transform_10, window_bounds = array<i64: 1, 1, 32>}, {transform_indices = @transform_11, window_bounds = array<i64: 1, 1, 32>}, {transform_indices = @transform_12, window_bounds = array<i64: 1, 1, 32>}, {transform_indices = @transform_13, window_bounds = array<i64: 1, 32, 128>}, {transform_indices = @transform_14, window_bounds = array<i64: 1, 1, 128>}, {transform_indices = @transform_15, window_bounds = array<i64: 1, 128, 32>}, {transform_indices = @transform_16, window_bounds = array<i64: 1, 1, 32>}, {pipeline_mode = #tpu.pipeline_mode<synchronous>, transform_indices = @transform_17, window_bounds = array<i64: 1, 32>}, {pipeline_mode = #tpu.pipeline_mode<synchronous>, transform_indices = @transform_18, window_bounds = array<i64: 1, 32>}, {transform_indices = @transform_19, window_bounds = array<i64: 1, 16, 32>}]} {
    %c0_i32 = arith.constant 0 : i32
    %0 = arith.cmpi eq, %arg1, %c0_i32 : i32
    %1 = arith.extui %0 : i1 to i32
    %c0_i32_0 = arith.constant 0 : i32
    %2 = arith.cmpi ne, %1, %c0_i32_0 : i32
    scf.if %2 {
      %c0_196 = arith.constant 0 : index
      %c0_197 = arith.constant 0 : index
      %c0_198 = arith.constant 0 : index
      %313 = vector.load %arg2[%c0_196, %c0_197, %c0_198] : memref<1x16x32xf32, #tpu.memory_space<vmem>>, vector<1x16x32xf32>
      %c0_199 = arith.constant 0 : index
      %c0_200 = arith.constant 0 : index
      %c0_201 = arith.constant 0 : index
      %314 = vector.load %arg21[%c0_199, %c0_200, %c0_201] : memref<1x16x32xf32, #tpu.memory_space<vmem>>, vector<1x16x32xf32>
      tpu.vector_store %arg21[%c0_199, %c0_200, %c0_201], %313 {strides = array<i32>} : memref<1x16x32xf32, #tpu.memory_space<vmem>>, vector<1x16x32xf32>,
    } else {
    }
    %c0 = arith.constant 0 : index
    %c0_1 = arith.constant 0 : index
    %c0_2 = arith.constant 0 : index
    %3 = vector.load %arg21[%c0, %c0_1, %c0_2] : memref<1x16x32xf32, #tpu.memory_space<vmem>>, vector<1x16x32xf32>
    %4 = vector.shape_cast %3 : vector<1x16x32xf32> to vector<16x32xf32>
    %c0_3 = arith.constant 0 : index
    %c0_4 = arith.constant 0 : index
    %c0_5 = arith.constant 0 : index
    %5 = vector.load %arg3[%c0_3, %c0_4, %c0_5] : memref<1x1x32xf32, #tpu.memory_space<vmem>>, vector<1x1x32xf32>
    %6 = vector.shape_cast %5 : vector<1x1x32xf32> to vector<1x32xf32>
    %c0_6 = arith.constant 0 : index
    %c0_7 = arith.constant 0 : index
    %c0_8 = arith.constant 0 : index
    %7 = vector.load %arg4[%c0_6, %c0_7, %c0_8] : memref<1x1x32xf32, #tpu.memory_space<vmem>>, vector<1x1x32xf32>
    %8 = vector.shape_cast %7 : vector<1x1x32xf32> to vector<1x32xf32>
    %cst = arith.constant dense<0.000000e+00> : vector<16xf32>
    %9 = vector.multi_reduction <add>, %4, %cst [1] : vector<16x32xf32> to vector<16xf32>
    %10 = vector.shape_cast %9 : vector<16xf32> to vector<16x1xf32>
    %cst_9 = arith.constant 3.200000e+01 : f32
    %11 = vector.broadcast %cst_9 : f32 to vector<16x1xf32>
    %12 = arith.divf %10, %11 : vector<16x1xf32>
    %13 = vector.broadcast %12 : vector<16x1xf32> to vector<16x32xf32>
    %14 = arith.subf %4, %13 : vector<16x32xf32>
    %15 = arith.mulf %14, %14 : vector<16x32xf32>
    %cst_10 = arith.constant dense<0.000000e+00> : vector<16xf32>
    %16 = vector.multi_reduction <add>, %15, %cst_10 [1] : vector<16x32xf32> to vector<16xf32>
    %17 = vector.shape_cast %16 : vector<16xf32> to vector<16x1xf32>
    %cst_11 = arith.constant 3.200000e+01 : f32
    %18 = vector.broadcast %cst_11 : f32 to vector<16x1xf32>
    %19 = arith.divf %17, %18 : vector<16x1xf32>
    %cst_12 = arith.constant 9.99999974E-6 : f32
    %20 = vector.broadcast %cst_12 : f32 to vector<16x1xf32>
    %21 = arith.addf %19, %20 : vector<16x1xf32>
    %22 = math.rsqrt %21 : vector<16x1xf32>
    %23 = vector.broadcast %22 : vector<16x1xf32> to vector<16x32xf32>
    %24 = arith.mulf %14, %23 : vector<16x32xf32>
    %25 = vector.broadcast %6 : vector<1x32xf32> to vector<16x32xf32>
    %26 = arith.mulf %24, %25 : vector<16x32xf32>
    %27 = vector.broadcast %8 : vector<1x32xf32> to vector<16x32xf32>
    %28 = arith.addf %26, %27 : vector<16x32xf32>
    %29 = tpu.iota {dimensions = array<i32: 0>} : vector<16x16xi32>
    %30 = tpu.iota {dimensions = array<i32: 1>} : vector<16x16xi32>
    %31 = arith.cmpi sle, %30, %29 : vector<16x16xi32>
    %cst_13 = arith.constant 0.000000e+00 : f32
    %cst_14 = arith.constant -1.000000e+30 : f32
    %32 = vector.broadcast %cst_13 : f32 to vector<16x16xf32>
    %33 = vector.broadcast %cst_14 : f32 to vector<16x16xf32>
    %34 = arith.select %31, %32, %33 : vector<16x16xi1>, vector<16x16xf32>
    %cst_15 = arith.constant 0.000000e+00 : f32
    %35 = vector.broadcast %cst_15 : f32 to vector<16x32xf32>
    %c0_16 = arith.constant 0 : index
    %c0_17 = arith.constant 0 : index
    %c0_18 = arith.constant 0 : index
    %c0_19 = arith.constant 0 : index
    %36 = vector.load %arg5[%c0_16, %c0_17, %c0_18, %c0_19] : memref<1x4x32x8xbf16, #tpu.memory_space<vmem>>, vector<1x1x32x8xbf16>
    %37 = vector.shape_cast %36 : vector<1x1x32x8xbf16> to vector<32x8xbf16>
    %38 = arith.truncf %28 : vector<16x32xf32> to vector<16x32xbf16>
    %cst_20 = arith.constant dense<0.000000e+00> : vector<16x8xf32>
    %39 = tpu.matmul %38, %37, %cst_20 {dimension_numbers = #tpu.dot_dimension_numbers<[1], [0], [0], [1], [0, 0, 1, 1], [], []>} : vector<16x32xbf16>, vector<32x8xbf16>, vector<16x8xf32> -> vector<16x8xf32>
    %c0_21 = arith.constant 0 : index
    %c0_22 = arith.constant 0 : index
    %c0_23 = arith.constant 0 : index
    %c0_24 = arith.constant 0 : index
    %40 = vector.load %arg6[%c0_21, %c0_22, %c0_23, %c0_24] : memref<1x4x1x8xf32, #tpu.memory_space<vmem>>, vector<1x1x1x8xf32>
    %41 = vector.shape_cast %40 : vector<1x1x1x8xf32> to vector<1x8xf32>
    %42 = vector.broadcast %41 : vector<1x8xf32> to vector<16x8xf32>
    %43 = arith.addf %39, %42 : vector<16x8xf32>
    %44 = vector.shape_cast %43 : vector<16x8xf32> to vector<1x16x8xf32>
    %c0_25 = arith.constant 0 : index
    %c0_26 = arith.constant 0 : index
    %c0_27 = arith.constant 0 : index
    %c0_28 = arith.constant 0 : index
    %45 = vector.load %arg7[%c0_25, %c0_26, %c0_27, %c0_28] : memref<1x4x32x8xbf16, #tpu.memory_space<vmem>>, vector<1x1x32x8xbf16>
    %46 = vector.shape_cast %45 : vector<1x1x32x8xbf16> to vector<32x8xbf16>
    %47 = arith.truncf %28 : vector<16x32xf32> to vector<16x32xbf16>
    %cst_29 = arith.constant dense<0.000000e+00> : vector<16x8xf32>
    %48 = tpu.matmul %47, %46, %cst_29 {dimension_numbers = #tpu.dot_dimension_numbers<[1], [0], [0], [1], [0, 0, 1, 1], [], []>} : vector<16x32xbf16>, vector<32x8xbf16>, vector<16x8xf32> -> vector<16x8xf32>
    %c0_30 = arith.constant 0 : index
    %c0_31 = arith.constant 0 : index
    %c0_32 = arith.constant 0 : index
    %c0_33 = arith.constant 0 : index
    %49 = vector.load %arg8[%c0_30, %c0_31, %c0_32, %c0_33] : memref<1x4x1x8xf32, #tpu.memory_space<vmem>>, vector<1x1x1x8xf32>
    %50 = vector.shape_cast %49 : vector<1x1x1x8xf32> to vector<1x8xf32>
    %51 = vector.broadcast %50 : vector<1x8xf32> to vector<16x8xf32>
    %52 = arith.addf %48, %51 : vector<16x8xf32>
    %53 = vector.shape_cast %52 : vector<16x8xf32> to vector<1x16x8xf32>
    %c0_34 = arith.constant 0 : index
    %c0_35 = arith.constant 0 : index
    %c0_36 = arith.constant 0 : index
    %c0_37 = arith.constant 0 : index
    %54 = vector.load %arg9[%c0_34, %c0_35, %c0_36, %c0_37] : memref<1x4x32x8xbf16, #tpu.memory_space<vmem>>, vector<1x1x32x8xbf16>
    %55 = vector.shape_cast %54 : vector<1x1x32x8xbf16> to vector<32x8xbf16>
    %56 = arith.truncf %28 : vector<16x32xf32> to vector<16x32xbf16>
    %cst_38 = arith.constant dense<0.000000e+00> : vector<16x8xf32>
    %57 = tpu.matmul %56, %55, %cst_38 {dimension_numbers = #tpu.dot_dimension_numbers<[1], [0], [0], [1], [0, 0, 1, 1], [], []>} : vector<16x32xbf16>, vector<32x8xbf16>, vector<16x8xf32> -> vector<16x8xf32>
    %c0_39 = arith.constant 0 : index
    %c0_40 = arith.constant 0 : index
    %c0_41 = arith.constant 0 : index
    %c0_42 = arith.constant 0 : index
    %58 = vector.load %arg10[%c0_39, %c0_40, %c0_41, %c0_42] : memref<1x4x1x8xf32, #tpu.memory_space<vmem>>, vector<1x1x1x8xf32>
    %59 = vector.shape_cast %58 : vector<1x1x1x8xf32> to vector<1x8xf32>
    %60 = vector.broadcast %59 : vector<1x8xf32> to vector<16x8xf32>
    %61 = arith.addf %57, %60 : vector<16x8xf32>
    %62 = vector.shape_cast %61 : vector<16x8xf32> to vector<1x16x8xf32>
    %63 = arith.truncf %44 : vector<1x16x8xf32> to vector<1x16x8xbf16>
    %64 = arith.truncf %53 : vector<1x16x8xf32> to vector<1x16x8xbf16>
    "tpu.trace_start"() <{level = 10 : i32, message = "bld,bmd->blm"}> : () -> ()
    %cst_43 = arith.constant dense<0.000000e+00> : vector<1x16x16xf32>
    %65 = tpu.matmul %63, %64, %cst_43 {dimension_numbers = #tpu.dot_dimension_numbers<[2], [2], [1], [1], [0, 0, 0, 1, 1, 1], [0], [0]>} : vector<1x16x8xbf16>, vector<1x16x8xbf16>, vector<1x16x16xf32> -> vector<1x16x16xf32>
    "tpu.trace_stop"() : () -> ()
    %cst_44 = arith.constant 0.353553385 : f32
    %66 = vector.broadcast %cst_44 : f32 to vector<1x16x16xf32>
    %67 = arith.mulf %65, %66 : vector<1x16x16xf32>
    %68 = vector.shape_cast %34 : vector<16x16xf32> to vector<1x16x16xf32>
    %69 = arith.addf %67, %68 : vector<1x16x16xf32>
    %cst_45 = arith.constant dense<0xFF800000> : vector<1x16xf32>
    %70 = vector.multi_reduction <maximumf>, %69, %cst_45 [2] : vector<1x16x16xf32> to vector<1x16xf32>
    %71 = vector.shape_cast %70 : vector<1x16xf32> to vector<1x16x1xf32>
    %72 = vector.broadcast %71 : vector<1x16x1xf32> to vector<1x16x16xf32>
    %73 = arith.subf %69, %72 : vector<1x16x16xf32>
    %74 = math.exp %73 : vector<1x16x16xf32>
    %cst_46 = arith.constant dense<0.000000e+00> : vector<1x16xf32>
    %75 = vector.multi_reduction <add>, %74, %cst_46 [2] : vector<1x16x16xf32> to vector<1x16xf32>
    %76 = vector.shape_cast %75 : vector<1x16xf32> to vector<1x16x1xf32>
    %77 = tpu.reciprocal %76 {approx = true} : vector<1x16x1xf32> -> vector<1x16x1xf32>
    %78 = vector.broadcast %77 : vector<1x16x1xf32> to vector<1x16x16xf32>
    %79 = arith.mulf %74, %78 : vector<1x16x16xf32>
    %80 = arith.truncf %79 : vector<1x16x16xf32> to vector<1x16x16xbf16>
    %81 = arith.truncf %62 : vector<1x16x8xf32> to vector<1x16x8xbf16>
    "tpu.trace_start"() <{level = 10 : i32, message = "blm,bmd->bld"}> : () -> ()
    %cst_47 = arith.constant dense<0.000000e+00> : vector<1x16x8xf32>
    %82 = tpu.matmul %80, %81, %cst_47 {dimension_numbers = #tpu.dot_dimension_numbers<[2], [1], [1], [2], [0, 0, 0, 1, 1, 2], [0], [0]>} : vector<1x16x16xbf16>, vector<1x16x8xbf16>, vector<1x16x8xf32> -> vector<1x16x8xf32>
    "tpu.trace_stop"() : () -> ()
    %83 = vector.shape_cast %82 : vector<1x16x8xf32> to vector<16x8xf32>
    %c0_48 = arith.constant 0 : index
    %c0_49 = arith.constant 0 : index
    %c0_50 = arith.constant 0 : index
    %c0_51 = arith.constant 0 : index
    %84 = vector.load %arg11[%c0_48, %c0_49, %c0_50, %c0_51] : memref<1x4x8x32xbf16, #tpu.memory_space<vmem>>, vector<1x1x8x32xbf16>
    %85 = vector.shape_cast %84 : vector<1x1x8x32xbf16> to vector<8x32xbf16>
    %86 = arith.truncf %83 : vector<16x8xf32> to vector<16x8xbf16>
    %cst_52 = arith.constant dense<0.000000e+00> : vector<16x32xf32>
    %87 = tpu.matmul %86, %85, %cst_52 {dimension_numbers = #tpu.dot_dimension_numbers<[1], [0], [0], [1], [0, 0, 1, 1], [], []>} : vector<16x8xbf16>, vector<8x32xbf16>, vector<16x32xf32> -> vector<16x32xf32>
    %88 = arith.addf %35, %87 : vector<16x32xf32>
    %c0_53 = arith.constant 0 : index
    %c1 = arith.constant 1 : index
    %c0_54 = arith.constant 0 : index
    %c0_55 = arith.constant 0 : index
    %89 = vector.load %arg5[%c0_53, %c1, %c0_54, %c0_55] : memref<1x4x32x8xbf16, #tpu.memory_space<vmem>>, vector<1x1x32x8xbf16>
    %90 = vector.shape_cast %89 : vector<1x1x32x8xbf16> to vector<32x8xbf16>
    %91 = arith.truncf %28 : vector<16x32xf32> to vector<16x32xbf16>
    %cst_56 = arith.constant dense<0.000000e+00> : vector<16x8xf32>
    %92 = tpu.matmul %91, %90, %cst_56 {dimension_numbers = #tpu.dot_dimension_numbers<[1], [0], [0], [1], [0, 0, 1, 1], [], []>} : vector<16x32xbf16>, vector<32x8xbf16>, vector<16x8xf32> -> vector<16x8xf32>
    %c0_57 = arith.constant 0 : index
    %c1_58 = arith.constant 1 : index
    %c0_59 = arith.constant 0 : index
    %c0_60 = arith.constant 0 : index
    %93 = vector.load %arg6[%c0_57, %c1_58, %c0_59, %c0_60] : memref<1x4x1x8xf32, #tpu.memory_space<vmem>>, vector<1x1x1x8xf32>
    %94 = vector.shape_cast %93 : vector<1x1x1x8xf32> to vector<1x8xf32>
    %95 = vector.broadcast %94 : vector<1x8xf32> to vector<16x8xf32>
    %96 = arith.addf %92, %95 : vector<16x8xf32>
    %97 = vector.shape_cast %96 : vector<16x8xf32> to vector<1x16x8xf32>
    %c0_61 = arith.constant 0 : index
    %c1_62 = arith.constant 1 : index
    %c0_63 = arith.constant 0 : index
    %c0_64 = arith.constant 0 : index
    %98 = vector.load %arg7[%c0_61, %c1_62, %c0_63, %c0_64] : memref<1x4x32x8xbf16, #tpu.memory_space<vmem>>, vector<1x1x32x8xbf16>
    %99 = vector.shape_cast %98 : vector<1x1x32x8xbf16> to vector<32x8xbf16>
    %100 = arith.truncf %28 : vector<16x32xf32> to vector<16x32xbf16>
    %cst_65 = arith.constant dense<0.000000e+00> : vector<16x8xf32>
    %101 = tpu.matmul %100, %99, %cst_65 {dimension_numbers = #tpu.dot_dimension_numbers<[1], [0], [0], [1], [0, 0, 1, 1], [], []>} : vector<16x32xbf16>, vector<32x8xbf16>, vector<16x8xf32> -> vector<16x8xf32>
    %c0_66 = arith.constant 0 : index
    %c1_67 = arith.constant 1 : index
    %c0_68 = arith.constant 0 : index
    %c0_69 = arith.constant 0 : index
    %102 = vector.load %arg8[%c0_66, %c1_67, %c0_68, %c0_69] : memref<1x4x1x8xf32, #tpu.memory_space<vmem>>, vector<1x1x1x8xf32>
    %103 = vector.shape_cast %102 : vector<1x1x1x8xf32> to vector<1x8xf32>
    %104 = vector.broadcast %103 : vector<1x8xf32> to vector<16x8xf32>
    %105 = arith.addf %101, %104 : vector<16x8xf32>
    %106 = vector.shape_cast %105 : vector<16x8xf32> to vector<1x16x8xf32>
    %c0_70 = arith.constant 0 : index
    %c1_71 = arith.constant 1 : index
    %c0_72 = arith.constant 0 : index
    %c0_73 = arith.constant 0 : index
    %107 = vector.load %arg9[%c0_70, %c1_71, %c0_72, %c0_73] : memref<1x4x32x8xbf16, #tpu.memory_space<vmem>>, vector<1x1x32x8xbf16>
    %108 = vector.shape_cast %107 : vector<1x1x32x8xbf16> to vector<32x8xbf16>
    %109 = arith.truncf %28 : vector<16x32xf32> to vector<16x32xbf16>
    %cst_74 = arith.constant dense<0.000000e+00> : vector<16x8xf32>
    %110 = tpu.matmul %109, %108, %cst_74 {dimension_numbers = #tpu.dot_dimension_numbers<[1], [0], [0], [1], [0, 0, 1, 1], [], []>} : vector<16x32xbf16>, vector<32x8xbf16>, vector<16x8xf32> -> vector<16x8xf32>
    %c0_75 = arith.constant 0 : index
    %c1_76 = arith.constant 1 : index
    %c0_77 = arith.constant 0 : index
    %c0_78 = arith.constant 0 : index
    %111 = vector.load %arg10[%c0_75, %c1_76, %c0_77, %c0_78] : memref<1x4x1x8xf32, #tpu.memory_space<vmem>>, vector<1x1x1x8xf32>
    %112 = vector.shape_cast %111 : vector<1x1x1x8xf32> to vector<1x8xf32>
    %113 = vector.broadcast %112 : vector<1x8xf32> to vector<16x8xf32>
    %114 = arith.addf %110, %113 : vector<16x8xf32>
    %115 = vector.shape_cast %114 : vector<16x8xf32> to vector<1x16x8xf32>
    %116 = arith.truncf %97 : vector<1x16x8xf32> to vector<1x16x8xbf16>
    %117 = arith.truncf %106 : vector<1x16x8xf32> to vector<1x16x8xbf16>
    "tpu.trace_start"() <{level = 10 : i32, message = "bld,bmd->blm"}> : () -> ()
    %cst_79 = arith.constant dense<0.000000e+00> : vector<1x16x16xf32>
    %118 = tpu.matmul %116, %117, %cst_79 {dimension_numbers = #tpu.dot_dimension_numbers<[2], [2], [1], [1], [0, 0, 0, 1, 1, 1], [0], [0]>} : vector<1x16x8xbf16>, vector<1x16x8xbf16>, vector<1x16x16xf32> -> vector<1x16x16xf32>
    "tpu.trace_stop"() : () -> ()
    %cst_80 = arith.constant 0.353553385 : f32
    %119 = vector.broadcast %cst_80 : f32 to vector<1x16x16xf32>
    %120 = arith.mulf %118, %119 : vector<1x16x16xf32>
    %121 = vector.shape_cast %34 : vector<16x16xf32> to vector<1x16x16xf32>
    %122 = arith.addf %120, %121 : vector<1x16x16xf32>
    %cst_81 = arith.constant dense<0xFF800000> : vector<1x16xf32>
    %123 = vector.multi_reduction <maximumf>, %122, %cst_81 [2] : vector<1x16x16xf32> to vector<1x16xf32>
    %124 = vector.shape_cast %123 : vector<1x16xf32> to vector<1x16x1xf32>
    %125 = vector.broadcast %124 : vector<1x16x1xf32> to vector<1x16x16xf32>
    %126 = arith.subf %122, %125 : vector<1x16x16xf32>
    %127 = math.exp %126 : vector<1x16x16xf32>
    %cst_82 = arith.constant dense<0.000000e+00> : vector<1x16xf32>
    %128 = vector.multi_reduction <add>, %127, %cst_82 [2] : vector<1x16x16xf32> to vector<1x16xf32>
    %129 = vector.shape_cast %128 : vector<1x16xf32> to vector<1x16x1xf32>
    %130 = tpu.reciprocal %129 {approx = true} : vector<1x16x1xf32> -> vector<1x16x1xf32>
    %131 = vector.broadcast %130 : vector<1x16x1xf32> to vector<1x16x16xf32>
    %132 = arith.mulf %127, %131 : vector<1x16x16xf32>
    %133 = arith.truncf %132 : vector<1x16x16xf32> to vector<1x16x16xbf16>
    %134 = arith.truncf %115 : vector<1x16x8xf32> to vector<1x16x8xbf16>
    "tpu.trace_start"() <{level = 10 : i32, message = "blm,bmd->bld"}> : () -> ()
    %cst_83 = arith.constant dense<0.000000e+00> : vector<1x16x8xf32>
    %135 = tpu.matmul %133, %134, %cst_83 {dimension_numbers = #tpu.dot_dimension_numbers<[2], [1], [1], [2], [0, 0, 0, 1, 1, 2], [0], [0]>} : vector<1x16x16xbf16>, vector<1x16x8xbf16>, vector<1x16x8xf32> -> vector<1x16x8xf32>
    "tpu.trace_stop"() : () -> ()
    %136 = vector.shape_cast %135 : vector<1x16x8xf32> to vector<16x8xf32>
    %c0_84 = arith.constant 0 : index
    %c1_85 = arith.constant 1 : index
    %c0_86 = arith.constant 0 : index
    %c0_87 = arith.constant 0 : index
    %137 = vector.load %arg11[%c0_84, %c1_85, %c0_86, %c0_87] : memref<1x4x8x32xbf16, #tpu.memory_space<vmem>>, vector<1x1x8x32xbf16>
    %138 = vector.shape_cast %137 : vector<1x1x8x32xbf16> to vector<8x32xbf16>
    %139 = arith.truncf %136 : vector<16x8xf32> to vector<16x8xbf16>
    %cst_88 = arith.constant dense<0.000000e+00> : vector<16x32xf32>
    %140 = tpu.matmul %139, %138, %cst_88 {dimension_numbers = #tpu.dot_dimension_numbers<[1], [0], [0], [1], [0, 0, 1, 1], [], []>} : vector<16x8xbf16>, vector<8x32xbf16>, vector<16x32xf32> -> vector<16x32xf32>
    %141 = arith.addf %88, %140 : vector<16x32xf32>
    %c0_89 = arith.constant 0 : index
    %c2 = arith.constant 2 : index
    %c0_90 = arith.constant 0 : index
    %c0_91 = arith.constant 0 : index
    %142 = vector.load %arg5[%c0_89, %c2, %c0_90, %c0_91] : memref<1x4x32x8xbf16, #tpu.memory_space<vmem>>, vector<1x1x32x8xbf16>
    %143 = vector.shape_cast %142 : vector<1x1x32x8xbf16> to vector<32x8xbf16>
    %144 = arith.truncf %28 : vector<16x32xf32> to vector<16x32xbf16>
    %cst_92 = arith.constant dense<0.000000e+00> : vector<16x8xf32>
    %145 = tpu.matmul %144, %143, %cst_92 {dimension_numbers = #tpu.dot_dimension_numbers<[1], [0], [0], [1], [0, 0, 1, 1], [], []>} : vector<16x32xbf16>, vector<32x8xbf16>, vector<16x8xf32> -> vector<16x8xf32>
    %c0_93 = arith.constant 0 : index
    %c2_94 = arith.constant 2 : index
    %c0_95 = arith.constant 0 : index
    %c0_96 = arith.constant 0 : index
    %146 = vector.load %arg6[%c0_93, %c2_94, %c0_95, %c0_96] : memref<1x4x1x8xf32, #tpu.memory_space<vmem>>, vector<1x1x1x8xf32>
    %147 = vector.shape_cast %146 : vector<1x1x1x8xf32> to vector<1x8xf32>
    %148 = vector.broadcast %147 : vector<1x8xf32> to vector<16x8xf32>
    %149 = arith.addf %145, %148 : vector<16x8xf32>
    %150 = vector.shape_cast %149 : vector<16x8xf32> to vector<1x16x8xf32>
    %c0_97 = arith.constant 0 : index
    %c2_98 = arith.constant 2 : index
    %c0_99 = arith.constant 0 : index
    %c0_100 = arith.constant 0 : index
    %151 = vector.load %arg7[%c0_97, %c2_98, %c0_99, %c0_100] : memref<1x4x32x8xbf16, #tpu.memory_space<vmem>>, vector<1x1x32x8xbf16>
    %152 = vector.shape_cast %151 : vector<1x1x32x8xbf16> to vector<32x8xbf16>
    %153 = arith.truncf %28 : vector<16x32xf32> to vector<16x32xbf16>
    %cst_101 = arith.constant dense<0.000000e+00> : vector<16x8xf32>
    %154 = tpu.matmul %153, %152, %cst_101 {dimension_numbers = #tpu.dot_dimension_numbers<[1], [0], [0], [1], [0, 0, 1, 1], [], []>} : vector<16x32xbf16>, vector<32x8xbf16>, vector<16x8xf32> -> vector<16x8xf32>
    %c0_102 = arith.constant 0 : index
    %c2_103 = arith.constant 2 : index
    %c0_104 = arith.constant 0 : index
    %c0_105 = arith.constant 0 : index
    %155 = vector.load %arg8[%c0_102, %c2_103, %c0_104, %c0_105] : memref<1x4x1x8xf32, #tpu.memory_space<vmem>>, vector<1x1x1x8xf32>
    %156 = vector.shape_cast %155 : vector<1x1x1x8xf32> to vector<1x8xf32>
    %157 = vector.broadcast %156 : vector<1x8xf32> to vector<16x8xf32>
    %158 = arith.addf %154, %157 : vector<16x8xf32>
    %159 = vector.shape_cast %158 : vector<16x8xf32> to vector<1x16x8xf32>
    %c0_106 = arith.constant 0 : index
    %c2_107 = arith.constant 2 : index
    %c0_108 = arith.constant 0 : index
    %c0_109 = arith.constant 0 : index
    %160 = vector.load %arg9[%c0_106, %c2_107, %c0_108, %c0_109] : memref<1x4x32x8xbf16, #tpu.memory_space<vmem>>, vector<1x1x32x8xbf16>
    %161 = vector.shape_cast %160 : vector<1x1x32x8xbf16> to vector<32x8xbf16>
    %162 = arith.truncf %28 : vector<16x32xf32> to vector<16x32xbf16>
    %cst_110 = arith.constant dense<0.000000e+00> : vector<16x8xf32>
    %163 = tpu.matmul %162, %161, %cst_110 {dimension_numbers = #tpu.dot_dimension_numbers<[1], [0], [0], [1], [0, 0, 1, 1], [], []>} : vector<16x32xbf16>, vector<32x8xbf16>, vector<16x8xf32> -> vector<16x8xf32>
    %c0_111 = arith.constant 0 : index
    %c2_112 = arith.constant 2 : index
    %c0_113 = arith.constant 0 : index
    %c0_114 = arith.constant 0 : index
    %164 = vector.load %arg10[%c0_111, %c2_112, %c0_113, %c0_114] : memref<1x4x1x8xf32, #tpu.memory_space<vmem>>, vector<1x1x1x8xf32>
    %165 = vector.shape_cast %164 : vector<1x1x1x8xf32> to vector<1x8xf32>
    %166 = vector.broadcast %165 : vector<1x8xf32> to vector<16x8xf32>
    %167 = arith.addf %163, %166 : vector<16x8xf32>
    %168 = vector.shape_cast %167 : vector<16x8xf32> to vector<1x16x8xf32>
    %169 = arith.truncf %150 : vector<1x16x8xf32> to vector<1x16x8xbf16>
    %170 = arith.truncf %159 : vector<1x16x8xf32> to vector<1x16x8xbf16>
    "tpu.trace_start"() <{level = 10 : i32, message = "bld,bmd->blm"}> : () -> ()
    %cst_115 = arith.constant dense<0.000000e+00> : vector<1x16x16xf32>
    %171 = tpu.matmul %169, %170, %cst_115 {dimension_numbers = #tpu.dot_dimension_numbers<[2], [2], [1], [1], [0, 0, 0, 1, 1, 1], [0], [0]>} : vector<1x16x8xbf16>, vector<1x16x8xbf16>, vector<1x16x16xf32> -> vector<1x16x16xf32>
    "tpu.trace_stop"() : () -> ()
    %cst_116 = arith.constant 0.353553385 : f32
    %172 = vector.broadcast %cst_116 : f32 to vector<1x16x16xf32>
    %173 = arith.mulf %171, %172 : vector<1x16x16xf32>
    %174 = vector.shape_cast %34 : vector<16x16xf32> to vector<1x16x16xf32>
    %175 = arith.addf %173, %174 : vector<1x16x16xf32>
    %cst_117 = arith.constant dense<0xFF800000> : vector<1x16xf32>
    %176 = vector.multi_reduction <maximumf>, %175, %cst_117 [2] : vector<1x16x16xf32> to vector<1x16xf32>
    %177 = vector.shape_cast %176 : vector<1x16xf32> to vector<1x16x1xf32>
    %178 = vector.broadcast %177 : vector<1x16x1xf32> to vector<1x16x16xf32>
    %179 = arith.subf %175, %178 : vector<1x16x16xf32>
    %180 = math.exp %179 : vector<1x16x16xf32>
    %cst_118 = arith.constant dense<0.000000e+00> : vector<1x16xf32>
    %181 = vector.multi_reduction <add>, %180, %cst_118 [2] : vector<1x16x16xf32> to vector<1x16xf32>
    %182 = vector.shape_cast %181 : vector<1x16xf32> to vector<1x16x1xf32>
    %183 = tpu.reciprocal %182 {approx = true} : vector<1x16x1xf32> -> vector<1x16x1xf32>
    %184 = vector.broadcast %183 : vector<1x16x1xf32> to vector<1x16x16xf32>
    %185 = arith.mulf %180, %184 : vector<1x16x16xf32>
    %186 = arith.truncf %185 : vector<1x16x16xf32> to vector<1x16x16xbf16>
    %187 = arith.truncf %168 : vector<1x16x8xf32> to vector<1x16x8xbf16>
    "tpu.trace_start"() <{level = 10 : i32, message = "blm,bmd->bld"}> : () -> ()
    %cst_119 = arith.constant dense<0.000000e+00> : vector<1x16x8xf32>
    %188 = tpu.matmul %186, %187, %cst_119 {dimension_numbers = #tpu.dot_dimension_numbers<[2], [1], [1], [2], [0, 0, 0, 1, 1, 2], [0], [0]>} : vector<1x16x16xbf16>, vector<1x16x8xbf16>, vector<1x16x8xf32> -> vector<1x16x8xf32>
    "tpu.trace_stop"() : () -> ()
    %189 = vector.shape_cast %188 : vector<1x16x8xf32> to vector<16x8xf32>
    %c0_120 = arith.constant 0 : index
    %c2_121 = arith.constant 2 : index
    %c0_122 = arith.constant 0 : index
    %c0_123 = arith.constant 0 : index
    %190 = vector.load %arg11[%c0_120, %c2_121, %c0_122, %c0_123] : memref<1x4x8x32xbf16, #tpu.memory_space<vmem>>, vector<1x1x8x32xbf16>
    %191 = vector.shape_cast %190 : vector<1x1x8x32xbf16> to vector<8x32xbf16>
    %192 = arith.truncf %189 : vector<16x8xf32> to vector<16x8xbf16>
    %cst_124 = arith.constant dense<0.000000e+00> : vector<16x32xf32>
    %193 = tpu.matmul %192, %191, %cst_124 {dimension_numbers = #tpu.dot_dimension_numbers<[1], [0], [0], [1], [0, 0, 1, 1], [], []>} : vector<16x8xbf16>, vector<8x32xbf16>, vector<16x32xf32> -> vector<16x32xf32>
    %194 = arith.addf %141, %193 : vector<16x32xf32>
    %c0_125 = arith.constant 0 : index
    %c3 = arith.constant 3 : index
    %c0_126 = arith.constant 0 : index
    %c0_127 = arith.constant 0 : index
    %195 = vector.load %arg5[%c0_125, %c3, %c0_126, %c0_127] : memref<1x4x32x8xbf16, #tpu.memory_space<vmem>>, vector<1x1x32x8xbf16>
    %196 = vector.shape_cast %195 : vector<1x1x32x8xbf16> to vector<32x8xbf16>
    %197 = arith.truncf %28 : vector<16x32xf32> to vector<16x32xbf16>
    %cst_128 = arith.constant dense<0.000000e+00> : vector<16x8xf32>
    %198 = tpu.matmul %197, %196, %cst_128 {dimension_numbers = #tpu.dot_dimension_numbers<[1], [0], [0], [1], [0, 0, 1, 1], [], []>} : vector<16x32xbf16>, vector<32x8xbf16>, vector<16x8xf32> -> vector<16x8xf32>
    %c0_129 = arith.constant 0 : index
    %c3_130 = arith.constant 3 : index
    %c0_131 = arith.constant 0 : index
    %c0_132 = arith.constant 0 : index
    %199 = vector.load %arg6[%c0_129, %c3_130, %c0_131, %c0_132] : memref<1x4x1x8xf32, #tpu.memory_space<vmem>>, vector<1x1x1x8xf32>
    %200 = vector.shape_cast %199 : vector<1x1x1x8xf32> to vector<1x8xf32>
    %201 = vector.broadcast %200 : vector<1x8xf32> to vector<16x8xf32>
    %202 = arith.addf %198, %201 : vector<16x8xf32>
    %203 = vector.shape_cast %202 : vector<16x8xf32> to vector<1x16x8xf32>
    %c0_133 = arith.constant 0 : index
    %c3_134 = arith.constant 3 : index
    %c0_135 = arith.constant 0 : index
    %c0_136 = arith.constant 0 : index
    %204 = vector.load %arg7[%c0_133, %c3_134, %c0_135, %c0_136] : memref<1x4x32x8xbf16, #tpu.memory_space<vmem>>, vector<1x1x32x8xbf16>
    %205 = vector.shape_cast %204 : vector<1x1x32x8xbf16> to vector<32x8xbf16>
    %206 = arith.truncf %28 : vector<16x32xf32> to vector<16x32xbf16>
    %cst_137 = arith.constant dense<0.000000e+00> : vector<16x8xf32>
    %207 = tpu.matmul %206, %205, %cst_137 {dimension_numbers = #tpu.dot_dimension_numbers<[1], [0], [0], [1], [0, 0, 1, 1], [], []>} : vector<16x32xbf16>, vector<32x8xbf16>, vector<16x8xf32> -> vector<16x8xf32>
    %c0_138 = arith.constant 0 : index
    %c3_139 = arith.constant 3 : index
    %c0_140 = arith.constant 0 : index
    %c0_141 = arith.constant 0 : index
    %208 = vector.load %arg8[%c0_138, %c3_139, %c0_140, %c0_141] : memref<1x4x1x8xf32, #tpu.memory_space<vmem>>, vector<1x1x1x8xf32>
    %209 = vector.shape_cast %208 : vector<1x1x1x8xf32> to vector<1x8xf32>
    %210 = vector.broadcast %209 : vector<1x8xf32> to vector<16x8xf32>
    %211 = arith.addf %207, %210 : vector<16x8xf32>
    %212 = vector.shape_cast %211 : vector<16x8xf32> to vector<1x16x8xf32>
    %c0_142 = arith.constant 0 : index
    %c3_143 = arith.constant 3 : index
    %c0_144 = arith.constant 0 : index
    %c0_145 = arith.constant 0 : index
    %213 = vector.load %arg9[%c0_142, %c3_143, %c0_144, %c0_145] : memref<1x4x32x8xbf16, #tpu.memory_space<vmem>>, vector<1x1x32x8xbf16>
    %214 = vector.shape_cast %213 : vector<1x1x32x8xbf16> to vector<32x8xbf16>
    %215 = arith.truncf %28 : vector<16x32xf32> to vector<16x32xbf16>
    %cst_146 = arith.constant dense<0.000000e+00> : vector<16x8xf32>
    %216 = tpu.matmul %215, %214, %cst_146 {dimension_numbers = #tpu.dot_dimension_numbers<[1], [0], [0], [1], [0, 0, 1, 1], [], []>} : vector<16x32xbf16>, vector<32x8xbf16>, vector<16x8xf32> -> vector<16x8xf32>
    %c0_147 = arith.constant 0 : index
    %c3_148 = arith.constant 3 : index
    %c0_149 = arith.constant 0 : index
    %c0_150 = arith.constant 0 : index
    %217 = vector.load %arg10[%c0_147, %c3_148, %c0_149, %c0_150] : memref<1x4x1x8xf32, #tpu.memory_space<vmem>>, vector<1x1x1x8xf32>
    %218 = vector.shape_cast %217 : vector<1x1x1x8xf32> to vector<1x8xf32>
    %219 = vector.broadcast %218 : vector<1x8xf32> to vector<16x8xf32>
    %220 = arith.addf %216, %219 : vector<16x8xf32>
    %221 = vector.shape_cast %220 : vector<16x8xf32> to vector<1x16x8xf32>
    %222 = arith.truncf %203 : vector<1x16x8xf32> to vector<1x16x8xbf16>
    %223 = arith.truncf %212 : vector<1x16x8xf32> to vector<1x16x8xbf16>
    "tpu.trace_start"() <{level = 10 : i32, message = "bld,bmd->blm"}> : () -> ()
    %cst_151 = arith.constant dense<0.000000e+00> : vector<1x16x16xf32>
    %224 = tpu.matmul %222, %223, %cst_151 {dimension_numbers = #tpu.dot_dimension_numbers<[2], [2], [1], [1], [0, 0, 0, 1, 1, 1], [0], [0]>} : vector<1x16x8xbf16>, vector<1x16x8xbf16>, vector<1x16x16xf32> -> vector<1x16x16xf32>
    "tpu.trace_stop"() : () -> ()
    %cst_152 = arith.constant 0.353553385 : f32
    %225 = vector.broadcast %cst_152 : f32 to vector<1x16x16xf32>
    %226 = arith.mulf %224, %225 : vector<1x16x16xf32>
    %227 = vector.shape_cast %34 : vector<16x16xf32> to vector<1x16x16xf32>
    %228 = arith.addf %226, %227 : vector<1x16x16xf32>
    %cst_153 = arith.constant dense<0xFF800000> : vector<1x16xf32>
    %229 = vector.multi_reduction <maximumf>, %228, %cst_153 [2] : vector<1x16x16xf32> to vector<1x16xf32>
    %230 = vector.shape_cast %229 : vector<1x16xf32> to vector<1x16x1xf32>
    %231 = vector.broadcast %230 : vector<1x16x1xf32> to vector<1x16x16xf32>
    %232 = arith.subf %228, %231 : vector<1x16x16xf32>
    %233 = math.exp %232 : vector<1x16x16xf32>
    %cst_154 = arith.constant dense<0.000000e+00> : vector<1x16xf32>
    %234 = vector.multi_reduction <add>, %233, %cst_154 [2] : vector<1x16x16xf32> to vector<1x16xf32>
    %235 = vector.shape_cast %234 : vector<1x16xf32> to vector<1x16x1xf32>
    %236 = tpu.reciprocal %235 {approx = true} : vector<1x16x1xf32> -> vector<1x16x1xf32>
    %237 = vector.broadcast %236 : vector<1x16x1xf32> to vector<1x16x16xf32>
    %238 = arith.mulf %233, %237 : vector<1x16x16xf32>
    %239 = arith.truncf %238 : vector<1x16x16xf32> to vector<1x16x16xbf16>
    %240 = arith.truncf %221 : vector<1x16x8xf32> to vector<1x16x8xbf16>
    "tpu.trace_start"() <{level = 10 : i32, message = "blm,bmd->bld"}> : () -> ()
    %cst_155 = arith.constant dense<0.000000e+00> : vector<1x16x8xf32>
    %241 = tpu.matmul %239, %240, %cst_155 {dimension_numbers = #tpu.dot_dimension_numbers<[2], [1], [1], [2], [0, 0, 0, 1, 1, 2], [0], [0]>} : vector<1x16x16xbf16>, vector<1x16x8xbf16>, vector<1x16x8xf32> -> vector<1x16x8xf32>
    "tpu.trace_stop"() : () -> ()
    %242 = vector.shape_cast %241 : vector<1x16x8xf32> to vector<16x8xf32>
    %c0_156 = arith.constant 0 : index
    %c3_157 = arith.constant 3 : index
    %c0_158 = arith.constant 0 : index
    %c0_159 = arith.constant 0 : index
    %243 = vector.load %arg11[%c0_156, %c3_157, %c0_158, %c0_159] : memref<1x4x8x32xbf16, #tpu.memory_space<vmem>>, vector<1x1x8x32xbf16>
    %244 = vector.shape_cast %243 : vector<1x1x8x32xbf16> to vector<8x32xbf16>
    %245 = arith.truncf %242 : vector<16x8xf32> to vector<16x8xbf16>
    %cst_160 = arith.constant dense<0.000000e+00> : vector<16x32xf32>
    %246 = tpu.matmul %245, %244, %cst_160 {dimension_numbers = #tpu.dot_dimension_numbers<[1], [0], [0], [1], [0, 0, 1, 1], [], []>} : vector<16x8xbf16>, vector<8x32xbf16>, vector<16x32xf32> -> vector<16x32xf32>
    %247 = arith.addf %194, %246 : vector<16x32xf32>
    %248 = arith.addf %4, %247 : vector<16x32xf32>
    %c0_161 = arith.constant 0 : index
    %c0_162 = arith.constant 0 : index
    %c0_163 = arith.constant 0 : index
    %249 = vector.load %arg12[%c0_161, %c0_162, %c0_163] : memref<1x1x32xf32, #tpu.memory_space<vmem>>, vector<1x1x32xf32>
    %250 = vector.shape_cast %249 : vector<1x1x32xf32> to vector<1x32xf32>
    %251 = vector.broadcast %250 : vector<1x32xf32> to vector<16x32xf32>
    %252 = arith.addf %248, %251 : vector<16x32xf32>
    %c0_164 = arith.constant 0 : index
    %c0_165 = arith.constant 0 : index
    %c0_166 = arith.constant 0 : index
    %253 = vector.load %arg13[%c0_164, %c0_165, %c0_166] : memref<1x1x32xf32, #tpu.memory_space<vmem>>, vector<1x1x32xf32>
    %254 = vector.shape_cast %253 : vector<1x1x32xf32> to vector<1x32xf32>
    %c0_167 = arith.constant 0 : index
    %c0_168 = arith.constant 0 : index
    %c0_169 = arith.constant 0 : index
    %255 = vector.load %arg14[%c0_167, %c0_168, %c0_169] : memref<1x1x32xf32, #tpu.memory_space<vmem>>, vector<1x1x32xf32>
    %256 = vector.shape_cast %255 : vector<1x1x32xf32> to vector<1x32xf32>
    %cst_170 = arith.constant dense<0.000000e+00> : vector<16xf32>
    %257 = vector.multi_reduction <add>, %252, %cst_170 [1] : vector<16x32xf32> to vector<16xf32>
    %258 = vector.shape_cast %257 : vector<16xf32> to vector<16x1xf32>
    %cst_171 = arith.constant 3.200000e+01 : f32
    %259 = vector.broadcast %cst_171 : f32 to vector<16x1xf32>
    %260 = arith.divf %258, %259 : vector<16x1xf32>
    %261 = vector.broadcast %260 : vector<16x1xf32> to vector<16x32xf32>
    %262 = arith.subf %252, %261 : vector<16x32xf32>
    %263 = arith.mulf %262, %262 : vector<16x32xf32>
    %cst_172 = arith.constant dense<0.000000e+00> : vector<16xf32>
    %264 = vector.multi_reduction <add>, %263, %cst_172 [1] : vector<16x32xf32> to vector<16xf32>
    %265 = vector.shape_cast %264 : vector<16xf32> to vector<16x1xf32>
    %cst_173 = arith.constant 3.200000e+01 : f32
    %266 = vector.broadcast %cst_173 : f32 to vector<16x1xf32>
    %267 = arith.divf %265, %266 : vector<16x1xf32>
    %cst_174 = arith.constant 9.99999974E-6 : f32
    %268 = vector.broadcast %cst_174 : f32 to vector<16x1xf32>
    %269 = arith.addf %267, %268 : vector<16x1xf32>
    %270 = math.rsqrt %269 : vector<16x1xf32>
    %271 = vector.broadcast %270 : vector<16x1xf32> to vector<16x32xf32>
    %272 = arith.mulf %262, %271 : vector<16x32xf32>
    %273 = vector.broadcast %254 : vector<1x32xf32> to vector<16x32xf32>
    %274 = arith.mulf %272, %273 : vector<16x32xf32>
    %275 = vector.broadcast %256 : vector<1x32xf32> to vector<16x32xf32>
    %276 = arith.addf %274, %275 : vector<16x32xf32>
    %c0_175 = arith.constant 0 : index
    %c0_176 = arith.constant 0 : index
    %c0_177 = arith.constant 0 : index
    %277 = vector.load %arg15[%c0_175, %c0_176, %c0_177] : memref<1x32x128xbf16, #tpu.memory_space<vmem>>, vector<1x32x128xbf16>
    %278 = vector.shape_cast %277 : vector<1x32x128xbf16> to vector<32x128xbf16>
    %279 = arith.truncf %276 : vector<16x32xf32> to vector<16x32xbf16>
    %cst_178 = arith.constant dense<0.000000e+00> : vector<16x128xf32>
    %280 = tpu.matmul %279, %278, %cst_178 {dimension_numbers = #tpu.dot_dimension_numbers<[1], [0], [0], [1], [0, 0, 1, 1], [], []>} : vector<16x32xbf16>, vector<32x128xbf16>, vector<16x128xf32> -> vector<16x128xf32>
    %c0_179 = arith.constant 0 : index
    %c0_180 = arith.constant 0 : index
    %c0_181 = arith.constant 0 : index
    %281 = vector.load %arg16[%c0_179, %c0_180, %c0_181] : memref<1x1x128xf32, #tpu.memory_space<vmem>>, vector<1x1x128xf32>
    %282 = vector.shape_cast %281 : vector<1x1x128xf32> to vector<1x128xf32>
    %283 = vector.broadcast %282 : vector<1x128xf32> to vector<16x128xf32>
    %284 = arith.addf %280, %283 : vector<16x128xf32>
    %cst_182 = arith.constant 5.000000e-01 : f32
    %285 = vector.broadcast %cst_182 : f32 to vector<16x128xf32>
    %286 = arith.mulf %285, %284 : vector<16x128xf32>
    %cst_183 = arith.constant 4.471500e-02 : f32
    %287 = vector.broadcast %cst_183 : f32 to vector<16x128xf32>
    %288 = arith.mulf %287, %284 : vector<16x128xf32>
    %289 = arith.mulf %288, %284 : vector<16x128xf32>
    %290 = arith.mulf %289, %284 : vector<16x128xf32>
    %291 = arith.addf %284, %290 : vector<16x128xf32>
    %cst_184 = arith.constant 0.797884583 : f32
    %292 = vector.broadcast %cst_184 : f32 to vector<16x128xf32>
    %293 = arith.mulf %292, %291 : vector<16x128xf32>
    %294 = math.tanh %293 : vector<16x128xf32>
    %cst_185 = arith.constant 1.000000e+00 : f32
    %295 = vector.broadcast %cst_185 : f32 to vector<16x128xf32>
    %296 = arith.addf %295, %294 : vector<16x128xf32>
    %297 = arith.mulf %286, %296 : vector<16x128xf32>
    %c0_186 = arith.constant 0 : index
    %c0_187 = arith.constant 0 : index
    %c0_188 = arith.constant 0 : index
    %298 = vector.load %arg17[%c0_186, %c0_187, %c0_188] : memref<1x128x32xbf16, #tpu.memory_space<vmem>>, vector<1x128x32xbf16>
    %299 = vector.shape_cast %298 : vector<1x128x32xbf16> to vector<128x32xbf16>
    %300 = arith.truncf %297 : vector<16x128xf32> to vector<16x128xbf16>
    %cst_189 = arith.constant dense<0.000000e+00> : vector<16x32xf32>
    %301 = tpu.matmul %300, %299, %cst_189 {dimension_numbers = #tpu.dot_dimension_numbers<[1], [0], [0], [1], [0, 0, 1, 1], [], []>} : vector<16x128xbf16>, vector<128x32xbf16>, vector<16x32xf32> -> vector<16x32xf32>
    %302 = arith.addf %252, %301 : vector<16x32xf32>
    %c0_190 = arith.constant 0 : index
    %c0_191 = arith.constant 0 : index
    %c0_192 = arith.constant 0 : index
    %303 = vector.load %arg18[%c0_190, %c0_191, %c0_192] : memref<1x1x32xf32, #tpu.memory_space<vmem>>, vector<1x1x32xf32>
    %304 = vector.shape_cast %303 : vector<1x1x32xf32> to vector<1x32xf32>
    %305 = vector.broadcast %304 : vector<1x32xf32> to vector<16x32xf32>
    %306 = arith.addf %302, %305 : vector<16x32xf32>
    %c1_i32 = arith.constant 1 : i32
    %307 = arith.cmpi slt, %arg1, %c1_i32 : i32
    %308 = arith.extui %307 : i1 to i32
    %c0_i32_193 = arith.constant 0 : i32
    %309 = arith.cmpi ne, %308, %c0_i32_193 : i32
    scf.if %309 {
      %313 = vector.shape_cast %306 : vector<16x32xf32> to vector<1x16x32xf32>
      %c0_196 = arith.constant 0 : index
      %c0_197 = arith.constant 0 : index
      %c0_198 = arith.constant 0 : index
      %314 = vector.load %arg21[%c0_196, %c0_197, %c0_198] : memref<1x16x32xf32, #tpu.memory_space<vmem>>, vector<1x16x32xf32>
      tpu.vector_store %arg21[%c0_196, %c0_197, %c0_198], %313 {strides = array<i32>} : memref<1x16x32xf32, #tpu.memory_space<vmem>>, vector<1x16x32xf32>,
    } else {
    }
    %c1_i32_194 = arith.constant 1 : i32
    %310 = arith.cmpi eq, %arg1, %c1_i32_194 : i32
    %311 = arith.extui %310 : i1 to i32
    %c0_i32_195 = arith.constant 0 : i32
    %312 = arith.cmpi ne, %311, %c0_i32_195 : i32
    scf.if %312 {
      %c0_196 = arith.constant 0 : index
      %c0_197 = arith.constant 0 : index
      %313 = vector.load %arg19[%c0_196, %c0_197] : memref<1x32xf32, #tpu.memory_space<vmem>>, vector<1x32xf32>
      %c0_198 = arith.constant 0 : index
      %c0_199 = arith.constant 0 : index
      %314 = vector.load %arg20[%c0_198, %c0_199] : memref<1x32xf32, #tpu.memory_space<vmem>>, vector<1x32xf32>
      %cst_200 = arith.constant dense<0.000000e+00> : vector<16xf32>
      %315 = vector.multi_reduction <add>, %306, %cst_200 [1] : vector<16x32xf32> to vector<16xf32>
      %316 = vector.shape_cast %315 : vector<16xf32> to vector<16x1xf32>
      %cst_201 = arith.constant 3.200000e+01 : f32
      %317 = vector.broadcast %cst_201 : f32 to vector<16x1xf32>
      %318 = arith.divf %316, %317 : vector<16x1xf32>
      %319 = vector.broadcast %318 : vector<16x1xf32> to vector<16x32xf32>
      %320 = arith.subf %306, %319 : vector<16x32xf32>
      %321 = arith.mulf %320, %320 : vector<16x32xf32>
      %cst_202 = arith.constant dense<0.000000e+00> : vector<16xf32>
      %322 = vector.multi_reduction <add>, %321, %cst_202 [1] : vector<16x32xf32> to vector<16xf32>
      %323 = vector.shape_cast %322 : vector<16xf32> to vector<16x1xf32>
      %cst_203 = arith.constant 3.200000e+01 : f32
      %324 = vector.broadcast %cst_203 : f32 to vector<16x1xf32>
      %325 = arith.divf %323, %324 : vector<16x1xf32>
      %cst_204 = arith.constant 9.99999974E-6 : f32
      %326 = vector.broadcast %cst_204 : f32 to vector<16x1xf32>
      %327 = arith.addf %325, %326 : vector<16x1xf32>
      %328 = math.rsqrt %327 : vector<16x1xf32>
      %329 = vector.broadcast %328 : vector<16x1xf32> to vector<16x32xf32>
      %330 = arith.mulf %320, %329 : vector<16x32xf32>
      %331 = vector.broadcast %313 : vector<1x32xf32> to vector<16x32xf32>
      %332 = arith.mulf %330, %331 : vector<16x32xf32>
      %333 = vector.broadcast %314 : vector<1x32xf32> to vector<16x32xf32>
      %334 = arith.addf %332, %333 : vector<16x32xf32>
      %335 = vector.shape_cast %334 : vector<16x32xf32> to vector<1x16x32xf32>
      %c0_205 = arith.constant 0 : index
      %c0_206 = arith.constant 0 : index
      %c0_207 = arith.constant 0 : index
      %336 = vector.load %arg21[%c0_205, %c0_206, %c0_207] : memref<1x16x32xf32, #tpu.memory_space<vmem>>, vector<1x16x32xf32>
      tpu.vector_store %arg21[%c0_205, %c0_206, %c0_207], %335 {strides = array<i32>} : memref<1x16x32xf32, #tpu.memory_space<vmem>>, vector<1x16x32xf32>,
    } else {
    }
    return
  }
  func.func @transform_0(%arg0: i32, %arg1: i32) -> (i32, i32, i32) {
    %c0_i32 = arith.constant 0 : i32
    %c0_i32_0 = arith.constant 0 : i32
    %c0_i32_1 = arith.constant 0 : i32
    return %arg0, %c0_i32, %c0_i32_0 : i32, i32, i32
  }
  func.func @transform_1(%arg0: i32, %arg1: i32) -> (i32, i32, i32) {
    %c0_i32 = arith.constant 0 : i32
    %c0_i32_0 = arith.constant 0 : i32
    %c0_i32_1 = arith.constant 0 : i32
    return %arg1, %c0_i32, %c0_i32_0 : i32, i32, i32
  }
  func.func @transform_2(%arg0: i32, %arg1: i32) -> (i32, i32, i32) {
    %c0_i32 = arith.constant 0 : i32
    %c0_i32_0 = arith.constant 0 : i32
    %c0_i32_1 = arith.constant 0 : i32
    return %arg1, %c0_i32, %c0_i32_0 : i32, i32, i32
  }
  func.func @transform_3(%arg0: i32, %arg1: i32) -> (i32, i32, i32, i32) {
    %c0_i32 = arith.constant 0 : i32
    %c0_i32_0 = arith.constant 0 : i32
    %c0_i32_1 = arith.constant 0 : i32
    %c0_i32_2 = arith.constant 0 : i32
    return %arg1, %c0_i32, %c0_i32_0, %c0_i32_1 : i32, i32, i32, i32
  }
  func.func @transform_4(%arg0: i32, %arg1: i32) -> (i32, i32, i32, i32) {
    %c0_i32 = arith.constant 0 : i32
    %c0_i32_0 = arith.constant 0 : i32
    %c0_i32_1 = arith.constant 0 : i32
    %c0_i32_2 = arith.constant 0 : i32
    return %arg1, %c0_i32, %c0_i32_0, %c0_i32_1 : i32, i32, i32, i32
  }
  func.func @transform_5(%arg0: i32, %arg1: i32) -> (i32, i32, i32, i32) {
    %c0_i32 = arith.constant 0 : i32
    %c0_i32_0 = arith.constant 0 : i32
    %c0_i32_1 = arith.constant 0 : i32
    %c0_i32_2 = arith.constant 0 : i32
    return %arg1, %c0_i32, %c0_i32_0, %c0_i32_1 : i32, i32, i32, i32
  }
  func.func @transform_6(%arg0: i32, %arg1: i32) -> (i32, i32, i32, i32) {
    %c0_i32 = arith.constant 0 : i32
    %c0_i32_0 = arith.constant 0 : i32
    %c0_i32_1 = arith.constant 0 : i32
    %c0_i32_2 = arith.constant 0 : i32
    return %arg1, %c0_i32, %c0_i32_0, %c0_i32_1 : i32, i32, i32, i32
  }
  func.func @transform_7(%arg0: i32, %arg1: i32) -> (i32, i32, i32, i32) {
    %c0_i32 = arith.constant 0 : i32
    %c0_i32_0 = arith.constant 0 : i32
    %c0_i32_1 = arith.constant 0 : i32
    %c0_i32_2 = arith.constant 0 : i32
    return %arg1, %c0_i32, %c0_i32_0, %c0_i32_1 : i32, i32, i32, i32
  }
  func.func @transform_8(%arg0: i32, %arg1: i32) -> (i32, i32, i32, i32) {
    %c0_i32 = arith.constant 0 : i32
    %c0_i32_0 = arith.constant 0 : i32
    %c0_i32_1 = arith.constant 0 : i32
    %c0_i32_2 = arith.constant 0 : i32
    return %arg1, %c0_i32, %c0_i32_0, %c0_i32_1 : i32, i32, i32, i32
  }
  func.func @transform_9(%arg0: i32, %arg1: i32) -> (i32, i32, i32, i32) {
    %c0_i32 = arith.constant 0 : i32
    %c0_i32_0 = arith.constant 0 : i32
    %c0_i32_1 = arith.constant 0 : i32
    %c0_i32_2 = arith.constant 0 : i32
    return %arg1, %c0_i32, %c0_i32_0, %c0_i32_1 : i32, i32, i32, i32
  }
  func.func @transform_10(%arg0: i32, %arg1: i32) -> (i32, i32, i32) {
    %c0_i32 = arith.constant 0 : i32
    %c0_i32_0 = arith.constant 0 : i32
    %c0_i32_1 = arith.constant 0 : i32
    return %arg1, %c0_i32, %c0_i32_0 : i32, i32, i32
  }
  func.func @transform_11(%arg0: i32, %arg1: i32) -> (i32, i32, i32) {
    %c0_i32 = arith.constant 0 : i32
    %c0_i32_0 = arith.constant 0 : i32
    %c0_i32_1 = arith.constant 0 : i32
    return %arg1, %c0_i32, %c0_i32_0 : i32, i32, i32
  }
  func.func @transform_12(%arg0: i32, %arg1: i32) -> (i32, i32, i32) {
    %c0_i32 = arith.constant 0 : i32
    %c0_i32_0 = arith.constant 0 : i32
    %c0_i32_1 = arith.constant 0 : i32
    return %arg1, %c0_i32, %c0_i32_0 : i32, i32, i32
  }
  func.func @transform_13(%arg0: i32, %arg1: i32) -> (i32, i32, i32) {
    %c0_i32 = arith.constant 0 : i32
    %c0_i32_0 = arith.constant 0 : i32
    %c0_i32_1 = arith.constant 0 : i32
    return %arg1, %c0_i32, %c0_i32_0 : i32, i32, i32
  }
  func.func @transform_14(%arg0: i32, %arg1: i32) -> (i32, i32, i32) {
    %c0_i32 = arith.constant 0 : i32
    %c0_i32_0 = arith.constant 0 : i32
    %c0_i32_1 = arith.constant 0 : i32
    return %arg1, %c0_i32, %c0_i32_0 : i32, i32, i32
  }
  func.func @transform_15(%arg0: i32, %arg1: i32) -> (i32, i32, i32) {
    %c0_i32 = arith.constant 0 : i32
    %c0_i32_0 = arith.constant 0 : i32
    %c0_i32_1 = arith.constant 0 : i32
    return %arg1, %c0_i32, %c0_i32_0 : i32, i32, i32
  }
  func.func @transform_16(%arg0: i32, %arg1: i32) -> (i32, i32, i32) {
    %c0_i32 = arith.constant 0 : i32
    %c0_i32_0 = arith.constant 0 : i32
    %c0_i32_1 = arith.constant 0 : i32
    return %arg1, %c0_i32, %c0_i32_0 : i32, i32, i32
  }
  func.func @transform_17(%arg0: i32, %arg1: i32) -> (i32, i32) {
    %c0_i32 = arith.constant 0 : i32
    %c0_i32_0 = arith.constant 0 : i32
    %c0_i32_1 = arith.constant 0 : i32
    return %c0_i32, %c0_i32_0 : i32, i32
  }
  func.func @transform_18(%arg0: i32, %arg1: i32) -> (i32, i32) {
    %c0_i32 = arith.constant 0 : i32
    %c0_i32_0 = arith.constant 0 : i32
    %c0_i32_1 = arith.constant 0 : i32
    return %c0_i32, %c0_i32_0 : i32, i32
  }
  func.func @transform_19(%arg0: i32, %arg1: i32) -> (i32, i32, i32) {
    %c0_i32 = arith.constant 0 : i32
    %c0_i32_0 = arith.constant 0 : i32
    %c0_i32_1 = arith.constant 0 : i32
    return %arg0, %c0_i32, %c0_i32_0 : i32, i32, i32
  }
}

module attributes {stable_mosaic.version = 11 : i64} {
  func.func @kernel(%arg0: i32, %arg1: memref<1x16x32xf32, #tpu.memory_space<vmem>>, %arg2: memref<3x32x16xbf16, #tpu.memory_space<vmem>>, %arg3: memref<1x16xf32, #tpu.memory_space<vmem>>, %arg4: memref<3x16x8xbf16, #tpu.memory_space<vmem>>, %arg5: memref<1x8xf32, #tpu.memory_space<vmem>>, %arg6: memref<8x128xbf16, #tpu.memory_space<vmem>>, %arg7: memref<1x128xf32, #tpu.memory_space<vmem>>, %arg8: memref<1x16x128xf32, #tpu.memory_space<vmem>>) attributes {dimension_semantics = [#tpu.dimension_semantics<parallel>], iteration_bounds = array<i64: 2>, scalar_prefetch = 0 : i64, scratch_operands = 0 : i64, tpu.core_type = #tpu.core_type<tc>, window_params = [{transform_indices = @transform_0, window_bounds = array<i64: 1, 16, 32>}, {pipeline_mode = #tpu.pipeline_mode<synchronous>, transform_indices = @transform_1, window_bounds = array<i64: 3, 32, 16>}, {pipeline_mode = #tpu.pipeline_mode<synchronous>, transform_indices = @transform_2, window_bounds = array<i64: 1, 16>}, {pipeline_mode = #tpu.pipeline_mode<synchronous>, transform_indices = @transform_3, window_bounds = array<i64: 3, 16, 8>}, {pipeline_mode = #tpu.pipeline_mode<synchronous>, transform_indices = @transform_4, window_bounds = array<i64: 1, 8>}, {pipeline_mode = #tpu.pipeline_mode<synchronous>, transform_indices = @transform_5, window_bounds = array<i64: 8, 128>}, {pipeline_mode = #tpu.pipeline_mode<synchronous>, transform_indices = @transform_6, window_bounds = array<i64: 1, 128>}, {transform_indices = @transform_7, window_bounds = array<i64: 1, 16, 128>}]} {
    %c0 = arith.constant 0 : index
    %c0_0 = arith.constant 0 : index
    %c0_1 = arith.constant 0 : index
    %0 = vector.load %arg1[%c0, %c0_0, %c0_1] : memref<1x16x32xf32, #tpu.memory_space<vmem>>, vector<1x16x32xf32>
    %1 = vector.shape_cast %0 : vector<1x16x32xf32> to vector<16x32xf32>
    %2 = tpu.iota {dimensions = array<i32: 1>} : vector<1x16x1xi32>
    %3 = vector.shape_cast %2 : vector<1x16x1xi32> to vector<16x1xi32>
    %cst = arith.constant 0.000000e+00 : f32
    %4 = vector.broadcast %cst : f32 to vector<16x16xf32>
    %5 = arith.truncf %1 : vector<16x32xf32> to vector<16x32xbf16>
    %c0_2 = arith.constant 0 : index
    %c0_3 = arith.constant 0 : index
    %c0_4 = arith.constant 0 : index
    %6 = vector.load %arg2[%c0_2, %c0_3, %c0_4] : memref<3x32x16xbf16, #tpu.memory_space<vmem>>, vector<1x32x16xbf16>
    %7 = vector.shape_cast %6 : vector<1x32x16xbf16> to vector<32x16xbf16>
    %cst_5 = arith.constant dense<0.000000e+00> : vector<16x16xf32>
    %8 = tpu.matmul %5, %7, %cst_5 {dimension_numbers = #tpu.dot_dimension_numbers<[1], [0], [0], [1], [0, 0, 1, 1], [], []>} : vector<16x32xbf16>, vector<32x16xbf16>, vector<16x16xf32> -> vector<16x16xf32>
    %c1_i32 = arith.constant 1 : i32
    %9 = tpu.dynamic_rotate %8 by %c1_i32 dim 0 : vector<16x16xf32>, i32 -> vector<16x16xf32>
    %c-1_i32 = arith.constant -1 : i32
    %10 = vector.broadcast %c-1_i32 : i32 to vector<16x1xi32>
    %11 = arith.addi %3, %10 : vector<16x1xi32>
    %c0_i32 = arith.constant 0 : i32
    %12 = vector.broadcast %c0_i32 : i32 to vector<16x1xi32>
    %13 = arith.cmpi sge, %11, %12 : vector<16x1xi32>
    %c-1_i32_6 = arith.constant -1 : i32
    %14 = vector.broadcast %c-1_i32_6 : i32 to vector<16x1xi32>
    %15 = arith.addi %3, %14 : vector<16x1xi32>
    %c16_i32 = arith.constant 16 : i32
    %16 = vector.broadcast %c16_i32 : i32 to vector<16x1xi32>
    %17 = arith.cmpi slt, %15, %16 : vector<16x1xi32>
    %18 = arith.andi %13, %17 : vector<16x1xi1>
    %cst_7 = arith.constant 0.000000e+00 : f32
    %19 = vector.shape_cast %18 : vector<16x1xi1> to vector<16x1xi1>
    %20 = vector.broadcast %19 : vector<16x1xi1> to vector<16x16xi1>
    %21 = vector.broadcast %cst_7 : f32 to vector<16x16xf32>
    %22 = arith.select %20, %9, %21 : vector<16x16xi1>, vector<16x16xf32>
    %23 = arith.addf %4, %22 : vector<16x16xf32>
    %24 = arith.truncf %1 : vector<16x32xf32> to vector<16x32xbf16>
    %c1 = arith.constant 1 : index
    %c0_8 = arith.constant 0 : index
    %c0_9 = arith.constant 0 : index
    %25 = vector.load %arg2[%c1, %c0_8, %c0_9] : memref<3x32x16xbf16, #tpu.memory_space<vmem>>, vector<1x32x16xbf16>
    %26 = vector.shape_cast %25 : vector<1x32x16xbf16> to vector<32x16xbf16>
    %cst_10 = arith.constant dense<0.000000e+00> : vector<16x16xf32>
    %27 = tpu.matmul %24, %26, %cst_10 {dimension_numbers = #tpu.dot_dimension_numbers<[1], [0], [0], [1], [0, 0, 1, 1], [], []>} : vector<16x32xbf16>, vector<32x16xbf16>, vector<16x16xf32> -> vector<16x16xf32>
    %28 = arith.addf %23, %27 : vector<16x16xf32>
    %29 = arith.truncf %1 : vector<16x32xf32> to vector<16x32xbf16>
    %c2 = arith.constant 2 : index
    %c0_11 = arith.constant 0 : index
    %c0_12 = arith.constant 0 : index
    %30 = vector.load %arg2[%c2, %c0_11, %c0_12] : memref<3x32x16xbf16, #tpu.memory_space<vmem>>, vector<1x32x16xbf16>
    %31 = vector.shape_cast %30 : vector<1x32x16xbf16> to vector<32x16xbf16>
    %cst_13 = arith.constant dense<0.000000e+00> : vector<16x16xf32>
    %32 = tpu.matmul %29, %31, %cst_13 {dimension_numbers = #tpu.dot_dimension_numbers<[1], [0], [0], [1], [0, 0, 1, 1], [], []>} : vector<16x32xbf16>, vector<32x16xbf16>, vector<16x16xf32> -> vector<16x16xf32>
    %c15_i32 = arith.constant 15 : i32
    %33 = tpu.dynamic_rotate %32 by %c15_i32 dim 0 : vector<16x16xf32>, i32 -> vector<16x16xf32>
    %c1_i32_14 = arith.constant 1 : i32
    %34 = vector.broadcast %c1_i32_14 : i32 to vector<16x1xi32>
    %35 = arith.addi %3, %34 : vector<16x1xi32>
    %c0_i32_15 = arith.constant 0 : i32
    %36 = vector.broadcast %c0_i32_15 : i32 to vector<16x1xi32>
    %37 = arith.cmpi sge, %35, %36 : vector<16x1xi32>
    %c1_i32_16 = arith.constant 1 : i32
    %38 = vector.broadcast %c1_i32_16 : i32 to vector<16x1xi32>
    %39 = arith.addi %3, %38 : vector<16x1xi32>
    %c16_i32_17 = arith.constant 16 : i32
    %40 = vector.broadcast %c16_i32_17 : i32 to vector<16x1xi32>
    %41 = arith.cmpi slt, %39, %40 : vector<16x1xi32>
    %42 = arith.andi %37, %41 : vector<16x1xi1>
    %cst_18 = arith.constant 0.000000e+00 : f32
    %43 = vector.shape_cast %42 : vector<16x1xi1> to vector<16x1xi1>
    %44 = vector.broadcast %43 : vector<16x1xi1> to vector<16x16xi1>
    %45 = vector.broadcast %cst_18 : f32 to vector<16x16xf32>
    %46 = arith.select %44, %33, %45 : vector<16x16xi1>, vector<16x16xf32>
    %47 = arith.addf %28, %46 : vector<16x16xf32>
    %c0_19 = arith.constant 0 : index
    %c0_20 = arith.constant 0 : index
    %48 = vector.load %arg3[%c0_19, %c0_20] : memref<1x16xf32, #tpu.memory_space<vmem>>, vector<1x16xf32>
    %49 = vector.broadcast %48 : vector<1x16xf32> to vector<16x16xf32>
    %50 = arith.addf %47, %49 : vector<16x16xf32>
    %cst_21 = arith.constant 0.000000e+00 : f32
    %51 = vector.broadcast %cst_21 : f32 to vector<16x16xf32>
    %52 = arith.maximumf %50, %51 : vector<16x16xf32>
    %cst_22 = arith.constant 0.000000e+00 : f32
    %53 = vector.broadcast %cst_22 : f32 to vector<16x8xf32>
    %54 = arith.truncf %52 : vector<16x16xf32> to vector<16x16xbf16>
    %c0_23 = arith.constant 0 : index
    %c0_24 = arith.constant 0 : index
    %c0_25 = arith.constant 0 : index
    %55 = vector.load %arg4[%c0_23, %c0_24, %c0_25] : memref<3x16x8xbf16, #tpu.memory_space<vmem>>, vector<1x16x8xbf16>
    %56 = vector.shape_cast %55 : vector<1x16x8xbf16> to vector<16x8xbf16>
    %cst_26 = arith.constant dense<0.000000e+00> : vector<16x8xf32>
    %57 = tpu.matmul %54, %56, %cst_26 {dimension_numbers = #tpu.dot_dimension_numbers<[1], [0], [0], [1], [0, 0, 1, 1], [], []>} : vector<16x16xbf16>, vector<16x8xbf16>, vector<16x8xf32> -> vector<16x8xf32>
    %c1_i32_27 = arith.constant 1 : i32
    %58 = tpu.dynamic_rotate %57 by %c1_i32_27 dim 0 : vector<16x8xf32>, i32 -> vector<16x8xf32>
    %c-1_i32_28 = arith.constant -1 : i32
    %59 = vector.broadcast %c-1_i32_28 : i32 to vector<16x1xi32>
    %60 = arith.addi %3, %59 : vector<16x1xi32>
    %c0_i32_29 = arith.constant 0 : i32
    %61 = vector.broadcast %c0_i32_29 : i32 to vector<16x1xi32>
    %62 = arith.cmpi sge, %60, %61 : vector<16x1xi32>
    %c-1_i32_30 = arith.constant -1 : i32
    %63 = vector.broadcast %c-1_i32_30 : i32 to vector<16x1xi32>
    %64 = arith.addi %3, %63 : vector<16x1xi32>
    %c16_i32_31 = arith.constant 16 : i32
    %65 = vector.broadcast %c16_i32_31 : i32 to vector<16x1xi32>
    %66 = arith.cmpi slt, %64, %65 : vector<16x1xi32>
    %67 = arith.andi %62, %66 : vector<16x1xi1>
    %cst_32 = arith.constant 0.000000e+00 : f32
    %68 = vector.shape_cast %67 : vector<16x1xi1> to vector<16x1xi1>
    %69 = vector.broadcast %68 : vector<16x1xi1> to vector<16x8xi1>
    %70 = vector.broadcast %cst_32 : f32 to vector<16x8xf32>
    %71 = arith.select %69, %58, %70 : vector<16x8xi1>, vector<16x8xf32>
    %72 = arith.addf %53, %71 : vector<16x8xf32>
    %73 = arith.truncf %52 : vector<16x16xf32> to vector<16x16xbf16>
    %c1_33 = arith.constant 1 : index
    %c0_34 = arith.constant 0 : index
    %c0_35 = arith.constant 0 : index
    %74 = vector.load %arg4[%c1_33, %c0_34, %c0_35] : memref<3x16x8xbf16, #tpu.memory_space<vmem>>, vector<1x16x8xbf16>
    %75 = vector.shape_cast %74 : vector<1x16x8xbf16> to vector<16x8xbf16>
    %cst_36 = arith.constant dense<0.000000e+00> : vector<16x8xf32>
    %76 = tpu.matmul %73, %75, %cst_36 {dimension_numbers = #tpu.dot_dimension_numbers<[1], [0], [0], [1], [0, 0, 1, 1], [], []>} : vector<16x16xbf16>, vector<16x8xbf16>, vector<16x8xf32> -> vector<16x8xf32>
    %77 = arith.addf %72, %76 : vector<16x8xf32>
    %78 = arith.truncf %52 : vector<16x16xf32> to vector<16x16xbf16>
    %c2_37 = arith.constant 2 : index
    %c0_38 = arith.constant 0 : index
    %c0_39 = arith.constant 0 : index
    %79 = vector.load %arg4[%c2_37, %c0_38, %c0_39] : memref<3x16x8xbf16, #tpu.memory_space<vmem>>, vector<1x16x8xbf16>
    %80 = vector.shape_cast %79 : vector<1x16x8xbf16> to vector<16x8xbf16>
    %cst_40 = arith.constant dense<0.000000e+00> : vector<16x8xf32>
    %81 = tpu.matmul %78, %80, %cst_40 {dimension_numbers = #tpu.dot_dimension_numbers<[1], [0], [0], [1], [0, 0, 1, 1], [], []>} : vector<16x16xbf16>, vector<16x8xbf16>, vector<16x8xf32> -> vector<16x8xf32>
    %c15_i32_41 = arith.constant 15 : i32
    %82 = tpu.dynamic_rotate %81 by %c15_i32_41 dim 0 : vector<16x8xf32>, i32 -> vector<16x8xf32>
    %c1_i32_42 = arith.constant 1 : i32
    %83 = vector.broadcast %c1_i32_42 : i32 to vector<16x1xi32>
    %84 = arith.addi %3, %83 : vector<16x1xi32>
    %c0_i32_43 = arith.constant 0 : i32
    %85 = vector.broadcast %c0_i32_43 : i32 to vector<16x1xi32>
    %86 = arith.cmpi sge, %84, %85 : vector<16x1xi32>
    %c1_i32_44 = arith.constant 1 : i32
    %87 = vector.broadcast %c1_i32_44 : i32 to vector<16x1xi32>
    %88 = arith.addi %3, %87 : vector<16x1xi32>
    %c16_i32_45 = arith.constant 16 : i32
    %89 = vector.broadcast %c16_i32_45 : i32 to vector<16x1xi32>
    %90 = arith.cmpi slt, %88, %89 : vector<16x1xi32>
    %91 = arith.andi %86, %90 : vector<16x1xi1>
    %cst_46 = arith.constant 0.000000e+00 : f32
    %92 = vector.shape_cast %91 : vector<16x1xi1> to vector<16x1xi1>
    %93 = vector.broadcast %92 : vector<16x1xi1> to vector<16x8xi1>
    %94 = vector.broadcast %cst_46 : f32 to vector<16x8xf32>
    %95 = arith.select %93, %82, %94 : vector<16x8xi1>, vector<16x8xf32>
    %96 = arith.addf %77, %95 : vector<16x8xf32>
    %c0_47 = arith.constant 0 : index
    %c0_48 = arith.constant 0 : index
    %97 = vector.load %arg5[%c0_47, %c0_48] : memref<1x8xf32, #tpu.memory_space<vmem>>, vector<1x8xf32>
    %98 = vector.broadcast %97 : vector<1x8xf32> to vector<16x8xf32>
    %99 = arith.addf %96, %98 : vector<16x8xf32>
    %cst_49 = arith.constant 0.000000e+00 : f32
    %100 = vector.broadcast %cst_49 : f32 to vector<16x8xf32>
    %101 = arith.maximumf %99, %100 : vector<16x8xf32>
    %c0_50 = arith.constant 0 : index
    %c0_51 = arith.constant 0 : index
    %102 = vector.load %arg6[%c0_50, %c0_51] : memref<8x128xbf16, #tpu.memory_space<vmem>>, vector<8x128xbf16>
    %c0_52 = arith.constant 0 : index
    %c0_53 = arith.constant 0 : index
    %103 = vector.load %arg7[%c0_52, %c0_53] : memref<1x128xf32, #tpu.memory_space<vmem>>, vector<1x128xf32>
    %104 = arith.truncf %101 : vector<16x8xf32> to vector<16x8xbf16>
    %cst_54 = arith.constant dense<0.000000e+00> : vector<16x128xf32>
    %105 = tpu.matmul %104, %102, %cst_54 {dimension_numbers = #tpu.dot_dimension_numbers<[1], [0], [0], [1], [0, 0, 1, 1], [], []>} : vector<16x8xbf16>, vector<8x128xbf16>, vector<16x128xf32> -> vector<16x128xf32>
    %106 = vector.broadcast %103 : vector<1x128xf32> to vector<16x128xf32>
    %107 = arith.addf %105, %106 : vector<16x128xf32>
    %108 = vector.shape_cast %107 : vector<16x128xf32> to vector<1x16x128xf32>
    %109 = math.tanh %108 : vector<1x16x128xf32>
    %c0_55 = arith.constant 0 : index
    %c0_56 = arith.constant 0 : index
    %c0_57 = arith.constant 0 : index
    %110 = vector.load %arg8[%c0_55, %c0_56, %c0_57] : memref<1x16x128xf32, #tpu.memory_space<vmem>>, vector<1x16x128xf32>
    tpu.vector_store %arg8[%c0_55, %c0_56, %c0_57], %109 {strides = array<i32>} : memref<1x16x128xf32, #tpu.memory_space<vmem>>, vector<1x16x128xf32>,
    return
  }
  func.func @transform_0(%arg0: i32) -> (i32, i32, i32) {
    %c0_i32 = arith.constant 0 : i32
    %c0_i32_0 = arith.constant 0 : i32
    %c0_i32_1 = arith.constant 0 : i32
    return %arg0, %c0_i32, %c0_i32_0 : i32, i32, i32
  }
  func.func @transform_1(%arg0: i32) -> (i32, i32, i32) {
    %c0_i32 = arith.constant 0 : i32
    %c0_i32_0 = arith.constant 0 : i32
    %c0_i32_1 = arith.constant 0 : i32
    %c0_i32_2 = arith.constant 0 : i32
    return %c0_i32, %c0_i32_0, %c0_i32_1 : i32, i32, i32
  }
  func.func @transform_2(%arg0: i32) -> (i32, i32) {
    %c0_i32 = arith.constant 0 : i32
    %c0_i32_0 = arith.constant 0 : i32
    %c0_i32_1 = arith.constant 0 : i32
    return %c0_i32, %c0_i32_0 : i32, i32
  }
  func.func @transform_3(%arg0: i32) -> (i32, i32, i32) {
    %c0_i32 = arith.constant 0 : i32
    %c0_i32_0 = arith.constant 0 : i32
    %c0_i32_1 = arith.constant 0 : i32
    %c0_i32_2 = arith.constant 0 : i32
    return %c0_i32, %c0_i32_0, %c0_i32_1 : i32, i32, i32
  }
  func.func @transform_4(%arg0: i32) -> (i32, i32) {
    %c0_i32 = arith.constant 0 : i32
    %c0_i32_0 = arith.constant 0 : i32
    %c0_i32_1 = arith.constant 0 : i32
    return %c0_i32, %c0_i32_0 : i32, i32
  }
  func.func @transform_5(%arg0: i32) -> (i32, i32) {
    %c0_i32 = arith.constant 0 : i32
    %c0_i32_0 = arith.constant 0 : i32
    %c0_i32_1 = arith.constant 0 : i32
    return %c0_i32, %c0_i32_0 : i32, i32
  }
  func.func @transform_6(%arg0: i32) -> (i32, i32) {
    %c0_i32 = arith.constant 0 : i32
    %c0_i32_0 = arith.constant 0 : i32
    %c0_i32_1 = arith.constant 0 : i32
    return %c0_i32, %c0_i32_0 : i32, i32
  }
  func.func @transform_7(%arg0: i32) -> (i32, i32, i32) {
    %c0_i32 = arith.constant 0 : i32
    %c0_i32_0 = arith.constant 0 : i32
    %c0_i32_1 = arith.constant 0 : i32
    return %arg0, %c0_i32, %c0_i32_0 : i32, i32, i32
  }
}

</mosaic_0001>

<llo_original>
// kernel: _lambda_.3
$region0: #{_lambda_.3}
  #allocation0 [shape = 'u32[]', space=smem, size = 0x4, offset = 0x4, fixed_abs, tag = 'smem constant byte address 0x4 - core index']
  #allocation1 [shape = 'u32[144,128]{1,0:T(1,128)}', space=vmem, size = 0x12000, scoped, tag = 'internal scratch']
  %s0 = inlined_call_operand.vmem [shape: f32[2,16,1], index: 0, kind: input, shape index: {}]
  %s1 = inlined_call_operand.vmem [shape: bf16[3,1,8], index: 1, kind: input, shape index: {}]
  %s2 = inlined_call_operand.vmem [shape: f32[1,8], index: 2, kind: input, shape index: {}]
  %s3 = inlined_call_operand.vmem [shape: bf16[3,8,16], index: 3, kind: input, shape index: {}]
  %s4 = inlined_call_operand.vmem [shape: f32[1,16], index: 4, kind: input, shape index: {}]
  %s5 = inlined_call_operand.vmem [shape: bf16[16,32], index: 5, kind: input, shape index: {}]
  %s6 = inlined_call_operand.vmem [shape: f32[1,32], index: 6, kind: input, shape index: {}]
  %s7 = inlined_call_operand.vmem [shape: f32[16,32], index: 7, kind: input, shape index: {}]
  %s8 = inlined_call_operand.vmem [shape: f32[2,16,32], index: 8, kind: output, shape index: {}]
  %s9 = sld [smem:[#allocation0]]
  $region65: #{_lambda_.3} parent=0
    _
  %s11 = ssub.s32 1, %s9
  %s12 = scalar_select 0, %s11, %s9
  loop: start=0, step=1, limit=4
  $region2: #{_lambda_.3} parent=0 // loop_pre_header
    _
  $region3: #{_lambda_.3} parent=0 // loop_header
    %s14 = sphi 0, %s18
    %p15 = scmp.ge.s32.totalorder %s14, 4
    %s24 = sphi 0, %s26
    %s27 = sphi 0, %s24
    %s28 = sphi 0, %s27
    %s44 = sphi 0, %s28
    %s48 = sphi 0, %s48
    %s50 = sphi 0, %s48
    %s51 = sphi 0, %s50
    %s65 = sphi 0, %s51
    %s69 = sphi 0, %s69
    %s71 = sphi 0, %s69
    %s72 = sphi 0, %s71
    %s86 = sphi 0, %s72
    %s90 = sphi 0, %s90
    %s92 = sphi 0, %s90
    %s93 = sphi 0, %s92
    %s107 = sphi 0, %s93
    %s111 = sphi 0, %s111
    %s113 = sphi 0, %s111
    %s114 = sphi 0, %s113
    %s128 = sphi 0, %s114
    %s132 = sphi 0, %s132
    %s134 = sphi 0, %s132
    %s135 = sphi 0, %s134
    %s149 = sphi 0, %s135
    %s153 = sphi 0, %s153
    %s155 = sphi 0, %s153
    %s156 = sphi 0, %s155
    %s170 = sphi 0, %s156
    %s174 = sphi 0, %s174
    %s176 = sphi 0, %s174
    %s177 = sphi 0, %s176
    %s191 = sphi 0, %s177
    %s197 = sphi 0, %s199
    %s200 = sphi 0, %s197
    %s201 = sphi 0, %s200
    %s217 = sphi 0, %s201
  $region4: #{_lambda_.3} parent=0 // loop_header_branch
    %17 = sbr.rel (%p15) target = $region8
  $region5: #{_lambda_.3} parent=0 // loop_body
    %s19 = ssub.s32 %s14, 1
    %s20 = ssub.s32 %s14, 2
    %s21 = sadd.s32 %s14, 1
    %s22 = ssub.s32 %s14, %s21
    %p23 = scmp.eq.s32.totalorder %s22, 0
    %s25 = sadd.s32 %s24, 1
    %s26 = scalar_select %p23, %s24, %s25
    %p29 = pneg %p23
    %p30 = scmp.eq.s32.totalorder %s14, 1
    %p31 = por %p29, %p30
    %p32 = scmp.ne.s32.totalorder %s24, %s27
    %p33 = scmp.eq.s32.totalorder %s14, 0
    %p34 = por %p32, %p33
    %p35 = scmp.ne.s32.totalorder %s24, %s27
    %p36 = scmp.eq.s32.totalorder %s19, 1
    %p37 = por %p35, %p36
    %p38 = scmp.ne.s32.totalorder %s27, %s28
    %p39 = scmp.eq.s32.totalorder %s19, 0
    %p40 = por %p38, %p39
    %p41 = scmp.ne.s32.totalorder %s27, %s28
    %p42 = scmp.eq.s32.totalorder %s20, 1
    %p43 = por %p41, %p42
    %p45 = scmp.ne.s32.totalorder %s28, %s44
    %p46 = scmp.eq.s32.totalorder %s20, 0
    %p47 = por %p45, %p46
    %s49 = sadd.s32 %s48, 1
    %p52 = scmp.eq.s32.totalorder %s14, 1
    %p53 = scmp.ne.s32.totalorder %s48, %s50
    %p54 = scmp.eq.s32.totalorder %s14, 0
    %p55 = por %p53, %p54
    %p56 = scmp.ne.s32.totalorder %s48, %s50
    %p57 = scmp.eq.s32.totalorder %s19, 1
    %p58 = por %p56, %p57
    %p59 = scmp.ne.s32.totalorder %s50, %s51
    %p60 = scmp.eq.s32.totalorder %s19, 0
    %p61 = por %p59, %p60
    %p62 = scmp.ne.s32.totalorder %s50, %s51
    %p63 = scmp.eq.s32.totalorder %s20, 1
    %p64 = por %p62, %p63
    %p66 = scmp.ne.s32.totalorder %s51, %s65
    %p67 = scmp.eq.s32.totalorder %s20, 0
    %p68 = por %p66, %p67
    %s70 = sadd.s32 %s69, 1
    %p73 = scmp.eq.s32.totalorder %s14, 1
    %p74 = scmp.ne.s32.totalorder %s69, %s71
    %p75 = scmp.eq.s32.totalorder %s14, 0
    %p76 = por %p74, %p75
    %p77 = scmp.ne.s32.totalorder %s69, %s71
    %p78 = scmp.eq.s32.totalorder %s19, 1
    %p79 = por %p77, %p78
    %p80 = scmp.ne.s32.totalorder %s71, %s72
    %p81 = scmp.eq.s32.totalorder %s19, 0
    %p82 = por %p80, %p81
    %p83 = scmp.ne.s32.totalorder %s71, %s72
    %p84 = scmp.eq.s32.totalorder %s20, 1
    %p85 = por %p83, %p84
    %p87 = scmp.ne.s32.totalorder %s72, %s86
    %p88 = scmp.eq.s32.totalorder %s20, 0
    %p89 = por %p87, %p88
    %s91 = sadd.s32 %s90, 1
    %p94 = scmp.eq.s32.totalorder %s14, 1
    %p95 = scmp.ne.s32.totalorder %s90, %s92
    %p96 = scmp.eq.s32.totalorder %s14, 0
    %p97 = por %p95, %p96
    %p98 = scmp.ne.s32.totalorder %s90, %s92
    %p99 = scmp.eq.s32.totalorder %s19, 1
    %p100 = por %p98, %p99
    %p101 = scmp.ne.s32.totalorder %s92, %s93
    %p102 = scmp.eq.s32.totalorder %s19, 0
    %p103 = por %p101, %p102
    %p104 = scmp.ne.s32.totalorder %s92, %s93
    %p105 = scmp.eq.s32.totalorder %s20, 1
    %p106 = por %p104, %p105
    %p108 = scmp.ne.s32.totalorder %s93, %s107
    %p109 = scmp.eq.s32.totalorder %s20, 0
    %p110 = por %p108, %p109
    %s112 = sadd.s32 %s111, 1
    %p115 = scmp.eq.s32.totalorder %s14, 1
    %p116 = scmp.ne.s32.totalorder %s111, %s113
    %p117 = scmp.eq.s32.totalorder %s14, 0
    %p118 = por %p116, %p117
    %p119 = scmp.ne.s32.totalorder %s111, %s113
    %p120 = scmp.eq.s32.totalorder %s19, 1
    %p121 = por %p119, %p120
    %p122 = scmp.ne.s32.totalorder %s113, %s114
    %p123 = scmp.eq.s32.totalorder %s19, 0
    %p124 = por %p122, %p123
    %p125 = scmp.ne.s32.totalorder %s113, %s114
    %p126 = scmp.eq.s32.totalorder %s20, 1
    %p127 = por %p125, %p126
    %p129 = scmp.ne.s32.totalorder %s114, %s128
    %p130 = scmp.eq.s32.totalorder %s20, 0
    %p131 = por %p129, %p130
    %s133 = sadd.s32 %s132, 1
    %p136 = scmp.eq.s32.totalorder %s14, 1
    %p137 = scmp.ne.s32.totalorder %s132, %s134
    %p138 = scmp.eq.s32.totalorder %s14, 0
    %p139 = por %p137, %p138
    %p140 = scmp.ne.s32.totalorder %s132, %s134
    %p141 = scmp.eq.s32.totalorder %s19, 1
    %p142 = por %p140, %p141
    %p143 = scmp.ne.s32.totalorder %s134, %s135
    %p144 = scmp.eq.s32.totalorder %s19, 0
    %p145 = por %p143, %p144
    %p146 = scmp.ne.s32.totalorder %s134, %s135
    %p147 = scmp.eq.s32.totalorder %s20, 1
    %p148 = por %p146, %p147
    %p150 = scmp.ne.s32.totalorder %s135, %s149
    %p151 = scmp.eq.s32.totalorder %s20, 0
    %p152 = por %p150, %p151
    %s154 = sadd.s32 %s153, 1
    %p157 = scmp.eq.s32.totalorder %s14, 1
    %p158 = scmp.ne.s32.totalorder %s153, %s155
    %p159 = scmp.eq.s32.totalorder %s14, 0
    %p160 = por %p158, %p159
    %p161 = scmp.ne.s32.totalorder %s153, %s155
    %p162 = scmp.eq.s32.totalorder %s19, 1
    %p163 = por %p161, %p162
    %p164 = scmp.ne.s32.totalorder %s155, %s156
    %p165 = scmp.eq.s32.totalorder %s19, 0
    %p166 = por %p164, %p165
    %p167 = scmp.ne.s32.totalorder %s155, %s156
    %p168 = scmp.eq.s32.totalorder %s20, 1
    %p169 = por %p167, %p168
    %p171 = scmp.ne.s32.totalorder %s156, %s170
    %p172 = scmp.eq.s32.totalorder %s20, 0
    %p173 = por %p171, %p172
    %s175 = sadd.s32 %s174, 1
    %p178 = scmp.eq.s32.totalorder %s14, 1
    %p179 = scmp.ne.s32.totalorder %s174, %s176
    %p180 = scmp.eq.s32.totalorder %s14, 0
    %p181 = por %p179, %p180
    %p182 = scmp.ne.s32.totalorder %s174, %s176
    %p183 = scmp.eq.s32.totalorder %s19, 1
    %p184 = por %p182, %p183
    %p185 = scmp.ne.s32.totalorder %s176, %s177
    %p186 = scmp.eq.s32.totalorder %s19, 0
    %p187 = por %p185, %p186
    %p188 = scmp.ne.s32.totalorder %s176, %s177
    %p189 = scmp.eq.s32.totalorder %s20, 1
    %p190 = por %p188, %p189
    %p192 = scmp.ne.s32.totalorder %s177, %s191
    %p193 = scmp.eq.s32.totalorder %s20, 0
    %p194 = por %p192, %p193
    %s195 = ssub.s32 %s14, %s21
    %p196 = scmp.eq.s32.totalorder %s195, 0
    %s198 = sadd.s32 %s197, 1
    %s199 = scalar_select %p196, %s197, %s198
    %p202 = pneg %p196
    %p203 = scmp.eq.s32.totalorder %s14, 1
    %p204 = por %p202, %p203
    %p205 = scmp.ne.s32.totalorder %s197, %s200
    %p206 = scmp.eq.s32.totalorder %s14, 0
    %p207 = por %p205, %p206
    %p208 = scmp.ne.s32.totalorder %s197, %s200
    %p209 = scmp.eq.s32.totalorder %s19, 1
    %p210 = por %p208, %p209
    %p211 = scmp.ne.s32.totalorder %s200, %s201
    %p212 = scmp.eq.s32.totalorder %s19, 0
    %p213 = por %p211, %p212
    %p214 = scmp.ne.s32.totalorder %s200, %s201
    %p215 = scmp.eq.s32.totalorder %s20, 1
    %p216 = por %p214, %p215
    %p218 = scmp.ne.s32.totalorder %s201, %s217
    %p219 = scmp.eq.s32.totalorder %s20, 0
    %p220 = por %p218, %p219
    %p221 = scmp.le.s32.totalorder 1, %s14
    %p222 = scmp.lt.s32.totalorder %s14, 3
    %p223 = pnand %p221, %p222
    %p224 = pneg %p223
    // Predicated region
    $region9: #{_lambda_.3} parent=5 // pred_check
      _
    $region10: #{_lambda_.3} parent=5 // pred_check_branch
      %226 = sbr.rel (%p223) target = $region12
    $region11: #{_lambda_.3} parent=5 // pred_region
      %s227 = ssub.s32 %s14, 1
      // Predicated region
      $region13: #{_lambda_.3} parent=11 // pred_check
        %p228 = pneg %p61
      $region14: #{_lambda_.3} parent=11 // pred_check_branch
        %230 = sbr.rel (%p228) target = $region16
      $region15: #{_lambda_.3} parent=11 // pred_region
        _
      $region16: #{_lambda_.3} parent=11 // pred_fallthru
        _
      // Predicated region
      $region17: #{_lambda_.3} parent=11 // pred_check
        %p231 = pneg %p82
      $region18: #{_lambda_.3} parent=11 // pred_check_branch
        %233 = sbr.rel (%p231) target = $region20
      $region19: #{_lambda_.3} parent=11 // pred_region
        _
      $region20: #{_lambda_.3} parent=11 // pred_fallthru
        _
      // Predicated region
      $region21: #{_lambda_.3} parent=11 // pred_check
        %p234 = pneg %p103
      $region22: #{_lambda_.3} parent=11 // pred_check_branch
        %236 = sbr.rel (%p234) target = $region24
      $region23: #{_lambda_.3} parent=11 // pred_region
        _
      $region24: #{_lambda_.3} parent=11 // pred_fallthru
        _
      // Predicated region
      $region25: #{_lambda_.3} parent=11 // pred_check
        %p237 = pneg %p124
      $region26: #{_lambda_.3} parent=11 // pred_check_branch
        %239 = sbr.rel (%p237) target = $region28
      $region27: #{_lambda_.3} parent=11 // pred_region
        _
      $region28: #{_lambda_.3} parent=11 // pred_fallthru
        _
      // Predicated region
      $region29: #{_lambda_.3} parent=11 // pred_check
        %p240 = pneg %p145
      $region30: #{_lambda_.3} parent=11 // pred_check_branch
        %242 = sbr.rel (%p240) target = $region32
      $region31: #{_lambda_.3} parent=11 // pred_region
        _
      $region32: #{_lambda_.3} parent=11 // pred_fallthru
        _
      // Predicated region
      $region33: #{_lambda_.3} parent=11 // pred_check
        %p243 = pneg %p166
      $region34: #{_lambda_.3} parent=11 // pred_check_branch
        %245 = sbr.rel (%p243) target = $region36
      $region35: #{_lambda_.3} parent=11 // pred_region
        _
      $region36: #{_lambda_.3} parent=11 // pred_fallthru
        _
      // Predicated region
      $region37: #{_lambda_.3} parent=11 // pred_check
        %p246 = pneg %p187
      $region38: #{_lambda_.3} parent=11 // pred_check_branch
        %248 = sbr.rel (%p246) target = $region40
      $region39: #{_lambda_.3} parent=11 // pred_region
        _
      $region40: #{_lambda_.3} parent=11 // pred_fallthru
        _
    $region12: #{_lambda_.3} parent=5 // pred_fallthru
      _
    %p249 = scmp.lt.s32.totalorder %s14, 2
    // Predicated region
    $region41: #{_lambda_.3} parent=5 // pred_check
      %p250 = pneg %p249
    $region42: #{_lambda_.3} parent=5 // pred_check_branch
      %252 = sbr.rel (%p250) target = $region44
    $region43: #{_lambda_.3} parent=5 // pred_region
      // Predicated region
      $region45: #{_lambda_.3} parent=43 // pred_check
        %p253 = pneg %p34
      $region46: #{_lambda_.3} parent=43 // pred_check_branch
        %255 = sbr.rel (%p253) target = $region48
      $region47: #{_lambda_.3} parent=43 // pred_region
        %p256 = scmp.lt.s32.totalorder %s14, 1
        %s257 = scalar_select %p256, %s14, 1
        %s258 = smul.addr %s257, 2
        %s259 = smul.addr %s258, 8
        %s260 = scalar_lea.vmem %s0, %s259
      $region48: #{_lambda_.3} parent=43 // pred_fallthru
        _
    $region44: #{_lambda_.3} parent=5 // pred_fallthru
      _
    %p261 = scmp.le.s32.totalorder 1, %s14
    %p262 = scmp.lt.s32.totalorder %s14, 3
    %p263 = pnand %p261, %p262
    %p264 = pneg %p263
    // Predicated region
    $region49: #{_lambda_.3} parent=5 // pred_check
      _
    $region50: #{_lambda_.3} parent=5 // pred_check_branch
      %266 = sbr.rel (%p263) target = $region52
    $region51: #{_lambda_.3} parent=5 // pred_region
      %s267 = ssub.s32 %s14, 1
      %p268 = scmp.lt.s32.totalorder %s19, 1
      %s269 = scalar_select %p268, %s19, 1
      %s270 = smul.addr %s269, 2
      %s271 = smul.addr %s270, 8
      %s272 = scalar_lea.vmem %s0, %s271
      %p273 = pneg %p40
      %p274 = pneg %p37
      %p275 = pneg %p61
      %p276 = pneg %p58
      %p277 = pneg %p82
      %p278 = pneg %p79
      %p279 = pneg %p103
      %p280 = pneg %p100
      %p281 = pneg %p124
      %p282 = pneg %p121
      %p283 = pneg %p145
      %p284 = pneg %p142
      %p285 = pneg %p166
      %p286 = pneg %p163
      %p287 = pneg %p187
      %p288 = pneg %p184
      %p289 = pneg %p213
      %p290 = pneg %p210
      %p291 = scmp.lt.s32.totalorder %s19, 1
      %s292 = scalar_select %p291, %s19, 1
      %s293 = smul.addr %s292, 2
      %s294 = smul.addr %s293, 8
      %s295 = scalar_lea.vmem %s8, %s294
      %p296 = scmp.lt.s32.totalorder %s19, 1
      %s297 = scalar_select %p296, %s19, 1
      %s298 = smul.addr %s297, 2
      %s299 = smul.addr %s298, 8
      %s300 = scalar_lea.vmem %s0, %s299
      %p301 = scmp.lt.s32.totalorder %s19, 1
      %s302 = scalar_select %p301, %s19, 1
      %s303 = smul.addr %s302, 2
      %s304 = smul.addr %s303, 8
      %s305 = scalar_lea.vmem %s8, %s304
      %v307 = vld [vmem:[%s300] sm:$0xff]
      %v308 = vld [vmem:[%s300 + $0x8] sm:$0xff]
      %v309 = vlaneseq
      %v310 = vshrl.u32 %v309, 7
      %v311 = vadd.s32 %v310, 8
      %v312 = vld [vmem:[%s1] sm:$0x1]
      %v313 = vunpack.c.l.bf16 %v312
      %315 = vset.pattern.permute.xlu0 0
      %316 = vperm.xlu0 %315, %v307
      %v317 = vpop.permute.xlu0 %316
      %320 = vset.pattern.permute.xlu0 0
      %321 = vperm.xlu0 %320, %v308
      %v322 = vpop.permute.xlu0 %321
      %v324 = vlaneseq
      %v325 = vshrl.u32 %v324, 7
      %v326 = vsub.s32 0, %v325
      %v327 = vrot.slane %v313, %v326
      %v328 = vmul.f32 %v317, %v327
      %v329 = vmul.f32 %v322, %v327
      %v330 = vrot.slane %v328, 7
      %v331 = vrot.slane %v329, 7
      %vm332 = vcmp.lt.s32.totalorder %v310, 1
      %v333 = vsel %vm332, %v330, %v331
      %v334 = vsel %vm332, %v331, %v330
      %v335 = vadd.s32 %v310, 4294967295
      %v336 = vadd.s32 %v311, 4294967295
      %vm337 = vcmp.ge.s32.totalorder %v335, 0
      %vm338 = vcmp.ge.s32.totalorder %v336, 0
      %vm339 = vcmp.lt.s32.totalorder %v335, 16
      %vm340 = vcmp.lt.s32.totalorder %v336, 16
      %vm341 = vmand %vm337, %vm339
      %vm342 = vmand %vm338, %vm340
      %v343 = vsel %vm341, 1, 0
      %v344 = vsel %vm342, 1, 0
      %vm345 = vcmp.eq.s32.totalorder %v343, 1
      %vm346 = vcmp.eq.s32.totalorder %v344, 1
      %v347 = vsel %vm345, %v334, 0.0
      %v348 = vsel %vm346, %v333, 0.0
      %v349 = vadd.f32 %v347, 0.0
      %v350 = vadd.f32 %v348, 0.0
      %s351 = scalar_lea.vmem %s1, 1
      %v352 = vld [vmem:[%s351] sm:$0x1]
      %v353 = vunpack.c.l.bf16 %v352
      %v354 = vlaneseq
      %v355 = vshrl.u32 %v354, 7
      %v356 = vsub.s32 0, %v355
      %v357 = vrot.slane %v353, %v356
      %v358 = vmul.f32 %v317, %v357
      %v359 = vmul.f32 %v322, %v357
      %v360 = vadd.f32 %v349, %v358
      %v361 = vadd.f32 %v350, %v359
      %s362 = scalar_lea.vmem %s1, 2
      %v363 = vld [vmem:[%s362] sm:$0x1]
      %v364 = vunpack.c.l.bf16 %v363
      %v365 = vlaneseq
      %v366 = vshrl.u32 %v365, 7
      %v367 = vsub.s32 0, %v366
      %v368 = vrot.slane %v364, %v367
      %v369 = vmul.f32 %v317, %v368
      %v370 = vmul.f32 %v322, %v368
      %v371 = vrot.slane %v369, 1
      %v372 = vrot.slane %v370, 1
      %vm373 = vcmp.lt.s32.totalorder %v310, 7
      %v374 = vsel %vm373, %v371, %v372
      %v375 = vsel %vm373, %v372, %v371
      %v376 = vadd.s32 %v310, 1
      %v377 = vadd.s32 %v311, 1
      %vm378 = vcmp.ge.s32.totalorder %v376, 0
      %vm379 = vcmp.ge.s32.totalorder %v377, 0
      %vm380 = vcmp.lt.s32.totalorder %v376, 16
      %vm381 = vcmp.lt.s32.totalorder %v377, 16
      %vm382 = vmand %vm378, %vm380
      %vm383 = vmand %vm379, %vm381
      %v384 = vsel %vm382, 1, 0
      %v385 = vsel %vm383, 1, 0
      %vm386 = vcmp.eq.s32.totalorder %v384, 1
      %vm387 = vcmp.eq.s32.totalorder %v385, 1
      %v388 = vsel %vm386, %v374, 0.0
      %v389 = vsel %vm387, %v375, 0.0
      %v390 = vadd.f32 %v360, %v388
      %v391 = vadd.f32 %v361, %v389
      %v392 = vld [vmem:[%s2] sm:$0x1]
      %v394 = vlaneseq
      %v395 = vshrl.u32 %v394, 7
      %v396 = vsub.s32 0, %v395
      %v397 = vrot.slane %v392, %v396
      %v399 = vadd.f32 %v390, %v397
      %v400 = vadd.f32 %v391, %v397
      %v401 = vmax.f32 %v399, 0.0
      %v402 = vmax.f32 %v400, 0.0
      %v403 = vpack.c.bf16 %v402, %v401
      %v404 = vld [vmem:[%s3] sm:$0xf]
      %vm405 = vcmask 64512
      %v407 = vsel %vm405, %v403, 0
      %vm409 = vcmask 1043456
      %v411 = vsel %vm409, %v404, 0
      %413 = vmatprep.subr.bf16.mxu0 0
      %414 = vmatpush1.bf16.msra.mxu0 %v411
      %415 = vmatprep.subr.bf16.mxu0 0
      %416 = vmatpush1.bf16.msra.mxu0 0
      %417 = vmatprep.subr.bf16.mxu0 0
      %418 = vmatpush1.bf16.msra.mxu0 0
      %419 = vmatprep.subr.bf16.mxu0 0
      %420 = vmatpush1.bf16.msra.mxu0 0
      %421 = vmatprep.subr.bf16.mxu0 0
      %422 = vmatpush1.bf16.msra.mxu0 0
      %423 = vmatprep.subr.bf16.mxu0 0
      %424 = vmatpush1.bf16.msra.mxu0 0
      %425 = vmatprep.subr.bf16.mxu0 0
      %426 = vmatpush1.bf16.msra.mxu0 0
      %427 = vmatprep.subr.bf16.mxu0 0
      %428 = vmatpush1.bf16.msra.mxu0 0
      %429 = vmatprep.subr.bf16.mxu0 0
      %430 = vmatpush1.bf16.msra.mxu0 0
      %431 = vmatprep.subr.bf16.mxu0 0
      %432 = vmatpush1.bf16.msra.mxu0 0
      %433 = vmatprep.subr.bf16.mxu0 0
      %434 = vmatpush1.bf16.msra.mxu0 0
      %435 = vmatprep.subr.bf16.mxu0 0
      %436 = vmatpush1.bf16.msra.mxu0 0
      %437 = vmatprep.subr.bf16.mxu0 0
      %438 = vmatpush1.bf16.msra.mxu0 0
      %439 = vmatprep.subr.bf16.mxu0 0
      %440 = vmatpush1.bf16.msra.mxu0 0
      %441 = vmatprep.subr.bf16.mxu0 0
      %442 = vmatpush1.bf16.msra.mxu0 0
      %443 = vmatprep.subr.bf16.mxu0 0
      %444 = vmatpush1.bf16.msra.mxu0 0
      %445 = vmatprep.mubr.bf16.mxu0 0
      %446 = vmatmul.mubr.bf16.gmra.mrb[0].mxu0 %v407
      %v447 = vpop.f32.mrb[0].mxu0
      %v448 = vadd.f32 0.0, %v447
      %v449 = vpop.f32.mrb[0].mxu0
      %v450 = vpop.f32.mrb[0].mxu0
      %v451 = vadd.f32 0.0, %v450
      %v452 = vpop.f32.mrb[0].mxu0
      %453 = vdwg.mxu0
      %v454 = vrot.slane %v448, 7
      %v455 = vrot.slane %v451, 7
      %v456 = vsel %vm332, %v454, %v455
      %v457 = vsel %vm332, %v455, %v454
      %v458 = vsel %vm345, %v457, 0.0
      %v459 = vsel %vm346, %v456, 0.0
      %v460 = vadd.f32 %v458, 0.0
      %v461 = vadd.f32 %v459, 0.0
      %s462 = scalar_lea.vmem %s3, 4
      %v463 = vld [vmem:[%s462] sm:$0xf]
      %v465 = vsel %vm409, %v463, 0
      %467 = vmatprep.subr.bf16.mxu0 0
      %468 = vmatpush1.bf16.msra.mxu0 %v465
      %469 = vmatprep.subr.bf16.mxu0 0
      %470 = vmatpush1.bf16.msra.mxu0 0
      %471 = vmatprep.subr.bf16.mxu0 0
      %472 = vmatpush1.bf16.msra.mxu0 0
      %473 = vmatprep.subr.bf16.mxu0 0
      %474 = vmatpush1.bf16.msra.mxu0 0
      %475 = vmatprep.subr.bf16.mxu0 0
      %476 = vmatpush1.bf16.msra.mxu0 0
      %477 = vmatprep.subr.bf16.mxu0 0
      %478 = vmatpush1.bf16.msra.mxu0 0
      %479 = vmatprep.subr.bf16.mxu0 0
      %480 = vmatpush1.bf16.msra.mxu0 0
      %481 = vmatprep.subr.bf16.mxu0 0
      %482 = vmatpush1.bf16.msra.mxu0 0
      %483 = vmatprep.subr.bf16.mxu0 0
      %484 = vmatpush1.bf16.msra.mxu0 0
      %485 = vmatprep.subr.bf16.mxu0 0
      %486 = vmatpush1.bf16.msra.mxu0 0
      %487 = vmatprep.subr.bf16.mxu0 0
      %488 = vmatpush1.bf16.msra.mxu0 0
      %489 = vmatprep.subr.bf16.mxu0 0
      %490 = vmatpush1.bf16.msra.mxu0 0
      %491 = vmatprep.subr.bf16.mxu0 0
      %492 = vmatpush1.bf16.msra.mxu0 0
      %493 = vmatprep.subr.bf16.mxu0 0
      %494 = vmatpush1.bf16.msra.mxu0 0
      %495 = vmatprep.subr.bf16.mxu0 0
      %496 = vmatpush1.bf16.msra.mxu0 0
      %497 = vmatprep.subr.bf16.mxu0 0
      %498 = vmatpush1.bf16.msra.mxu0 0
      %499 = vmatprep.mubr.bf16.mxu0 0
      %500 = vmatmul.mubr.bf16.gmra.mrb[0].mxu0 %v407
      %v501 = vpop.f32.mrb[0].mxu0
      %v502 = vadd.f32 0.0, %v501
      %v503 = vpop.f32.mrb[0].mxu0
      %v504 = vpop.f32.mrb[0].mxu0
      %v505 = vadd.f32 0.0, %v504
      %v506 = vpop.f32.mrb[0].mxu0
      %507 = vdwg.mxu0
      %v508 = vadd.f32 %v460, %v502
      %v509 = vadd.f32 %v461, %v505
      %s510 = scalar_lea.vmem %s3, 8
      %v511 = vld [vmem:[%s510] sm:$0xf]
      %v513 = vsel %vm409, %v511, 0
      %515 = vmatprep.subr.bf16.mxu0 0
      %516 = vmatpush1.bf16.msra.mxu0 %v513
      %517 = vmatprep.subr.bf16.mxu0 0
      %518 = vmatpush1.bf16.msra.mxu0 0
      %519 = vmatprep.subr.bf16.mxu0 0
      %520 = vmatpush1.bf16.msra.mxu0 0
      %521 = vmatprep.subr.bf16.mxu0 0
      %522 = vmatpush1.bf16.msra.mxu0 0
      %523 = vmatprep.subr.bf16.mxu0 0
      %524 = vmatpush1.bf16.msra.mxu0 0
      %525 = vmatprep.subr.bf16.mxu0 0
      %526 = vmatpush1.bf16.msra.mxu0 0
      %527 = vmatprep.subr.bf16.mxu0 0
      %528 = vmatpush1.bf16.msra.mxu0 0
      %529 = vmatprep.subr.bf16.mxu0 0
      %530 = vmatpush1.bf16.msra.mxu0 0
      %531 = vmatprep.subr.bf16.mxu0 0
      %532 = vmatpush1.bf16.msra.mxu0 0
      %533 = vmatprep.subr.bf16.mxu0 0
      %534 = vmatpush1.bf16.msra.mxu0 0
      %535 = vmatprep.subr.bf16.mxu0 0
      %536 = vmatpush1.bf16.msra.mxu0 0
      %537 = vmatprep.subr.bf16.mxu0 0
      %538 = vmatpush1.bf16.msra.mxu0 0
      %539 = vmatprep.subr.bf16.mxu0 0
      %540 = vmatpush1.bf16.msra.mxu0 0
      %541 = vmatprep.subr.bf16.mxu0 0
      %542 = vmatpush1.bf16.msra.mxu0 0
      %543 = vmatprep.subr.bf16.mxu0 0
      %544 = vmatpush1.bf16.msra.mxu0 0
      %545 = vmatprep.subr.bf16.mxu0 0
      %546 = vmatpush1.bf16.msra.mxu0 0
      %547 = vmatprep.mubr.bf16.mxu0 0
      %548 = vmatmul.mubr.bf16.gmra.mrb[0].mxu0 %v407
      %v549 = vpop.f32.mrb[0].mxu0
      %v550 = vadd.f32 0.0, %v549
      %v551 = vpop.f32.mrb[0].mxu0
      %v552 = vpop.f32.mrb[0].mxu0
      %v553 = vadd.f32 0.0, %v552
      %v554 = vpop.f32.mrb[0].mxu0
      %555 = vdwg.mxu0
      %v556 = vrot.slane %v550, 1
      %v557 = vrot.slane %v553, 1
      %v558 = vsel %vm373, %v556, %v557
      %v559 = vsel %vm373, %v557, %v556
      %v560 = vsel %vm386, %v558, 0.0
      %v561 = vsel %vm387, %v559, 0.0
      %v562 = vadd.f32 %v508, %v560
      %v563 = vadd.f32 %v509, %v561
      %v564 = vld [vmem:[%s4] sm:$0x1]
      %v566 = vlaneseq
      %v567 = vshrl.u32 %v566, 7
      %v568 = vsub.s32 0, %v567
      %v569 = vrot.slane %v564, %v568
      %v571 = vadd.f32 %v562, %v569
      %v572 = vadd.f32 %v563, %v569
      %v573 = vmax.f32 %v571, 0.0
      %v574 = vmax.f32 %v572, 0.0
      %v575 = vld [vmem:[%s5] sm:$0xf]
      %v576 = vld [vmem:[%s5 + $0x4] sm:$0xf]
      %v577 = vld [vmem:[%s6] sm:$0x1]
      %v578 = vpack.c.bf16 %v574, %v573
      %v580 = vlaneseq
      %v581 = vshrl.u32 %v580, 7
      %v582 = vsub.s32 0, %v581
      %v583 = vrot.slane %v577, %v582
      %v587 = vunpack.c.l.b16 %v575
      %v588 = vunpack.c.l.b16 %v576
      %v589 = vpack.c.b16 %v588, %v587
      %vm591 = vcmask 130048
      %v593 = vsel %vm591, %v578, 0
      %595 = vmatprep.subr.bf16.mxu0 0
      %596 = vmatpush1.bf16.msra.mxu0 %v589
      %597 = vmatprep.subr.bf16.mxu0 0
      %598 = vmatpush1.bf16.msra.mxu0 0
      %599 = vmatprep.subr.bf16.mxu0 0
      %600 = vmatpush1.bf16.msra.mxu0 0
      %601 = vmatprep.subr.bf16.mxu0 0
      %602 = vmatpush1.bf16.msra.mxu0 0
      %603 = vmatprep.subr.bf16.mxu0 0
      %604 = vmatpush1.bf16.msra.mxu0 0
      %605 = vmatprep.subr.bf16.mxu0 0
      %606 = vmatpush1.bf16.msra.mxu0 0
      %607 = vmatprep.subr.bf16.mxu0 0
      %608 = vmatpush1.bf16.msra.mxu0 0
      %609 = vmatprep.subr.bf16.mxu0 0
      %610 = vmatpush1.bf16.msra.mxu0 0
      %611 = vmatprep.subr.bf16.mxu0 0
      %612 = vmatpush1.bf16.msra.mxu0 0
      %613 = vmatprep.subr.bf16.mxu0 0
      %614 = vmatpush1.bf16.msra.mxu0 0
      %615 = vmatprep.subr.bf16.mxu0 0
      %616 = vmatpush1.bf16.msra.mxu0 0
      %617 = vmatprep.subr.bf16.mxu0 0
      %618 = vmatpush1.bf16.msra.mxu0 0
      %619 = vmatprep.subr.bf16.mxu0 0
      %620 = vmatpush1.bf16.msra.mxu0 0
      %621 = vmatprep.subr.bf16.mxu0 0
      %622 = vmatpush1.bf16.msra.mxu0 0
      %623 = vmatprep.subr.bf16.mxu0 0
      %624 = vmatpush1.bf16.msra.mxu0 0
      %625 = vmatprep.subr.bf16.mxu0 0
      %626 = vmatpush1.bf16.msra.mxu0 0
      %627 = vmatprep.mubr.bf16.mxu0 0
      %628 = vmatmul.mubr.bf16.gmra.mrb[0].mxu0 %v593
      %v629 = vpop.f32.mrb[0].mxu0
      %v630 = vadd.f32 %v583, %v629
      %v631 = vpop.f32.mrb[0].mxu0
      %v632 = vpop.f32.mrb[0].mxu0
      %v633 = vadd.f32 %v583, %v632
      %v634 = vpop.f32.mrb[0].mxu0
      %635 = vdwg.mxu0
      %v636 = vld [vmem:[%s7] sm:$0xff]
      %v637 = vld [vmem:[%s7 + $0x8] sm:$0xff]
      %v638 = vadd.f32 %v630, %v636
      %v639 = vadd.f32 %v633, %v637
      %vm640 = vcmask 261120
      %641 = vst.msk [vmem:[%s305] sm:$0xff] %vm640, %v638
      %642 = vst.msk [vmem:[%s305 + $0x8] sm:$0xff] %vm640, %v639
      %p643 = scmp.lt.s32.totalorder %s19, 1
      %s644 = scalar_select %p643, %s19, 1
      %s645 = smul.addr %s644, 2
      %s646 = smul.addr %s645, 8
      %s647 = scalar_lea.vmem %s8, %s646
      // Predicated region
      $region53: #{_lambda_.3} parent=51 // pred_check
        %p648 = pneg %p210
      $region54: #{_lambda_.3} parent=51 // pred_check_branch
        %650 = sbr.rel (%p648) target = $region56
      $region55: #{_lambda_.3} parent=51 // pred_region
        _
      $region56: #{_lambda_.3} parent=51 // pred_fallthru
        _
    $region52: #{_lambda_.3} parent=5 // pred_fallthru
      _
    %p651 = scmp.le.s32.totalorder 2, %s14
    // Predicated region
    $region57: #{_lambda_.3} parent=5 // pred_check
      %p652 = pneg %p651
    $region58: #{_lambda_.3} parent=5 // pred_check_branch
      %654 = sbr.rel (%p652) target = $region60
    $region59: #{_lambda_.3} parent=5 // pred_region
      %s655 = ssub.s32 %s14, 2
      // Predicated region
      $region61: #{_lambda_.3} parent=59 // pred_check
        %p656 = pneg %p216
      $region62: #{_lambda_.3} parent=59 // pred_check_branch
        %658 = sbr.rel (%p656) target = $region64
      $region63: #{_lambda_.3} parent=59 // pred_region
        %p659 = scmp.lt.s32.totalorder %s20, 1
        %s660 = scalar_select %p659, %s20, 1
        %s661 = smul.addr %s660, 2
        %s662 = smul.addr %s661, 8
        %s663 = scalar_lea.vmem %s8, %s662
      $region64: #{_lambda_.3} parent=59 // pred_fallthru
        _
    $region60: #{_lambda_.3} parent=5 // pred_fallthru
      _
  $region6: #{_lambda_.3} parent=0 // loop_footer
    %s18 = sadd.s32 1, %s14
  $region7: #{_lambda_.3} parent=0 // loop_footer_branch
    %13 = sbr.rel target = $region3
  $region8: #{_lambda_.3} parent=0 // loop_exit
    _

// kernel: _lambda_.5
$region0: #{_lambda_.5}
  #allocation0 [shape = 'u32[]', space=smem, size = 0x4, offset = 0x4, fixed_abs, tag = 'smem constant byte address 0x4 - core index']
  #allocation1 [shape = 'u32[144,128]{1,0:T(1,128)}', space=vmem, size = 0x12000, scoped, tag = 'internal scratch']
  %s0 = inlined_call_operand.vmem [shape: f32[2,16,32], index: 0, kind: input, shape index: {}]
  %s1 = inlined_call_operand.vmem [shape: bf16[3,32,16], index: 1, kind: input, shape index: {}]
  %s2 = inlined_call_operand.vmem [shape: f32[1,16], index: 2, kind: input, shape index: {}]
  %s3 = inlined_call_operand.vmem [shape: bf16[3,16,8], index: 3, kind: input, shape index: {}]
  %s4 = inlined_call_operand.vmem [shape: f32[1,8], index: 4, kind: input, shape index: {}]
  %s5 = inlined_call_operand.vmem [shape: bf16[8,128], index: 5, kind: input, shape index: {}]
  %s6 = inlined_call_operand.vmem [shape: f32[1,128], index: 6, kind: input, shape index: {}]
  %s7 = inlined_call_operand.vmem [shape: f32[2,16,128], index: 7, kind: output, shape index: {}]
  %s8 = sld [smem:[#allocation0]]
  $region61: #{_lambda_.5} parent=0
    _
  %s10 = ssub.s32 1, %s8
  %s11 = scalar_select 0, %s10, %s8
  loop: start=0, step=1, limit=4
  $region2: #{_lambda_.5} parent=0 // loop_pre_header
    _
  $region3: #{_lambda_.5} parent=0 // loop_header
    %s13 = sphi 0, %s17
    %p14 = scmp.ge.s32.totalorder %s13, 4
    %s23 = sphi 0, %s25
    %s26 = sphi 0, %s23
    %s27 = sphi 0, %s26
    %s43 = sphi 0, %s27
    %s47 = sphi 0, %s47
    %s49 = sphi 0, %s47
    %s50 = sphi 0, %s49
    %s64 = sphi 0, %s50
    %s68 = sphi 0, %s68
    %s70 = sphi 0, %s68
    %s71 = sphi 0, %s70
    %s85 = sphi 0, %s71
    %s89 = sphi 0, %s89
    %s91 = sphi 0, %s89
    %s92 = sphi 0, %s91
    %s106 = sphi 0, %s92
    %s110 = sphi 0, %s110
    %s112 = sphi 0, %s110
    %s113 = sphi 0, %s112
    %s127 = sphi 0, %s113
    %s131 = sphi 0, %s131
    %s133 = sphi 0, %s131
    %s134 = sphi 0, %s133
    %s148 = sphi 0, %s134
    %s152 = sphi 0, %s152
    %s154 = sphi 0, %s152
    %s155 = sphi 0, %s154
    %s169 = sphi 0, %s155
    %s175 = sphi 0, %s177
    %s178 = sphi 0, %s175
    %s179 = sphi 0, %s178
    %s195 = sphi 0, %s179
  $region4: #{_lambda_.5} parent=0 // loop_header_branch
    %16 = sbr.rel (%p14) target = $region8
  $region5: #{_lambda_.5} parent=0 // loop_body
    %s18 = ssub.s32 %s13, 1
    %s19 = ssub.s32 %s13, 2
    %s20 = sadd.s32 %s13, 1
    %s21 = ssub.s32 %s13, %s20
    %p22 = scmp.eq.s32.totalorder %s21, 0
    %s24 = sadd.s32 %s23, 1
    %s25 = scalar_select %p22, %s23, %s24
    %p28 = pneg %p22
    %p29 = scmp.eq.s32.totalorder %s13, 1
    %p30 = por %p28, %p29
    %p31 = scmp.ne.s32.totalorder %s23, %s26
    %p32 = scmp.eq.s32.totalorder %s13, 0
    %p33 = por %p31, %p32
    %p34 = scmp.ne.s32.totalorder %s23, %s26
    %p35 = scmp.eq.s32.totalorder %s18, 1
    %p36 = por %p34, %p35
    %p37 = scmp.ne.s32.totalorder %s26, %s27
    %p38 = scmp.eq.s32.totalorder %s18, 0
    %p39 = por %p37, %p38
    %p40 = scmp.ne.s32.totalorder %s26, %s27
    %p41 = scmp.eq.s32.totalorder %s19, 1
    %p42 = por %p40, %p41
    %p44 = scmp.ne.s32.totalorder %s27, %s43
    %p45 = scmp.eq.s32.totalorder %s19, 0
    %p46 = por %p44, %p45
    %s48 = sadd.s32 %s47, 1
    %p51 = scmp.eq.s32.totalorder %s13, 1
    %p52 = scmp.ne.s32.totalorder %s47, %s49
    %p53 = scmp.eq.s32.totalorder %s13, 0
    %p54 = por %p52, %p53
    %p55 = scmp.ne.s32.totalorder %s47, %s49
    %p56 = scmp.eq.s32.totalorder %s18, 1
    %p57 = por %p55, %p56
    %p58 = scmp.ne.s32.totalorder %s49, %s50
    %p59 = scmp.eq.s32.totalorder %s18, 0
    %p60 = por %p58, %p59
    %p61 = scmp.ne.s32.totalorder %s49, %s50
    %p62 = scmp.eq.s32.totalorder %s19, 1
    %p63 = por %p61, %p62
    %p65 = scmp.ne.s32.totalorder %s50, %s64
    %p66 = scmp.eq.s32.totalorder %s19, 0
    %p67 = por %p65, %p66
    %s69 = sadd.s32 %s68, 1
    %p72 = scmp.eq.s32.totalorder %s13, 1
    %p73 = scmp.ne.s32.totalorder %s68, %s70
    %p74 = scmp.eq.s32.totalorder %s13, 0
    %p75 = por %p73, %p74
    %p76 = scmp.ne.s32.totalorder %s68, %s70
    %p77 = scmp.eq.s32.totalorder %s18, 1
    %p78 = por %p76, %p77
    %p79 = scmp.ne.s32.totalorder %s70, %s71
    %p80 = scmp.eq.s32.totalorder %s18, 0
    %p81 = por %p79, %p80
    %p82 = scmp.ne.s32.totalorder %s70, %s71
    %p83 = scmp.eq.s32.totalorder %s19, 1
    %p84 = por %p82, %p83
    %p86 = scmp.ne.s32.totalorder %s71, %s85
    %p87 = scmp.eq.s32.totalorder %s19, 0
    %p88 = por %p86, %p87
    %s90 = sadd.s32 %s89, 1
    %p93 = scmp.eq.s32.totalorder %s13, 1
    %p94 = scmp.ne.s32.totalorder %s89, %s91
    %p95 = scmp.eq.s32.totalorder %s13, 0
    %p96 = por %p94, %p95
    %p97 = scmp.ne.s32.totalorder %s89, %s91
    %p98 = scmp.eq.s32.totalorder %s18, 1
    %p99 = por %p97, %p98
    %p100 = scmp.ne.s32.totalorder %s91, %s92
    %p101 = scmp.eq.s32.totalorder %s18, 0
    %p102 = por %p100, %p101
    %p103 = scmp.ne.s32.totalorder %s91, %s92
    %p104 = scmp.eq.s32.totalorder %s19, 1
    %p105 = por %p103, %p104
    %p107 = scmp.ne.s32.totalorder %s92, %s106
    %p108 = scmp.eq.s32.totalorder %s19, 0
    %p109 = por %p107, %p108
    %s111 = sadd.s32 %s110, 1
    %p114 = scmp.eq.s32.totalorder %s13, 1
    %p115 = scmp.ne.s32.totalorder %s110, %s112
    %p116 = scmp.eq.s32.totalorder %s13, 0
    %p117 = por %p115, %p116
    %p118 = scmp.ne.s32.totalorder %s110, %s112
    %p119 = scmp.eq.s32.totalorder %s18, 1
    %p120 = por %p118, %p119
    %p121 = scmp.ne.s32.totalorder %s112, %s113
    %p122 = scmp.eq.s32.totalorder %s18, 0
    %p123 = por %p121, %p122
    %p124 = scmp.ne.s32.totalorder %s112, %s113
    %p125 = scmp.eq.s32.totalorder %s19, 1
    %p126 = por %p124, %p125
    %p128 = scmp.ne.s32.totalorder %s113, %s127
    %p129 = scmp.eq.s32.totalorder %s19, 0
    %p130 = por %p128, %p129
    %s132 = sadd.s32 %s131, 1
    %p135 = scmp.eq.s32.totalorder %s13, 1
    %p136 = scmp.ne.s32.totalorder %s131, %s133
    %p137 = scmp.eq.s32.totalorder %s13, 0
    %p138 = por %p136, %p137
    %p139 = scmp.ne.s32.totalorder %s131, %s133
    %p140 = scmp.eq.s32.totalorder %s18, 1
    %p141 = por %p139, %p140
    %p142 = scmp.ne.s32.totalorder %s133, %s134
    %p143 = scmp.eq.s32.totalorder %s18, 0
    %p144 = por %p142, %p143
    %p145 = scmp.ne.s32.totalorder %s133, %s134
    %p146 = scmp.eq.s32.totalorder %s19, 1
    %p147 = por %p145, %p146
    %p149 = scmp.ne.s32.totalorder %s134, %s148
    %p150 = scmp.eq.s32.totalorder %s19, 0
    %p151 = por %p149, %p150
    %s153 = sadd.s32 %s152, 1
    %p156 = scmp.eq.s32.totalorder %s13, 1
    %p157 = scmp.ne.s32.totalorder %s152, %s154
    %p158 = scmp.eq.s32.totalorder %s13, 0
    %p159 = por %p157, %p158
    %p160 = scmp.ne.s32.totalorder %s152, %s154
    %p161 = scmp.eq.s32.totalorder %s18, 1
    %p162 = por %p160, %p161
    %p163 = scmp.ne.s32.totalorder %s154, %s155
    %p164 = scmp.eq.s32.totalorder %s18, 0
    %p165 = por %p163, %p164
    %p166 = scmp.ne.s32.totalorder %s154, %s155
    %p167 = scmp.eq.s32.totalorder %s19, 1
    %p168 = por %p166, %p167
    %p170 = scmp.ne.s32.totalorder %s155, %s169
    %p171 = scmp.eq.s32.totalorder %s19, 0
    %p172 = por %p170, %p171
    %s173 = ssub.s32 %s13, %s20
    %p174 = scmp.eq.s32.totalorder %s173, 0
    %s176 = sadd.s32 %s175, 1
    %s177 = scalar_select %p174, %s175, %s176
    %p180 = pneg %p174
    %p181 = scmp.eq.s32.totalorder %s13, 1
    %p182 = por %p180, %p181
    %p183 = scmp.ne.s32.totalorder %s175, %s178
    %p184 = scmp.eq.s32.totalorder %s13, 0
    %p185 = por %p183, %p184
    %p186 = scmp.ne.s32.totalorder %s175, %s178
    %p187 = scmp.eq.s32.totalorder %s18, 1
    %p188 = por %p186, %p187
    %p189 = scmp.ne.s32.totalorder %s178, %s179
    %p190 = scmp.eq.s32.totalorder %s18, 0
    %p191 = por %p189, %p190
    %p192 = scmp.ne.s32.totalorder %s178, %s179
    %p193 = scmp.eq.s32.totalorder %s19, 1
    %p194 = por %p192, %p193
    %p196 = scmp.ne.s32.totalorder %s179, %s195
    %p197 = scmp.eq.s32.totalorder %s19, 0
    %p198 = por %p196, %p197
    %p199 = scmp.le.s32.totalorder 1, %s13
    %p200 = scmp.lt.s32.totalorder %s13, 3
    %p201 = pnand %p199, %p200
    %p202 = pneg %p201
    // Predicated region
    $region9: #{_lambda_.5} parent=5 // pred_check
      _
    $region10: #{_lambda_.5} parent=5 // pred_check_branch
      %204 = sbr.rel (%p201) target = $region12
    $region11: #{_lambda_.5} parent=5 // pred_region
      %s205 = ssub.s32 %s13, 1
      // Predicated region
      $region13: #{_lambda_.5} parent=11 // pred_check
        %p206 = pneg %p60
      $region14: #{_lambda_.5} parent=11 // pred_check_branch
        %208 = sbr.rel (%p206) target = $region16
      $region15: #{_lambda_.5} parent=11 // pred_region
        _
      $region16: #{_lambda_.5} parent=11 // pred_fallthru
        _
      // Predicated region
      $region17: #{_lambda_.5} parent=11 // pred_check
        %p209 = pneg %p81
      $region18: #{_lambda_.5} parent=11 // pred_check_branch
        %211 = sbr.rel (%p209) target = $region20
      $region19: #{_lambda_.5} parent=11 // pred_region
        _
      $region20: #{_lambda_.5} parent=11 // pred_fallthru
        _
      // Predicated region
      $region21: #{_lambda_.5} parent=11 // pred_check
        %p212 = pneg %p102
      $region22: #{_lambda_.5} parent=11 // pred_check_branch
        %214 = sbr.rel (%p212) target = $region24
      $region23: #{_lambda_.5} parent=11 // pred_region
        _
      $region24: #{_lambda_.5} parent=11 // pred_fallthru
        _
      // Predicated region
      $region25: #{_lambda_.5} parent=11 // pred_check
        %p215 = pneg %p123
      $region26: #{_lambda_.5} parent=11 // pred_check_branch
        %217 = sbr.rel (%p215) target = $region28
      $region27: #{_lambda_.5} parent=11 // pred_region
        _
      $region28: #{_lambda_.5} parent=11 // pred_fallthru
        _
      // Predicated region
      $region29: #{_lambda_.5} parent=11 // pred_check
        %p218 = pneg %p144
      $region30: #{_lambda_.5} parent=11 // pred_check_branch
        %220 = sbr.rel (%p218) target = $region32
      $region31: #{_lambda_.5} parent=11 // pred_region
        _
      $region32: #{_lambda_.5} parent=11 // pred_fallthru
        _
      // Predicated region
      $region33: #{_lambda_.5} parent=11 // pred_check
        %p221 = pneg %p165
      $region34: #{_lambda_.5} parent=11 // pred_check_branch
        %223 = sbr.rel (%p221) target = $region36
      $region35: #{_lambda_.5} parent=11 // pred_region
        _
      $region36: #{_lambda_.5} parent=11 // pred_fallthru
        _
    $region12: #{_lambda_.5} parent=5 // pred_fallthru
      _
    %p224 = scmp.lt.s32.totalorder %s13, 2
    // Predicated region
    $region37: #{_lambda_.5} parent=5 // pred_check
      %p225 = pneg %p224
    $region38: #{_lambda_.5} parent=5 // pred_check_branch
      %227 = sbr.rel (%p225) target = $region40
    $region39: #{_lambda_.5} parent=5 // pred_region
      // Predicated region
      $region41: #{_lambda_.5} parent=39 // pred_check
        %p228 = pneg %p33
      $region42: #{_lambda_.5} parent=39 // pred_check_branch
        %230 = sbr.rel (%p228) target = $region44
      $region43: #{_lambda_.5} parent=39 // pred_region
        %p231 = scmp.lt.s32.totalorder %s13, 1
        %s232 = scalar_select %p231, %s13, 1
        %s233 = smul.addr %s232, 2
        %s234 = smul.addr %s233, 8
        %s235 = scalar_lea.vmem %s0, %s234
      $region44: #{_lambda_.5} parent=39 // pred_fallthru
        _
    $region40: #{_lambda_.5} parent=5 // pred_fallthru
      _
    %p236 = scmp.le.s32.totalorder 1, %s13
    %p237 = scmp.lt.s32.totalorder %s13, 3
    %p238 = pnand %p236, %p237
    %p239 = pneg %p238
    // Predicated region
    $region45: #{_lambda_.5} parent=5 // pred_check
      _
    $region46: #{_lambda_.5} parent=5 // pred_check_branch
      %241 = sbr.rel (%p238) target = $region48
    $region47: #{_lambda_.5} parent=5 // pred_region
      %s242 = ssub.s32 %s13, 1
      %p243 = scmp.lt.s32.totalorder %s18, 1
      %s244 = scalar_select %p243, %s18, 1
      %s245 = smul.addr %s244, 2
      %s246 = smul.addr %s245, 8
      %s247 = scalar_lea.vmem %s0, %s246
      %p248 = pneg %p39
      %p249 = pneg %p36
      %p250 = pneg %p60
      %p251 = pneg %p57
      %p252 = pneg %p81
      %p253 = pneg %p78
      %p254 = pneg %p102
      %p255 = pneg %p99
      %p256 = pneg %p123
      %p257 = pneg %p120
      %p258 = pneg %p144
      %p259 = pneg %p141
      %p260 = pneg %p165
      %p261 = pneg %p162
      %p262 = pneg %p191
      %p263 = pneg %p188
      %p264 = scmp.lt.s32.totalorder %s18, 1
      %s265 = scalar_select %p264, %s18, 1
      %s266 = smul.addr %s265, 2
      %s267 = smul.addr %s266, 8
      %s268 = scalar_lea.vmem %s7, %s267
      %p269 = scmp.lt.s32.totalorder %s18, 1
      %s270 = scalar_select %p269, %s18, 1
      %s271 = smul.addr %s270, 2
      %s272 = smul.addr %s271, 8
      %s273 = scalar_lea.vmem %s0, %s272
      %p274 = scmp.lt.s32.totalorder %s18, 1
      %s275 = scalar_select %p274, %s18, 1
      %s276 = smul.addr %s275, 2
      %s277 = smul.addr %s276, 8
      %s278 = scalar_lea.vmem %s7, %s277
      %v280 = vld [vmem:[%s273] sm:$0xff]
      %v281 = vld [vmem:[%s273 + $0x8] sm:$0xff]
      %v282 = vlaneseq
      %v283 = vshrl.u32 %v282, 7
      %v284 = vadd.s32 %v283, 8
      %v285 = vpack.c.bf16 %v281, %v280
      %v286 = vld [vmem:[%s1] sm:$0xf]
      %v287 = vld [vmem:[%s1 + $0x4] sm:$0xf]
      %v288 = vld [vmem:[%s1 + $0x8] sm:$0xf]
      %v289 = vld [vmem:[%s1 + $0xc] sm:$0xf]
      %v294 = vunpack.c.l.b16 %v286
      %v295 = vunpack.c.l.b16 %v287
      %v296 = vunpack.c.l.b16 %v288
      %v297 = vunpack.c.l.b16 %v289
      %v298 = vpack.c.b16 %v295, %v294
      %v299 = vpack.c.b16 %v297, %v296
      %vm302 = vcmask 261120
      %v304 = vsel %vm302, %v285, 0
      %306 = vmatprep.subr.bf16.mxu0 0
      %307 = vmatpush1.bf16.msra.mxu0 %v298
      %308 = vmatprep.subr.bf16.mxu0 0
      %309 = vmatpush1.bf16.msra.mxu0 %v299
      %310 = vmatprep.subr.bf16.mxu0 0
      %311 = vmatpush1.bf16.msra.mxu0 0
      %312 = vmatprep.subr.bf16.mxu0 0
      %313 = vmatpush1.bf16.msra.mxu0 0
      %314 = vmatprep.subr.bf16.mxu0 0
      %315 = vmatpush1.bf16.msra.mxu0 0
      %316 = vmatprep.subr.bf16.mxu0 0
      %317 = vmatpush1.bf16.msra.mxu0 0
      %318 = vmatprep.subr.bf16.mxu0 0
      %319 = vmatpush1.bf16.msra.mxu0 0
      %320 = vmatprep.subr.bf16.mxu0 0
      %321 = vmatpush1.bf16.msra.mxu0 0
      %322 = vmatprep.subr.bf16.mxu0 0
      %323 = vmatpush1.bf16.msra.mxu0 0
      %324 = vmatprep.subr.bf16.mxu0 0
      %325 = vmatpush1.bf16.msra.mxu0 0
      %326 = vmatprep.subr.bf16.mxu0 0
      %327 = vmatpush1.bf16.msra.mxu0 0
      %328 = vmatprep.subr.bf16.mxu0 0
      %329 = vmatpush1.bf16.msra.mxu0 0
      %330 = vmatprep.subr.bf16.mxu0 0
      %331 = vmatpush1.bf16.msra.mxu0 0
      %332 = vmatprep.subr.bf16.mxu0 0
      %333 = vmatpush1.bf16.msra.mxu0 0
      %334 = vmatprep.subr.bf16.mxu0 0
      %335 = vmatpush1.bf16.msra.mxu0 0
      %336 = vmatprep.subr.bf16.mxu0 0
      %337 = vmatpush1.bf16.msra.mxu0 0
      %338 = vmatprep.mubr.bf16.mxu0 0
      %339 = vmatmul.mubr.bf16.gmra.mrb[0].mxu0 %v304
      %v340 = vpop.f32.mrb[0].mxu0
      %v341 = vadd.f32 0.0, %v340
      %v342 = vpop.f32.mrb[0].mxu0
      %v343 = vpop.f32.mrb[0].mxu0
      %v344 = vadd.f32 0.0, %v343
      %v345 = vpop.f32.mrb[0].mxu0
      %346 = vdwg.mxu0
      %v347 = vrot.slane %v341, 7
      %v348 = vrot.slane %v344, 7
      %vm349 = vcmp.lt.s32.totalorder %v283, 1
      %v350 = vsel %vm349, %v347, %v348
      %v351 = vsel %vm349, %v348, %v347
      %v352 = vadd.s32 %v283, 4294967295
      %v353 = vadd.s32 %v284, 4294967295
      %vm354 = vcmp.ge.s32.totalorder %v352, 0
      %vm355 = vcmp.ge.s32.totalorder %v353, 0
      %vm356 = vcmp.lt.s32.totalorder %v352, 16
      %vm357 = vcmp.lt.s32.totalorder %v353, 16
      %vm358 = vmand %vm354, %vm356
      %vm359 = vmand %vm355, %vm357
      %v360 = vsel %vm358, 1, 0
      %v361 = vsel %vm359, 1, 0
      %vm362 = vcmp.eq.s32.totalorder %v360, 1
      %vm363 = vcmp.eq.s32.totalorder %v361, 1
      %v364 = vsel %vm362, %v351, 0.0
      %v365 = vsel %vm363, %v350, 0.0
      %v366 = vadd.f32 %v364, 0.0
      %v367 = vadd.f32 %v365, 0.0
      %s368 = scalar_lea.vmem %s1, 16
      %v369 = vld [vmem:[%s368] sm:$0xf]
      %v370 = vld [vmem:[%s368 + $0x4] sm:$0xf]
      %v371 = vld [vmem:[%s368 + $0x8] sm:$0xf]
      %v372 = vld [vmem:[%s368 + $0xc] sm:$0xf]
      %v377 = vunpack.c.l.b16 %v369
      %v378 = vunpack.c.l.b16 %v370
      %v379 = vunpack.c.l.b16 %v371
      %v380 = vunpack.c.l.b16 %v372
      %v381 = vpack.c.b16 %v378, %v377
      %v382 = vpack.c.b16 %v380, %v379
      %385 = vmatprep.subr.bf16.mxu0 0
      %386 = vmatpush1.bf16.msra.mxu0 %v381
      %387 = vmatprep.subr.bf16.mxu0 0
      %388 = vmatpush1.bf16.msra.mxu0 %v382
      %389 = vmatprep.subr.bf16.mxu0 0
      %390 = vmatpush1.bf16.msra.mxu0 0
      %391 = vmatprep.subr.bf16.mxu0 0
      %392 = vmatpush1.bf16.msra.mxu0 0
      %393 = vmatprep.subr.bf16.mxu0 0
      %394 = vmatpush1.bf16.msra.mxu0 0
      %395 = vmatprep.subr.bf16.mxu0 0
      %396 = vmatpush1.bf16.msra.mxu0 0
      %397 = vmatprep.subr.bf16.mxu0 0
      %398 = vmatpush1.bf16.msra.mxu0 0
      %399 = vmatprep.subr.bf16.mxu0 0
      %400 = vmatpush1.bf16.msra.mxu0 0
      %401 = vmatprep.subr.bf16.mxu0 0
      %402 = vmatpush1.bf16.msra.mxu0 0
      %403 = vmatprep.subr.bf16.mxu0 0
      %404 = vmatpush1.bf16.msra.mxu0 0
      %405 = vmatprep.subr.bf16.mxu0 0
      %406 = vmatpush1.bf16.msra.mxu0 0
      %407 = vmatprep.subr.bf16.mxu0 0
      %408 = vmatpush1.bf16.msra.mxu0 0
      %409 = vmatprep.subr.bf16.mxu0 0
      %410 = vmatpush1.bf16.msra.mxu0 0
      %411 = vmatprep.subr.bf16.mxu0 0
      %412 = vmatpush1.bf16.msra.mxu0 0
      %413 = vmatprep.subr.bf16.mxu0 0
      %414 = vmatpush1.bf16.msra.mxu0 0
      %415 = vmatprep.subr.bf16.mxu0 0
      %416 = vmatpush1.bf16.msra.mxu0 0
      %417 = vmatprep.mubr.bf16.mxu0 0
      %418 = vmatmul.mubr.bf16.gmra.mrb[0].mxu0 %v304
      %v419 = vpop.f32.mrb[0].mxu0
      %v420 = vadd.f32 0.0, %v419
      %v421 = vpop.f32.mrb[0].mxu0
      %v422 = vpop.f32.mrb[0].mxu0
      %v423 = vadd.f32 0.0, %v422
      %v424 = vpop.f32.mrb[0].mxu0
      %425 = vdwg.mxu0
      %v426 = vadd.f32 %v366, %v420
      %v427 = vadd.f32 %v367, %v423
      %s428 = scalar_lea.vmem %s1, 32
      %v429 = vld [vmem:[%s428] sm:$0xf]
      %v430 = vld [vmem:[%s428 + $0x4] sm:$0xf]
      %v431 = vld [vmem:[%s428 + $0x8] sm:$0xf]
      %v432 = vld [vmem:[%s428 + $0xc] sm:$0xf]
      %v437 = vunpack.c.l.b16 %v429
      %v438 = vunpack.c.l.b16 %v430
      %v439 = vunpack.c.l.b16 %v431
      %v440 = vunpack.c.l.b16 %v432
      %v441 = vpack.c.b16 %v438, %v437
      %v442 = vpack.c.b16 %v440, %v439
      %445 = vmatprep.subr.bf16.mxu0 0
      %446 = vmatpush1.bf16.msra.mxu0 %v441
      %447 = vmatprep.subr.bf16.mxu0 0
      %448 = vmatpush1.bf16.msra.mxu0 %v442
      %449 = vmatprep.subr.bf16.mxu0 0
      %450 = vmatpush1.bf16.msra.mxu0 0
      %451 = vmatprep.subr.bf16.mxu0 0
      %452 = vmatpush1.bf16.msra.mxu0 0
      %453 = vmatprep.subr.bf16.mxu0 0
      %454 = vmatpush1.bf16.msra.mxu0 0
      %455 = vmatprep.subr.bf16.mxu0 0
      %456 = vmatpush1.bf16.msra.mxu0 0
      %457 = vmatprep.subr.bf16.mxu0 0
      %458 = vmatpush1.bf16.msra.mxu0 0
      %459 = vmatprep.subr.bf16.mxu0 0
      %460 = vmatpush1.bf16.msra.mxu0 0
      %461 = vmatprep.subr.bf16.mxu0 0
      %462 = vmatpush1.bf16.msra.mxu0 0
      %463 = vmatprep.subr.bf16.mxu0 0
      %464 = vmatpush1.bf16.msra.mxu0 0
      %465 = vmatprep.subr.bf16.mxu0 0
      %466 = vmatpush1.bf16.msra.mxu0 0
      %467 = vmatprep.subr.bf16.mxu0 0
      %468 = vmatpush1.bf16.msra.mxu0 0
      %469 = vmatprep.subr.bf16.mxu0 0
      %470 = vmatpush1.bf16.msra.mxu0 0
      %471 = vmatprep.subr.bf16.mxu0 0
      %472 = vmatpush1.bf16.msra.mxu0 0
      %473 = vmatprep.subr.bf16.mxu0 0
      %474 = vmatpush1.bf16.msra.mxu0 0
      %475 = vmatprep.subr.bf16.mxu0 0
      %476 = vmatpush1.bf16.msra.mxu0 0
      %477 = vmatprep.mubr.bf16.mxu0 0
      %478 = vmatmul.mubr.bf16.gmra.mrb[0].mxu0 %v304
      %v479 = vpop.f32.mrb[0].mxu0
      %v480 = vadd.f32 0.0, %v479
      %v481 = vpop.f32.mrb[0].mxu0
      %v482 = vpop.f32.mrb[0].mxu0
      %v483 = vadd.f32 0.0, %v482
      %v484 = vpop.f32.mrb[0].mxu0
      %485 = vdwg.mxu0
      %v486 = vrot.slane %v480, 1
      %v487 = vrot.slane %v483, 1
      %vm488 = vcmp.lt.s32.totalorder %v283, 7
      %v489 = vsel %vm488, %v486, %v487
      %v490 = vsel %vm488, %v487, %v486
      %v491 = vadd.s32 %v283, 1
      %v492 = vadd.s32 %v284, 1
      %vm493 = vcmp.ge.s32.totalorder %v491, 0
      %vm494 = vcmp.ge.s32.totalorder %v492, 0
      %vm495 = vcmp.lt.s32.totalorder %v491, 16
      %vm496 = vcmp.lt.s32.totalorder %v492, 16
      %vm497 = vmand %vm493, %vm495
      %vm498 = vmand %vm494, %vm496
      %v499 = vsel %vm497, 1, 0
      %v500 = vsel %vm498, 1, 0
      %vm501 = vcmp.eq.s32.totalorder %v499, 1
      %vm502 = vcmp.eq.s32.totalorder %v500, 1
      %v503 = vsel %vm501, %v489, 0.0
      %v504 = vsel %vm502, %v490, 0.0
      %v505 = vadd.f32 %v426, %v503
      %v506 = vadd.f32 %v427, %v504
      %v507 = vld [vmem:[%s2] sm:$0x1]
      %v509 = vlaneseq
      %v510 = vshrl.u32 %v509, 7
      %v511 = vsub.s32 0, %v510
      %v512 = vrot.slane %v507, %v511
      %v514 = vadd.f32 %v505, %v512
      %v515 = vadd.f32 %v506, %v512
      %v516 = vmax.f32 %v514, 0.0
      %v517 = vmax.f32 %v515, 0.0
      %v518 = vpack.c.bf16 %v517, %v516
      %v519 = vld [vmem:[%s3] sm:$0xf]
      %v520 = vld [vmem:[%s3 + $0x4] sm:$0xf]
      %v523 = vunpack.c.l.b16 %v519
      %v524 = vunpack.c.l.b16 %v520
      %v525 = vpack.c.b16 %v524, %v523
      %vm527 = vcmask 130048
      %v529 = vsel %vm527, %v518, 0
      %531 = vmatprep.subr.bf16.mxu0 0
      %532 = vmatpush1.bf16.msra.mxu0 %v525
      %533 = vmatprep.subr.bf16.mxu0 0
      %534 = vmatpush1.bf16.msra.mxu0 0
      %535 = vmatprep.subr.bf16.mxu0 0
      %536 = vmatpush1.bf16.msra.mxu0 0
      %537 = vmatprep.subr.bf16.mxu0 0
      %538 = vmatpush1.bf16.msra.mxu0 0
      %539 = vmatprep.subr.bf16.mxu0 0
      %540 = vmatpush1.bf16.msra.mxu0 0
      %541 = vmatprep.subr.bf16.mxu0 0
      %542 = vmatpush1.bf16.msra.mxu0 0
      %543 = vmatprep.subr.bf16.mxu0 0
      %544 = vmatpush1.bf16.msra.mxu0 0
      %545 = vmatprep.subr.bf16.mxu0 0
      %546 = vmatpush1.bf16.msra.mxu0 0
      %547 = vmatprep.subr.bf16.mxu0 0
      %548 = vmatpush1.bf16.msra.mxu0 0
      %549 = vmatprep.subr.bf16.mxu0 0
      %550 = vmatpush1.bf16.msra.mxu0 0
      %551 = vmatprep.subr.bf16.mxu0 0
      %552 = vmatpush1.bf16.msra.mxu0 0
      %553 = vmatprep.subr.bf16.mxu0 0
      %554 = vmatpush1.bf16.msra.mxu0 0
      %555 = vmatprep.subr.bf16.mxu0 0
      %556 = vmatpush1.bf16.msra.mxu0 0
      %557 = vmatprep.subr.bf16.mxu0 0
      %558 = vmatpush1.bf16.msra.mxu0 0
      %559 = vmatprep.subr.bf16.mxu0 0
      %560 = vmatpush1.bf16.msra.mxu0 0
      %561 = vmatprep.subr.bf16.mxu0 0
      %562 = vmatpush1.bf16.msra.mxu0 0
      %563 = vmatprep.mubr.bf16.mxu0 0
      %564 = vmatmul.mubr.bf16.gmra.mrb[0].mxu0 %v529
      %v565 = vpop.f32.mrb[0].mxu0
      %v566 = vadd.f32 0.0, %v565
      %v567 = vpop.f32.mrb[0].mxu0
      %v568 = vpop.f32.mrb[0].mxu0
      %v569 = vadd.f32 0.0, %v568
      %v570 = vpop.f32.mrb[0].mxu0
      %571 = vdwg.mxu0
      %v572 = vrot.slane %v566, 7
      %v573 = vrot.slane %v569, 7
      %v574 = vsel %vm349, %v572, %v573
      %v575 = vsel %vm349, %v573, %v572
      %v576 = vsel %vm362, %v575, 0.0
      %v577 = vsel %vm363, %v574, 0.0
      %v578 = vadd.f32 %v576, 0.0
      %v579 = vadd.f32 %v577, 0.0
      %s580 = scalar_lea.vmem %s3, 8
      %v581 = vld [vmem:[%s580] sm:$0xf]
      %v582 = vld [vmem:[%s580 + $0x4] sm:$0xf]
      %v585 = vunpack.c.l.b16 %v581
      %v586 = vunpack.c.l.b16 %v582
      %v587 = vpack.c.b16 %v586, %v585
      %589 = vmatprep.subr.bf16.mxu0 0
      %590 = vmatpush1.bf16.msra.mxu0 %v587
      %591 = vmatprep.subr.bf16.mxu0 0
      %592 = vmatpush1.bf16.msra.mxu0 0
      %593 = vmatprep.subr.bf16.mxu0 0
      %594 = vmatpush1.bf16.msra.mxu0 0
      %595 = vmatprep.subr.bf16.mxu0 0
      %596 = vmatpush1.bf16.msra.mxu0 0
      %597 = vmatprep.subr.bf16.mxu0 0
      %598 = vmatpush1.bf16.msra.mxu0 0
      %599 = vmatprep.subr.bf16.mxu0 0
      %600 = vmatpush1.bf16.msra.mxu0 0
      %601 = vmatprep.subr.bf16.mxu0 0
      %602 = vmatpush1.bf16.msra.mxu0 0
      %603 = vmatprep.subr.bf16.mxu0 0
      %604 = vmatpush1.bf16.msra.mxu0 0
      %605 = vmatprep.subr.bf16.mxu0 0
      %606 = vmatpush1.bf16.msra.mxu0 0
      %607 = vmatprep.subr.bf16.mxu0 0
      %608 = vmatpush1.bf16.msra.mxu0 0
      %609 = vmatprep.subr.bf16.mxu0 0
      %610 = vmatpush1.bf16.msra.mxu0 0
      %611 = vmatprep.subr.bf16.mxu0 0
      %612 = vmatpush1.bf16.msra.mxu0 0
      %613 = vmatprep.subr.bf16.mxu0 0
      %614 = vmatpush1.bf16.msra.mxu0 0
      %615 = vmatprep.subr.bf16.mxu0 0
      %616 = vmatpush1.bf16.msra.mxu0 0
      %617 = vmatprep.subr.bf16.mxu0 0
      %618 = vmatpush1.bf16.msra.mxu0 0
      %619 = vmatprep.subr.bf16.mxu0 0
      %620 = vmatpush1.bf16.msra.mxu0 0
      %621 = vmatprep.mubr.bf16.mxu0 0
      %622 = vmatmul.mubr.bf16.gmra.mrb[0].mxu0 %v529
      %v623 = vpop.f32.mrb[0].mxu0
      %v624 = vadd.f32 0.0, %v623
      %v625 = vpop.f32.mrb[0].mxu0
      %v626 = vpop.f32.mrb[0].mxu0
      %v627 = vadd.f32 0.0, %v626
      %v628 = vpop.f32.mrb[0].mxu0
      %629 = vdwg.mxu0
      %v630 = vadd.f32 %v578, %v624
      %v631 = vadd.f32 %v579, %v627
      %s632 = scalar_lea.vmem %s3, 16
      %v633 = vld [vmem:[%s632] sm:$0xf]
      %v634 = vld [vmem:[%s632 + $0x4] sm:$0xf]
      %v637 = vunpack.c.l.b16 %v633
      %v638 = vunpack.c.l.b16 %v634
      %v639 = vpack.c.b16 %v638, %v637
      %641 = vmatprep.subr.bf16.mxu0 0
      %642 = vmatpush1.bf16.msra.mxu0 %v639
      %643 = vmatprep.subr.bf16.mxu0 0
      %644 = vmatpush1.bf16.msra.mxu0 0
      %645 = vmatprep.subr.bf16.mxu0 0
      %646 = vmatpush1.bf16.msra.mxu0 0
      %647 = vmatprep.subr.bf16.mxu0 0
      %648 = vmatpush1.bf16.msra.mxu0 0
      %649 = vmatprep.subr.bf16.mxu0 0
      %650 = vmatpush1.bf16.msra.mxu0 0
      %651 = vmatprep.subr.bf16.mxu0 0
      %652 = vmatpush1.bf16.msra.mxu0 0
      %653 = vmatprep.subr.bf16.mxu0 0
      %654 = vmatpush1.bf16.msra.mxu0 0
      %655 = vmatprep.subr.bf16.mxu0 0
      %656 = vmatpush1.bf16.msra.mxu0 0
      %657 = vmatprep.subr.bf16.mxu0 0
      %658 = vmatpush1.bf16.msra.mxu0 0
      %659 = vmatprep.subr.bf16.mxu0 0
      %660 = vmatpush1.bf16.msra.mxu0 0
      %661 = vmatprep.subr.bf16.mxu0 0
      %662 = vmatpush1.bf16.msra.mxu0 0
      %663 = vmatprep.subr.bf16.mxu0 0
      %664 = vmatpush1.bf16.msra.mxu0 0
      %665 = vmatprep.subr.bf16.mxu0 0
      %666 = vmatpush1.bf16.msra.mxu0 0
      %667 = vmatprep.subr.bf16.mxu0 0
      %668 = vmatpush1.bf16.msra.mxu0 0
      %669 = vmatprep.subr.bf16.mxu0 0
      %670 = vmatpush1.bf16.msra.mxu0 0
      %671 = vmatprep.subr.bf16.mxu0 0
      %672 = vmatpush1.bf16.msra.mxu0 0
      %673 = vmatprep.mubr.bf16.mxu0 0
      %674 = vmatmul.mubr.bf16.gmra.mrb[0].mxu0 %v529
      %v675 = vpop.f32.mrb[0].mxu0
      %v676 = vadd.f32 0.0, %v675
      %v677 = vpop.f32.mrb[0].mxu0
      %v678 = vpop.f32.mrb[0].mxu0
      %v679 = vadd.f32 0.0, %v678
      %v680 = vpop.f32.mrb[0].mxu0
      %681 = vdwg.mxu0
      %v682 = vrot.slane %v676, 1
      %v683 = vrot.slane %v679, 1
      %v684 = vsel %vm488, %v682, %v683
      %v685 = vsel %vm488, %v683, %v682
      %v686 = vsel %vm501, %v684, 0.0
      %v687 = vsel %vm502, %v685, 0.0
      %v688 = vadd.f32 %v630, %v686
      %v689 = vadd.f32 %v631, %v687
      %v690 = vld [vmem:[%s4] sm:$0x1]
      %v692 = vlaneseq
      %v693 = vshrl.u32 %v692, 7
      %v694 = vsub.s32 0, %v693
      %v695 = vrot.slane %v690, %v694
      %v697 = vadd.f32 %v688, %v695
      %v698 = vadd.f32 %v689, %v695
      %v699 = vmax.f32 %v697, 0.0
      %v700 = vmax.f32 %v698, 0.0
      %v701 = vld [vmem:[%s5] sm:$0xf]
      %v702 = vld [vmem:[%s6] sm:$0x1]
      %v703 = vpack.c.bf16 %v700, %v699
      %v705 = vlaneseq
      %v706 = vshrl.u32 %v705, 7
      %v707 = vsub.s32 0, %v706
      %v708 = vrot.slane %v702, %v707
      %vm710 = vcmask 64512
      %v712 = vsel %vm710, %v703, 0
      %vm714 = vcmask 1043456
      %v716 = vsel %vm714, %v701, 0
      %718 = vmatprep.subr.bf16.mxu0 0
      %719 = vmatpush1.bf16.msra.mxu0 %v716
      %720 = vmatprep.subr.bf16.mxu0 0
      %721 = vmatpush1.bf16.msra.mxu0 0
      %722 = vmatprep.subr.bf16.mxu0 0
      %723 = vmatpush1.bf16.msra.mxu0 0
      %724 = vmatprep.subr.bf16.mxu0 0
      %725 = vmatpush1.bf16.msra.mxu0 0
      %726 = vmatprep.subr.bf16.mxu0 0
      %727 = vmatpush1.bf16.msra.mxu0 0
      %728 = vmatprep.subr.bf16.mxu0 0
      %729 = vmatpush1.bf16.msra.mxu0 0
      %730 = vmatprep.subr.bf16.mxu0 0
      %731 = vmatpush1.bf16.msra.mxu0 0
      %732 = vmatprep.subr.bf16.mxu0 0
      %733 = vmatpush1.bf16.msra.mxu0 0
      %734 = vmatprep.subr.bf16.mxu0 0
      %735 = vmatpush1.bf16.msra.mxu0 0
      %736 = vmatprep.subr.bf16.mxu0 0
      %737 = vmatpush1.bf16.msra.mxu0 0
      %738 = vmatprep.subr.bf16.mxu0 0
      %739 = vmatpush1.bf16.msra.mxu0 0
      %740 = vmatprep.subr.bf16.mxu0 0
      %741 = vmatpush1.bf16.msra.mxu0 0
      %742 = vmatprep.subr.bf16.mxu0 0
      %743 = vmatpush1.bf16.msra.mxu0 0
      %744 = vmatprep.subr.bf16.mxu0 0
      %745 = vmatpush1.bf16.msra.mxu0 0
      %746 = vmatprep.subr.bf16.mxu0 0
      %747 = vmatpush1.bf16.msra.mxu0 0
      %748 = vmatprep.subr.bf16.mxu0 0
      %749 = vmatpush1.bf16.msra.mxu0 0
      %750 = vmatprep.mubr.bf16.mxu0 0
      %751 = vmatmul.mubr.bf16.gmra.mrb[0].mxu0 %v712
      %v752 = vpop.f32.mrb[0].mxu0
      %v753 = vadd.f32 %v708, %v752
      %v754 = vpop.f32.mrb[0].mxu0
      %v755 = vpop.f32.mrb[0].mxu0
      %v756 = vadd.f32 %v708, %v755
      %v757 = vpop.f32.mrb[0].mxu0
      %758 = vdwg.mxu0
      %v759 = vtanh.pop %v753
      %v760 = vtanh.pop %v756
      %761 = vst [vmem:[%s278] sm:$0xff] %v759
      %762 = vst [vmem:[%s278 + $0x8] sm:$0xff] %v760
      %p763 = scmp.lt.s32.totalorder %s18, 1
      %s764 = scalar_select %p763, %s18, 1
      %s765 = smul.addr %s764, 2
      %s766 = smul.addr %s765, 8
      %s767 = scalar_lea.vmem %s7, %s766
      // Predicated region
      $region49: #{_lambda_.5} parent=47 // pred_check
        %p768 = pneg %p188
      $region50: #{_lambda_.5} parent=47 // pred_check_branch
        %770 = sbr.rel (%p768) target = $region52
      $region51: #{_lambda_.5} parent=47 // pred_region
        _
      $region52: #{_lambda_.5} parent=47 // pred_fallthru
        _
    $region48: #{_lambda_.5} parent=5 // pred_fallthru
      _
    %p771 = scmp.le.s32.totalorder 2, %s13
    // Predicated region
    $region53: #{_lambda_.5} parent=5 // pred_check
      %p772 = pneg %p771
    $region54: #{_lambda_.5} parent=5 // pred_check_branch
      %774 = sbr.rel (%p772) target = $region56
    $region55: #{_lambda_.5} parent=5 // pred_region
      %s775 = ssub.s32 %s13, 2
      // Predicated region
      $region57: #{_lambda_.5} parent=55 // pred_check
        %p776 = pneg %p194
      $region58: #{_lambda_.5} parent=55 // pred_check_branch
        %778 = sbr.rel (%p776) target = $region60
      $region59: #{_lambda_.5} parent=55 // pred_region
        %p779 = scmp.lt.s32.totalorder %s19, 1
        %s780 = scalar_select %p779, %s19, 1
        %s781 = smul.addr %s780, 2
        %s782 = smul.addr %s781, 8
        %s783 = scalar_lea.vmem %s7, %s782
      $region60: #{_lambda_.5} parent=55 // pred_fallthru
        _
    $region56: #{_lambda_.5} parent=5 // pred_fallthru
      _
  $region6: #{_lambda_.5} parent=0 // loop_footer
    %s17 = sadd.s32 1, %s13
  $region7: #{_lambda_.5} parent=0 // loop_footer_branch
    %12 = sbr.rel target = $region3
  $region8: #{_lambda_.5} parent=0 // loop_exit
    _

// kernel: _lambda_.4
$region0: #{_lambda_.4}
  #allocation0 [shape = 'u32[]', space=smem, size = 0x4, offset = 0x4, fixed_abs, tag = 'smem constant byte address 0x4 - core index']
  #allocation1 [shape = 'u32[144,128]{1,0:T(1,128)}', space=vmem, size = 0x12000, scoped, tag = 'internal scratch']
  %s0 = inlined_call_operand.vmem [shape: f32[2,16,32], index: 0, kind: input, shape index: {}]
  %s1 = inlined_call_operand.vmem [shape: f32[2,1,32], index: 1, kind: input, shape index: {}]
  %s2 = inlined_call_operand.vmem [shape: f32[2,1,32], index: 2, kind: input, shape index: {}]
  %s3 = inlined_call_operand.vmem [shape: bf16[2,4,32,8], index: 3, kind: input, shape index: {}]
  %s4 = inlined_call_operand.vmem [shape: f32[2,4,1,8], index: 4, kind: input, shape index: {}]
  %s5 = inlined_call_operand.vmem [shape: bf16[2,4,32,8], index: 5, kind: input, shape index: {}]
  %s6 = inlined_call_operand.vmem [shape: f32[2,4,1,8], index: 6, kind: input, shape index: {}]
  %s7 = inlined_call_operand.vmem [shape: bf16[2,4,32,8], index: 7, kind: input, shape index: {}]
  %s8 = inlined_call_operand.vmem [shape: f32[2,4,1,8], index: 8, kind: input, shape index: {}]
  %s9 = inlined_call_operand.vmem [shape: bf16[2,4,8,32], index: 9, kind: input, shape index: {}]
  %s10 = inlined_call_operand.vmem [shape: f32[2,1,32], index: 10, kind: input, shape index: {}]
  %s11 = inlined_call_operand.vmem [shape: f32[2,1,32], index: 11, kind: input, shape index: {}]
  %s12 = inlined_call_operand.vmem [shape: f32[2,1,32], index: 12, kind: input, shape index: {}]
  %s13 = inlined_call_operand.vmem [shape: bf16[2,32,128], index: 13, kind: input, shape index: {}]
  %s14 = inlined_call_operand.vmem [shape: f32[2,1,128], index: 14, kind: input, shape index: {}]
  %s15 = inlined_call_operand.vmem [shape: bf16[2,128,32], index: 15, kind: input, shape index: {}]
  %s16 = inlined_call_operand.vmem [shape: f32[2,1,32], index: 16, kind: input, shape index: {}]
  %s17 = inlined_call_operand.vmem [shape: f32[1,32], index: 17, kind: input, shape index: {}]
  %s18 = inlined_call_operand.vmem [shape: f32[1,32], index: 18, kind: input, shape index: {}]
  %s19 = inlined_call_operand.vmem [shape: f32[2,16,32], index: 19, kind: output, shape index: {}]
  %s20 = sld [smem:[#allocation0]]
  $region121: #{_lambda_.4} parent=0
    _
  %s22 = ssub.s32 1, %s20
  %s23 = scalar_select 0, %s22, %s20
  loop: start=0, step=1, limit=6
  $region2: #{_lambda_.4} parent=0 // loop_pre_header
    _
  $region3: #{_lambda_.4} parent=0 // loop_header
    %s25 = sphi 0, %s29
    %p26 = scmp.ge.s32.totalorder %s25, 6
    %s32 = sphi 0, %s44
    %s33 = sphi 0, %s40
    %s34 = sphi 0, %s32
    %s35 = sphi 0, %s33
    %s36 = sphi 0, %s34
    %s37 = sphi 0, %s35
    %s47 = sphi 0, %s49
    %s50 = sphi 0, %s47
    %s51 = sphi 0, %s50
    %s67 = sphi 0, %s51
    %s73 = sphi 0, %s75
    %s76 = sphi 0, %s73
    %s77 = sphi 0, %s76
    %s93 = sphi 0, %s77
    %s99 = sphi 0, %s101
    %s102 = sphi 0, %s99
    %s103 = sphi 0, %s102
    %s119 = sphi 0, %s103
    %s125 = sphi 0, %s127
    %s128 = sphi 0, %s125
    %s129 = sphi 0, %s128
    %s145 = sphi 0, %s129
    %s151 = sphi 0, %s153
    %s154 = sphi 0, %s151
    %s155 = sphi 0, %s154
    %s171 = sphi 0, %s155
    %s177 = sphi 0, %s179
    %s180 = sphi 0, %s177
    %s181 = sphi 0, %s180
    %s197 = sphi 0, %s181
    %s203 = sphi 0, %s205
    %s206 = sphi 0, %s203
    %s207 = sphi 0, %s206
    %s223 = sphi 0, %s207
    %s229 = sphi 0, %s231
    %s232 = sphi 0, %s229
    %s233 = sphi 0, %s232
    %s249 = sphi 0, %s233
    %s255 = sphi 0, %s257
    %s258 = sphi 0, %s255
    %s259 = sphi 0, %s258
    %s275 = sphi 0, %s259
    %s281 = sphi 0, %s283
    %s284 = sphi 0, %s281
    %s285 = sphi 0, %s284
    %s301 = sphi 0, %s285
    %s307 = sphi 0, %s309
    %s310 = sphi 0, %s307
    %s311 = sphi 0, %s310
    %s327 = sphi 0, %s311
    %s333 = sphi 0, %s335
    %s336 = sphi 0, %s333
    %s337 = sphi 0, %s336
    %s353 = sphi 0, %s337
    %s359 = sphi 0, %s361
    %s362 = sphi 0, %s359
    %s363 = sphi 0, %s362
    %s379 = sphi 0, %s363
    %s385 = sphi 0, %s387
    %s388 = sphi 0, %s385
    %s389 = sphi 0, %s388
    %s405 = sphi 0, %s389
    %s411 = sphi 0, %s413
    %s414 = sphi 0, %s411
    %s415 = sphi 0, %s414
    %s431 = sphi 0, %s415
    %s437 = sphi 0, %s439
    %s440 = sphi 0, %s437
    %s441 = sphi 0, %s440
    %s457 = sphi 0, %s441
    %s463 = sphi 0, %s465
    %s466 = sphi 0, %s463
    %s467 = sphi 0, %s466
    %s483 = sphi 0, %s467
    %s487 = sphi 0, %s487
    %s489 = sphi 0, %s487
    %s490 = sphi 0, %s489
    %s504 = sphi 0, %s490
    %s508 = sphi 0, %s508
    %s510 = sphi 0, %s508
    %s511 = sphi 0, %s510
    %s525 = sphi 0, %s511
    %s531 = sphi 0, %s533
    %s534 = sphi 0, %s531
    %s535 = sphi 0, %s534
    %s551 = sphi 0, %s535
  $region4: #{_lambda_.4} parent=0 // loop_header_branch
    %28 = sbr.rel (%p26) target = $region8
  $region5: #{_lambda_.4} parent=0 // loop_body
    %s30 = ssub.s32 %s25, 1
    %s31 = ssub.s32 %s25, 2
    %s38 = sadd.s32 1, %s33
    %p39 = scmp.ge.s32.totalorder %s38, 2
    %s40 = scalar_select %p39, 0, %s38
    %s41 = sadd.s32 1, %s32
    %s42 = scalar_select %p39, %s41, %s32
    %p43 = scmp.ge.s32.totalorder %s42, 2
    %s44 = scalar_select %p43, 0, %s42
    %s45 = ssub.s32 %s32, %s44
    %p46 = scmp.eq.s32.totalorder %s45, 0
    %s48 = sadd.s32 %s47, 1
    %s49 = scalar_select %p46, %s47, %s48
    %p52 = pneg %p46
    %p53 = scmp.eq.s32.totalorder %s25, 3
    %p54 = por %p52, %p53
    %p55 = scmp.ne.s32.totalorder %s47, %s50
    %p56 = scmp.eq.s32.totalorder %s25, 0
    %p57 = por %p55, %p56
    %p58 = scmp.ne.s32.totalorder %s47, %s50
    %p59 = scmp.eq.s32.totalorder %s30, 3
    %p60 = por %p58, %p59
    %p61 = scmp.ne.s32.totalorder %s50, %s51
    %p62 = scmp.eq.s32.totalorder %s30, 0
    %p63 = por %p61, %p62
    %p64 = scmp.ne.s32.totalorder %s50, %s51
    %p65 = scmp.eq.s32.totalorder %s31, 3
    %p66 = por %p64, %p65
    %p68 = scmp.ne.s32.totalorder %s51, %s67
    %p69 = scmp.eq.s32.totalorder %s31, 0
    %p70 = por %p68, %p69
    %s71 = ssub.s32 %s33, %s40
    %p72 = scmp.eq.s32.totalorder %s71, 0
    %s74 = sadd.s32 %s73, 1
    %s75 = scalar_select %p72, %s73, %s74
    %p78 = pneg %p72
    %p79 = scmp.eq.s32.totalorder %s25, 3
    %p80 = por %p78, %p79
    %p81 = scmp.ne.s32.totalorder %s73, %s76
    %p82 = scmp.eq.s32.totalorder %s25, 0
    %p83 = por %p81, %p82
    %p84 = scmp.ne.s32.totalorder %s73, %s76
    %p85 = scmp.eq.s32.totalorder %s30, 3
    %p86 = por %p84, %p85
    %p87 = scmp.ne.s32.totalorder %s76, %s77
    %p88 = scmp.eq.s32.totalorder %s30, 0
    %p89 = por %p87, %p88
    %p90 = scmp.ne.s32.totalorder %s76, %s77
    %p91 = scmp.eq.s32.totalorder %s31, 3
    %p92 = por %p90, %p91
    %p94 = scmp.ne.s32.totalorder %s77, %s93
    %p95 = scmp.eq.s32.totalorder %s31, 0
    %p96 = por %p94, %p95
    %s97 = ssub.s32 %s33, %s40
    %p98 = scmp.eq.s32.totalorder %s97, 0
    %s100 = sadd.s32 %s99, 1
    %s101 = scalar_select %p98, %s99, %s100
    %p104 = pneg %p98
    %p105 = scmp.eq.s32.totalorder %s25, 3
    %p106 = por %p104, %p105
    %p107 = scmp.ne.s32.totalorder %s99, %s102
    %p108 = scmp.eq.s32.totalorder %s25, 0
    %p109 = por %p107, %p108
    %p110 = scmp.ne.s32.totalorder %s99, %s102
    %p111 = scmp.eq.s32.totalorder %s30, 3
    %p112 = por %p110, %p111
    %p113 = scmp.ne.s32.totalorder %s102, %s103
    %p114 = scmp.eq.s32.totalorder %s30, 0
    %p115 = por %p113, %p114
    %p116 = scmp.ne.s32.totalorder %s102, %s103
    %p117 = scmp.eq.s32.totalorder %s31, 3
    %p118 = por %p116, %p117
    %p120 = scmp.ne.s32.totalorder %s103, %s119
    %p121 = scmp.eq.s32.totalorder %s31, 0
    %p122 = por %p120, %p121
    %s123 = ssub.s32 %s33, %s40
    %p124 = scmp.eq.s32.totalorder %s123, 0
    %s126 = sadd.s32 %s125, 1
    %s127 = scalar_select %p124, %s125, %s126
    %p130 = pneg %p124
    %p131 = scmp.eq.s32.totalorder %s25, 3
    %p132 = por %p130, %p131
    %p133 = scmp.ne.s32.totalorder %s125, %s128
    %p134 = scmp.eq.s32.totalorder %s25, 0
    %p135 = por %p133, %p134
    %p136 = scmp.ne.s32.totalorder %s125, %s128
    %p137 = scmp.eq.s32.totalorder %s30, 3
    %p138 = por %p136, %p137
    %p139 = scmp.ne.s32.totalorder %s128, %s129
    %p140 = scmp.eq.s32.totalorder %s30, 0
    %p141 = por %p139, %p140
    %p142 = scmp.ne.s32.totalorder %s128, %s129
    %p143 = scmp.eq.s32.totalorder %s31, 3
    %p144 = por %p142, %p143
    %p146 = scmp.ne.s32.totalorder %s129, %s145
    %p147 = scmp.eq.s32.totalorder %s31, 0
    %p148 = por %p146, %p147
    %s149 = ssub.s32 %s33, %s40
    %p150 = scmp.eq.s32.totalorder %s149, 0
    %s152 = sadd.s32 %s151, 1
    %s153 = scalar_select %p150, %s151, %s152
    %p156 = pneg %p150
    %p157 = scmp.eq.s32.totalorder %s25, 3
    %p158 = por %p156, %p157
    %p159 = scmp.ne.s32.totalorder %s151, %s154
    %p160 = scmp.eq.s32.totalorder %s25, 0
    %p161 = por %p159, %p160
    %p162 = scmp.ne.s32.totalorder %s151, %s154
    %p163 = scmp.eq.s32.totalorder %s30, 3
    %p164 = por %p162, %p163
    %p165 = scmp.ne.s32.totalorder %s154, %s155
    %p166 = scmp.eq.s32.totalorder %s30, 0
    %p167 = por %p165, %p166
    %p168 = scmp.ne.s32.totalorder %s154, %s155
    %p169 = scmp.eq.s32.totalorder %s31, 3
    %p170 = por %p168, %p169
    %p172 = scmp.ne.s32.totalorder %s155, %s171
    %p173 = scmp.eq.s32.totalorder %s31, 0
    %p174 = por %p172, %p173
    %s175 = ssub.s32 %s33, %s40
    %p176 = scmp.eq.s32.totalorder %s175, 0
    %s178 = sadd.s32 %s177, 1
    %s179 = scalar_select %p176, %s177, %s178
    %p182 = pneg %p176
    %p183 = scmp.eq.s32.totalorder %s25, 3
    %p184 = por %p182, %p183
    %p185 = scmp.ne.s32.totalorder %s177, %s180
    %p186 = scmp.eq.s32.totalorder %s25, 0
    %p187 = por %p185, %p186
    %p188 = scmp.ne.s32.totalorder %s177, %s180
    %p189 = scmp.eq.s32.totalorder %s30, 3
    %p190 = por %p188, %p189
    %p191 = scmp.ne.s32.totalorder %s180, %s181
    %p192 = scmp.eq.s32.totalorder %s30, 0
    %p193 = por %p191, %p192
    %p194 = scmp.ne.s32.totalorder %s180, %s181
    %p195 = scmp.eq.s32.totalorder %s31, 3
    %p196 = por %p194, %p195
    %p198 = scmp.ne.s32.totalorder %s181, %s197
    %p199 = scmp.eq.s32.totalorder %s31, 0
    %p200 = por %p198, %p199
    %s201 = ssub.s32 %s33, %s40
    %p202 = scmp.eq.s32.totalorder %s201, 0
    %s204 = sadd.s32 %s203, 1
    %s205 = scalar_select %p202, %s203, %s204
    %p208 = pneg %p202
    %p209 = scmp.eq.s32.totalorder %s25, 3
    %p210 = por %p208, %p209
    %p211 = scmp.ne.s32.totalorder %s203, %s206
    %p212 = scmp.eq.s32.totalorder %s25, 0
    %p213 = por %p211, %p212
    %p214 = scmp.ne.s32.totalorder %s203, %s206
    %p215 = scmp.eq.s32.totalorder %s30, 3
    %p216 = por %p214, %p215
    %p217 = scmp.ne.s32.totalorder %s206, %s207
    %p218 = scmp.eq.s32.totalorder %s30, 0
    %p219 = por %p217, %p218
    %p220 = scmp.ne.s32.totalorder %s206, %s207
    %p221 = scmp.eq.s32.totalorder %s31, 3
    %p222 = por %p220, %p221
    %p224 = scmp.ne.s32.totalorder %s207, %s223
    %p225 = scmp.eq.s32.totalorder %s31, 0
    %p226 = por %p224, %p225
    %s227 = ssub.s32 %s33, %s40
    %p228 = scmp.eq.s32.totalorder %s227, 0
    %s230 = sadd.s32 %s229, 1
    %s231 = scalar_select %p228, %s229, %s230
    %p234 = pneg %p228
    %p235 = scmp.eq.s32.totalorder %s25, 3
    %p236 = por %p234, %p235
    %p237 = scmp.ne.s32.totalorder %s229, %s232
    %p238 = scmp.eq.s32.totalorder %s25, 0
    %p239 = por %p237, %p238
    %p240 = scmp.ne.s32.totalorder %s229, %s232
    %p241 = scmp.eq.s32.totalorder %s30, 3
    %p242 = por %p240, %p241
    %p243 = scmp.ne.s32.totalorder %s232, %s233
    %p244 = scmp.eq.s32.totalorder %s30, 0
    %p245 = por %p243, %p244
    %p246 = scmp.ne.s32.totalorder %s232, %s233
    %p247 = scmp.eq.s32.totalorder %s31, 3
    %p248 = por %p246, %p247
    %p250 = scmp.ne.s32.totalorder %s233, %s249
    %p251 = scmp.eq.s32.totalorder %s31, 0
    %p252 = por %p250, %p251
    %s253 = ssub.s32 %s33, %s40
    %p254 = scmp.eq.s32.totalorder %s253, 0
    %s256 = sadd.s32 %s255, 1
    %s257 = scalar_select %p254, %s255, %s256
    %p260 = pneg %p254
    %p261 = scmp.eq.s32.totalorder %s25, 3
    %p262 = por %p260, %p261
    %p263 = scmp.ne.s32.totalorder %s255, %s258
    %p264 = scmp.eq.s32.totalorder %s25, 0
    %p265 = por %p263, %p264
    %p266 = scmp.ne.s32.totalorder %s255, %s258
    %p267 = scmp.eq.s32.totalorder %s30, 3
    %p268 = por %p266, %p267
    %p269 = scmp.ne.s32.totalorder %s258, %s259
    %p270 = scmp.eq.s32.totalorder %s30, 0
    %p271 = por %p269, %p270
    %p272 = scmp.ne.s32.totalorder %s258, %s259
    %p273 = scmp.eq.s32.totalorder %s31, 3
    %p274 = por %p272, %p273
    %p276 = scmp.ne.s32.totalorder %s259, %s275
    %p277 = scmp.eq.s32.totalorder %s31, 0
    %p278 = por %p276, %p277
    %s279 = ssub.s32 %s33, %s40
    %p280 = scmp.eq.s32.totalorder %s279, 0
    %s282 = sadd.s32 %s281, 1
    %s283 = scalar_select %p280, %s281, %s282
    %p286 = pneg %p280
    %p287 = scmp.eq.s32.totalorder %s25, 3
    %p288 = por %p286, %p287
    %p289 = scmp.ne.s32.totalorder %s281, %s284
    %p290 = scmp.eq.s32.totalorder %s25, 0
    %p291 = por %p289, %p290
    %p292 = scmp.ne.s32.totalorder %s281, %s284
    %p293 = scmp.eq.s32.totalorder %s30, 3
    %p294 = por %p292, %p293
    %p295 = scmp.ne.s32.totalorder %s284, %s285
    %p296 = scmp.eq.s32.totalorder %s30, 0
    %p297 = por %p295, %p296
    %p298 = scmp.ne.s32.totalorder %s284, %s285
    %p299 = scmp.eq.s32.totalorder %s31, 3
    %p300 = por %p298, %p299
    %p302 = scmp.ne.s32.totalorder %s285, %s301
    %p303 = scmp.eq.s32.totalorder %s31, 0
    %p304 = por %p302, %p303
    %s305 = ssub.s32 %s33, %s40
    %p306 = scmp.eq.s32.totalorder %s305, 0
    %s308 = sadd.s32 %s307, 1
    %s309 = scalar_select %p306, %s307, %s308
    %p312 = pneg %p306
    %p313 = scmp.eq.s32.totalorder %s25, 3
    %p314 = por %p312, %p313
    %p315 = scmp.ne.s32.totalorder %s307, %s310
    %p316 = scmp.eq.s32.totalorder %s25, 0
    %p317 = por %p315, %p316
    %p318 = scmp.ne.s32.totalorder %s307, %s310
    %p319 = scmp.eq.s32.totalorder %s30, 3
    %p320 = por %p318, %p319
    %p321 = scmp.ne.s32.totalorder %s310, %s311
    %p322 = scmp.eq.s32.totalorder %s30, 0
    %p323 = por %p321, %p322
    %p324 = scmp.ne.s32.totalorder %s310, %s311
    %p325 = scmp.eq.s32.totalorder %s31, 3
    %p326 = por %p324, %p325
    %p328 = scmp.ne.s32.totalorder %s311, %s327
    %p329 = scmp.eq.s32.totalorder %s31, 0
    %p330 = por %p328, %p329
    %s331 = ssub.s32 %s33, %s40
    %p332 = scmp.eq.s32.totalorder %s331, 0
    %s334 = sadd.s32 %s333, 1
    %s335 = scalar_select %p332, %s333, %s334
    %p338 = pneg %p332
    %p339 = scmp.eq.s32.totalorder %s25, 3
    %p340 = por %p338, %p339
    %p341 = scmp.ne.s32.totalorder %s333, %s336
    %p342 = scmp.eq.s32.totalorder %s25, 0
    %p343 = por %p341, %p342
    %p344 = scmp.ne.s32.totalorder %s333, %s336
    %p345 = scmp.eq.s32.totalorder %s30, 3
    %p346 = por %p344, %p345
    %p347 = scmp.ne.s32.totalorder %s336, %s337
    %p348 = scmp.eq.s32.totalorder %s30, 0
    %p349 = por %p347, %p348
    %p350 = scmp.ne.s32.totalorder %s336, %s337
    %p351 = scmp.eq.s32.totalorder %s31, 3
    %p352 = por %p350, %p351
    %p354 = scmp.ne.s32.totalorder %s337, %s353
    %p355 = scmp.eq.s32.totalorder %s31, 0
    %p356 = por %p354, %p355
    %s357 = ssub.s32 %s33, %s40
    %p358 = scmp.eq.s32.totalorder %s357, 0
    %s360 = sadd.s32 %s359, 1
    %s361 = scalar_select %p358, %s359, %s360
    %p364 = pneg %p358
    %p365 = scmp.eq.s32.totalorder %s25, 3
    %p366 = por %p364, %p365
    %p367 = scmp.ne.s32.totalorder %s359, %s362
    %p368 = scmp.eq.s32.totalorder %s25, 0
    %p369 = por %p367, %p368
    %p370 = scmp.ne.s32.totalorder %s359, %s362
    %p371 = scmp.eq.s32.totalorder %s30, 3
    %p372 = por %p370, %p371
    %p373 = scmp.ne.s32.totalorder %s362, %s363
    %p374 = scmp.eq.s32.totalorder %s30, 0
    %p375 = por %p373, %p374
    %p376 = scmp.ne.s32.totalorder %s362, %s363
    %p377 = scmp.eq.s32.totalorder %s31, 3
    %p378 = por %p376, %p377
    %p380 = scmp.ne.s32.totalorder %s363, %s379
    %p381 = scmp.eq.s32.totalorder %s31, 0
    %p382 = por %p380, %p381
    %s383 = ssub.s32 %s33, %s40
    %p384 = scmp.eq.s32.totalorder %s383, 0
    %s386 = sadd.s32 %s385, 1
    %s387 = scalar_select %p384, %s385, %s386
    %p390 = pneg %p384
    %p391 = scmp.eq.s32.totalorder %s25, 3
    %p392 = por %p390, %p391
    %p393 = scmp.ne.s32.totalorder %s385, %s388
    %p394 = scmp.eq.s32.totalorder %s25, 0
    %p395 = por %p393, %p394
    %p396 = scmp.ne.s32.totalorder %s385, %s388
    %p397 = scmp.eq.s32.totalorder %s30, 3
    %p398 = por %p396, %p397
    %p399 = scmp.ne.s32.totalorder %s388, %s389
    %p400 = scmp.eq.s32.totalorder %s30, 0
    %p401 = por %p399, %p400
    %p402 = scmp.ne.s32.totalorder %s388, %s389
    %p403 = scmp.eq.s32.totalorder %s31, 3
    %p404 = por %p402, %p403
    %p406 = scmp.ne.s32.totalorder %s389, %s405
    %p407 = scmp.eq.s32.totalorder %s31, 0
    %p408 = por %p406, %p407
    %s409 = ssub.s32 %s33, %s40
    %p410 = scmp.eq.s32.totalorder %s409, 0
    %s412 = sadd.s32 %s411, 1
    %s413 = scalar_select %p410, %s411, %s412
    %p416 = pneg %p410
    %p417 = scmp.eq.s32.totalorder %s25, 3
    %p418 = por %p416, %p417
    %p419 = scmp.ne.s32.totalorder %s411, %s414
    %p420 = scmp.eq.s32.totalorder %s25, 0
    %p421 = por %p419, %p420
    %p422 = scmp.ne.s32.totalorder %s411, %s414
    %p423 = scmp.eq.s32.totalorder %s30, 3
    %p424 = por %p422, %p423
    %p425 = scmp.ne.s32.totalorder %s414, %s415
    %p426 = scmp.eq.s32.totalorder %s30, 0
    %p427 = por %p425, %p426
    %p428 = scmp.ne.s32.totalorder %s414, %s415
    %p429 = scmp.eq.s32.totalorder %s31, 3
    %p430 = por %p428, %p429
    %p432 = scmp.ne.s32.totalorder %s415, %s431
    %p433 = scmp.eq.s32.totalorder %s31, 0
    %p434 = por %p432, %p433
    %s435 = ssub.s32 %s33, %s40
    %p436 = scmp.eq.s32.totalorder %s435, 0
    %s438 = sadd.s32 %s437, 1
    %s439 = scalar_select %p436, %s437, %s438
    %p442 = pneg %p436
    %p443 = scmp.eq.s32.totalorder %s25, 3
    %p444 = por %p442, %p443
    %p445 = scmp.ne.s32.totalorder %s437, %s440
    %p446 = scmp.eq.s32.totalorder %s25, 0
    %p447 = por %p445, %p446
    %p448 = scmp.ne.s32.totalorder %s437, %s440
    %p449 = scmp.eq.s32.totalorder %s30, 3
    %p450 = por %p448, %p449
    %p451 = scmp.ne.s32.totalorder %s440, %s441
    %p452 = scmp.eq.s32.totalorder %s30, 0
    %p453 = por %p451, %p452
    %p454 = scmp.ne.s32.totalorder %s440, %s441
    %p455 = scmp.eq.s32.totalorder %s31, 3
    %p456 = por %p454, %p455
    %p458 = scmp.ne.s32.totalorder %s441, %s457
    %p459 = scmp.eq.s32.totalorder %s31, 0
    %p460 = por %p458, %p459
    %s461 = ssub.s32 %s33, %s40
    %p462 = scmp.eq.s32.totalorder %s461, 0
    %s464 = sadd.s32 %s463, 1
    %s465 = scalar_select %p462, %s463, %s464
    %p468 = pneg %p462
    %p469 = scmp.eq.s32.totalorder %s25, 3
    %p470 = por %p468, %p469
    %p471 = scmp.ne.s32.totalorder %s463, %s466
    %p472 = scmp.eq.s32.totalorder %s25, 0
    %p473 = por %p471, %p472
    %p474 = scmp.ne.s32.totalorder %s463, %s466
    %p475 = scmp.eq.s32.totalorder %s30, 3
    %p476 = por %p474, %p475
    %p477 = scmp.ne.s32.totalorder %s466, %s467
    %p478 = scmp.eq.s32.totalorder %s30, 0
    %p479 = por %p477, %p478
    %p480 = scmp.ne.s32.totalorder %s466, %s467
    %p481 = scmp.eq.s32.totalorder %s31, 3
    %p482 = por %p480, %p481
    %p484 = scmp.ne.s32.totalorder %s467, %s483
    %p485 = scmp.eq.s32.totalorder %s31, 0
    %p486 = por %p484, %p485
    %s488 = sadd.s32 %s487, 1
    %p491 = scmp.eq.s32.totalorder %s25, 3
    %p492 = scmp.ne.s32.totalorder %s487, %s489
    %p493 = scmp.eq.s32.totalorder %s25, 0
    %p494 = por %p492, %p493
    %p495 = scmp.ne.s32.totalorder %s487, %s489
    %p496 = scmp.eq.s32.totalorder %s30, 3
    %p497 = por %p495, %p496
    %p498 = scmp.ne.s32.totalorder %s489, %s490
    %p499 = scmp.eq.s32.totalorder %s30, 0
    %p500 = por %p498, %p499
    %p501 = scmp.ne.s32.totalorder %s489, %s490
    %p502 = scmp.eq.s32.totalorder %s31, 3
    %p503 = por %p501, %p502
    %p505 = scmp.ne.s32.totalorder %s490, %s504
    %p506 = scmp.eq.s32.totalorder %s31, 0
    %p507 = por %p505, %p506
    %s509 = sadd.s32 %s508, 1
    %p512 = scmp.eq.s32.totalorder %s25, 3
    %p513 = scmp.ne.s32.totalorder %s508, %s510
    %p514 = scmp.eq.s32.totalorder %s25, 0
    %p515 = por %p513, %p514
    %p516 = scmp.ne.s32.totalorder %s508, %s510
    %p517 = scmp.eq.s32.totalorder %s30, 3
    %p518 = por %p516, %p517
    %p519 = scmp.ne.s32.totalorder %s510, %s511
    %p520 = scmp.eq.s32.totalorder %s30, 0
    %p521 = por %p519, %p520
    %p522 = scmp.ne.s32.totalorder %s510, %s511
    %p523 = scmp.eq.s32.totalorder %s31, 3
    %p524 = por %p522, %p523
    %p526 = scmp.ne.s32.totalorder %s511, %s525
    %p527 = scmp.eq.s32.totalorder %s31, 0
    %p528 = por %p526, %p527
    %s529 = ssub.s32 %s32, %s44
    %p530 = scmp.eq.s32.totalorder %s529, 0
    %s532 = sadd.s32 %s531, 1
    %s533 = scalar_select %p530, %s531, %s532
    %p536 = pneg %p530
    %p537 = scmp.eq.s32.totalorder %s25, 3
    %p538 = por %p536, %p537
    %p539 = scmp.ne.s32.totalorder %s531, %s534
    %p540 = scmp.eq.s32.totalorder %s25, 0
    %p541 = por %p539, %p540
    %p542 = scmp.ne.s32.totalorder %s531, %s534
    %p543 = scmp.eq.s32.totalorder %s30, 3
    %p544 = por %p542, %p543
    %p545 = scmp.ne.s32.totalorder %s534, %s535
    %p546 = scmp.eq.s32.totalorder %s30, 0
    %p547 = por %p545, %p546
    %p548 = scmp.ne.s32.totalorder %s534, %s535
    %p549 = scmp.eq.s32.totalorder %s31, 3
    %p550 = por %p548, %p549
    %p552 = scmp.ne.s32.totalorder %s535, %s551
    %p553 = scmp.eq.s32.totalorder %s31, 0
    %p554 = por %p552, %p553
    %p555 = scmp.le.s32.totalorder 1, %s25
    %p556 = scmp.lt.s32.totalorder %s25, 5
    %p557 = pnand %p555, %p556
    %p558 = pneg %p557
    // Predicated region
    $region9: #{_lambda_.4} parent=5 // pred_check
      _
    $region10: #{_lambda_.4} parent=5 // pred_check_branch
      %560 = sbr.rel (%p557) target = $region12
    $region11: #{_lambda_.4} parent=5 // pred_region
      %s561 = ssub.s32 %s25, 1
      // Predicated region
      $region13: #{_lambda_.4} parent=11 // pred_check
        %p562 = pneg %p500
      $region14: #{_lambda_.4} parent=11 // pred_check_branch
        %564 = sbr.rel (%p562) target = $region16
      $region15: #{_lambda_.4} parent=11 // pred_region
        _
      $region16: #{_lambda_.4} parent=11 // pred_fallthru
        _
      // Predicated region
      $region17: #{_lambda_.4} parent=11 // pred_check
        %p565 = pneg %p521
      $region18: #{_lambda_.4} parent=11 // pred_check_branch
        %567 = sbr.rel (%p565) target = $region20
      $region19: #{_lambda_.4} parent=11 // pred_region
        _
      $region20: #{_lambda_.4} parent=11 // pred_fallthru
        _
    $region12: #{_lambda_.4} parent=5 // pred_fallthru
      _
    %p568 = scmp.lt.s32.totalorder %s25, 4
    // Predicated region
    $region21: #{_lambda_.4} parent=5 // pred_check
      %p569 = pneg %p568
    $region22: #{_lambda_.4} parent=5 // pred_check_branch
      %571 = sbr.rel (%p569) target = $region24
    $region23: #{_lambda_.4} parent=5 // pred_region
      // Predicated region
      $region25: #{_lambda_.4} parent=23 // pred_check
        %p572 = pneg %p57
      $region26: #{_lambda_.4} parent=23 // pred_check_branch
        %574 = sbr.rel (%p572) target = $region28
      $region27: #{_lambda_.4} parent=23 // pred_region
        %p575 = scmp.lt.s32.totalorder %s32, 1
        %s576 = scalar_select %p575, %s32, 1
        %s577 = smul.addr %s576, 2
        %s578 = smul.addr %s577, 8
        %s579 = scalar_lea.vmem %s0, %s578
      $region28: #{_lambda_.4} parent=23 // pred_fallthru
        _
      // Predicated region
      $region29: #{_lambda_.4} parent=23 // pred_check
        %p580 = pneg %p83
      $region30: #{_lambda_.4} parent=23 // pred_check_branch
        %582 = sbr.rel (%p580) target = $region32
      $region31: #{_lambda_.4} parent=23 // pred_region
        %p583 = scmp.lt.s32.totalorder %s33, 1
        %s584 = scalar_select %p583, %s33, 1
        %s585 = scalar_lea.vmem %s1, %s584
      $region32: #{_lambda_.4} parent=23 // pred_fallthru
        _
      // Predicated region
      $region33: #{_lambda_.4} parent=23 // pred_check
        %p586 = pneg %p109
      $region34: #{_lambda_.4} parent=23 // pred_check_branch
        %588 = sbr.rel (%p586) target = $region36
      $region35: #{_lambda_.4} parent=23 // pred_region
        %p589 = scmp.lt.s32.totalorder %s33, 1
        %s590 = scalar_select %p589, %s33, 1
        %s591 = scalar_lea.vmem %s2, %s590
      $region36: #{_lambda_.4} parent=23 // pred_fallthru
        _
      // Predicated region
      $region37: #{_lambda_.4} parent=23 // pred_check
        %p592 = pneg %p135
      $region38: #{_lambda_.4} parent=23 // pred_check_branch
        %594 = sbr.rel (%p592) target = $region40
      $region39: #{_lambda_.4} parent=23 // pred_region
        %p595 = scmp.lt.s32.totalorder %s33, 1
        %s596 = scalar_select %p595, %s33, 1
        %s597 = smul.addr %s596, 16
        %s598 = smul.addr %s597, 4
        %s599 = scalar_lea.vmem %s3, %s598
      $region40: #{_lambda_.4} parent=23 // pred_fallthru
        _
      // Predicated region
      $region41: #{_lambda_.4} parent=23 // pred_check
        %p600 = pneg %p161
      $region42: #{_lambda_.4} parent=23 // pred_check_branch
        %602 = sbr.rel (%p600) target = $region44
      $region43: #{_lambda_.4} parent=23 // pred_region
        %p603 = scmp.lt.s32.totalorder %s33, 1
        %s604 = scalar_select %p603, %s33, 1
        %s605 = smul.addr %s604, 4
        %s606 = scalar_lea.vmem %s4, %s605
      $region44: #{_lambda_.4} parent=23 // pred_fallthru
        _
      // Predicated region
      $region45: #{_lambda_.4} parent=23 // pred_check
        %p607 = pneg %p187
      $region46: #{_lambda_.4} parent=23 // pred_check_branch
        %609 = sbr.rel (%p607) target = $region48
      $region47: #{_lambda_.4} parent=23 // pred_region
        %p610 = scmp.lt.s32.totalorder %s33, 1
        %s611 = scalar_select %p610, %s33, 1
        %s612 = smul.addr %s611, 16
        %s613 = smul.addr %s612, 4
        %s614 = scalar_lea.vmem %s5, %s613
      $region48: #{_lambda_.4} parent=23 // pred_fallthru
        _
      // Predicated region
      $region49: #{_lambda_.4} parent=23 // pred_check
        %p615 = pneg %p213
      $region50: #{_lambda_.4} parent=23 // pred_check_branch
        %617 = sbr.rel (%p615) target = $region52
      $region51: #{_lambda_.4} parent=23 // pred_region
        %p618 = scmp.lt.s32.totalorder %s33, 1
        %s619 = scalar_select %p618, %s33, 1
        %s620 = smul.addr %s619, 4
        %s621 = scalar_lea.vmem %s6, %s620
      $region52: #{_lambda_.4} parent=23 // pred_fallthru
        _
      // Predicated region
      $region53: #{_lambda_.4} parent=23 // pred_check
        %p622 = pneg %p239
      $region54: #{_lambda_.4} parent=23 // pred_check_branch
        %624 = sbr.rel (%p622) target = $region56
      $region55: #{_lambda_.4} parent=23 // pred_region
        %p625 = scmp.lt.s32.totalorder %s33, 1
        %s626 = scalar_select %p625, %s33, 1
        %s627 = smul.addr %s626, 16
        %s628 = smul.addr %s627, 4
        %s629 = scalar_lea.vmem %s7, %s628
      $region56: #{_lambda_.4} parent=23 // pred_fallthru
        _
      // Predicated region
      $region57: #{_lambda_.4} parent=23 // pred_check
        %p630 = pneg %p265
      $region58: #{_lambda_.4} parent=23 // pred_check_branch
        %632 = sbr.rel (%p630) target = $region60
      $region59: #{_lambda_.4} parent=23 // pred_region
        %p633 = scmp.lt.s32.totalorder %s33, 1
        %s634 = scalar_select %p633, %s33, 1
        %s635 = smul.addr %s634, 4
        %s636 = scalar_lea.vmem %s8, %s635
      $region60: #{_lambda_.4} parent=23 // pred_fallthru
        _
      // Predicated region
      $region61: #{_lambda_.4} parent=23 // pred_check
        %p637 = pneg %p291
      $region62: #{_lambda_.4} parent=23 // pred_check_branch
        %639 = sbr.rel (%p637) target = $region64
      $region63: #{_lambda_.4} parent=23 // pred_region
        %p640 = scmp.lt.s32.totalorder %s33, 1
        %s641 = scalar_select %p640, %s33, 1
        %s642 = smul.addr %s641, 4
        %s643 = smul.addr %s642, 4
        %s644 = scalar_lea.vmem %s9, %s643
      $region64: #{_lambda_.4} parent=23 // pred_fallthru
        _
      // Predicated region
      $region65: #{_lambda_.4} parent=23 // pred_check
        %p645 = pneg %p317
      $region66: #{_lambda_.4} parent=23 // pred_check_branch
        %647 = sbr.rel (%p645) target = $region68
      $region67: #{_lambda_.4} parent=23 // pred_region
        %p648 = scmp.lt.s32.totalorder %s33, 1
        %s649 = scalar_select %p648, %s33, 1
        %s650 = scalar_lea.vmem %s10, %s649
      $region68: #{_lambda_.4} parent=23 // pred_fallthru
        _
      // Predicated region
      $region69: #{_lambda_.4} parent=23 // pred_check
        %p651 = pneg %p343
      $region70: #{_lambda_.4} parent=23 // pred_check_branch
        %653 = sbr.rel (%p651) target = $region72
      $region71: #{_lambda_.4} parent=23 // pred_region
        %p654 = scmp.lt.s32.totalorder %s33, 1
        %s655 = scalar_select %p654, %s33, 1
        %s656 = scalar_lea.vmem %s11, %s655
      $region72: #{_lambda_.4} parent=23 // pred_fallthru
        _
      // Predicated region
      $region73: #{_lambda_.4} parent=23 // pred_check
        %p657 = pneg %p369
      $region74: #{_lambda_.4} parent=23 // pred_check_branch
        %659 = sbr.rel (%p657) target = $region76
      $region75: #{_lambda_.4} parent=23 // pred_region
        %p660 = scmp.lt.s32.totalorder %s33, 1
        %s661 = scalar_select %p660, %s33, 1
        %s662 = scalar_lea.vmem %s12, %s661
      $region76: #{_lambda_.4} parent=23 // pred_fallthru
        _
      // Predicated region
      $region77: #{_lambda_.4} parent=23 // pred_check
        %p663 = pneg %p395
      $region78: #{_lambda_.4} parent=23 // pred_check_branch
        %665 = sbr.rel (%p663) target = $region80
      $region79: #{_lambda_.4} parent=23 // pred_region
        %p666 = scmp.lt.s32.totalorder %s33, 1
        %s667 = scalar_select %p666, %s33, 1
        %s668 = smul.addr %s667, 4
        %s669 = smul.addr %s668, 4
        %s670 = scalar_lea.vmem %s13, %s669
      $region80: #{_lambda_.4} parent=23 // pred_fallthru
        _
      // Predicated region
      $region81: #{_lambda_.4} parent=23 // pred_check
        %p671 = pneg %p421
      $region82: #{_lambda_.4} parent=23 // pred_check_branch
        %673 = sbr.rel (%p671) target = $region84
      $region83: #{_lambda_.4} parent=23 // pred_region
        %p674 = scmp.lt.s32.totalorder %s33, 1
        %s675 = scalar_select %p674, %s33, 1
        %s676 = scalar_lea.vmem %s14, %s675
      $region84: #{_lambda_.4} parent=23 // pred_fallthru
        _
      // Predicated region
      $region85: #{_lambda_.4} parent=23 // pred_check
        %p677 = pneg %p447
      $region86: #{_lambda_.4} parent=23 // pred_check_branch
        %679 = sbr.rel (%p677) target = $region88
      $region87: #{_lambda_.4} parent=23 // pred_region
        %p680 = scmp.lt.s32.totalorder %s33, 1
        %s681 = scalar_select %p680, %s33, 1
        %s682 = smul.addr %s681, 16
        %s683 = smul.addr %s682, 4
        %s684 = scalar_lea.vmem %s15, %s683
      $region88: #{_lambda_.4} parent=23 // pred_fallthru
        _
      // Predicated region
      $region89: #{_lambda_.4} parent=23 // pred_check
        %p685 = pneg %p473
      $region90: #{_lambda_.4} parent=23 // pred_check_branch
        %687 = sbr.rel (%p685) target = $region92
      $region91: #{_lambda_.4} parent=23 // pred_region
        %p688 = scmp.lt.s32.totalorder %s33, 1
        %s689 = scalar_select %p688, %s33, 1
        %s690 = scalar_lea.vmem %s16, %s689
      $region92: #{_lambda_.4} parent=23 // pred_fallthru
        _
    $region24: #{_lambda_.4} parent=5 // pred_fallthru
      _
    %p691 = scmp.le.s32.totalorder 1, %s25
    %p692 = scmp.lt.s32.totalorder %s25, 5
    %p693 = pnand %p691, %p692
    %p694 = pneg %p693
    // Predicated region
    $region93: #{_lambda_.4} parent=5 // pred_check
      _
    $region94: #{_lambda_.4} parent=5 // pred_check_branch
      %696 = sbr.rel (%p693) target = $region96
    $region95: #{_lambda_.4} parent=5 // pred_region
      %s697 = ssub.s32 %s25, 1
      %p698 = scmp.lt.s32.totalorder %s34, 1
      %s699 = scalar_select %p698, %s34, 1
      %s700 = smul.addr %s699, 2
      %s701 = smul.addr %s700, 8
      %s702 = scalar_lea.vmem %s0, %s701
      %p703 = pneg %p63
      %p704 = pneg %p60
      %p705 = scmp.lt.s32.totalorder %s35, 1
      %s706 = scalar_select %p705, %s35, 1
      %s707 = scalar_lea.vmem %s1, %s706
      %p708 = pneg %p89
      %p709 = pneg %p86
      %p710 = scmp.lt.s32.totalorder %s35, 1
      %s711 = scalar_select %p710, %s35, 1
      %s712 = scalar_lea.vmem %s2, %s711
      %p713 = pneg %p115
      %p714 = pneg %p112
      %p715 = scmp.lt.s32.totalorder %s35, 1
      %s716 = scalar_select %p715, %s35, 1
      %s717 = smul.addr %s716, 16
      %s718 = smul.addr %s717, 4
      %s719 = scalar_lea.vmem %s3, %s718
      %p720 = pneg %p141
      %p721 = pneg %p138
      %p722 = scmp.lt.s32.totalorder %s35, 1
      %s723 = scalar_select %p722, %s35, 1
      %s724 = smul.addr %s723, 4
      %s725 = scalar_lea.vmem %s4, %s724
      %p726 = pneg %p167
      %p727 = pneg %p164
      %p728 = scmp.lt.s32.totalorder %s35, 1
      %s729 = scalar_select %p728, %s35, 1
      %s730 = smul.addr %s729, 16
      %s731 = smul.addr %s730, 4
      %s732 = scalar_lea.vmem %s5, %s731
      %p733 = pneg %p193
      %p734 = pneg %p190
      %p735 = scmp.lt.s32.totalorder %s35, 1
      %s736 = scalar_select %p735, %s35, 1
      %s737 = smul.addr %s736, 4
      %s738 = scalar_lea.vmem %s6, %s737
      %p739 = pneg %p219
      %p740 = pneg %p216
      %p741 = scmp.lt.s32.totalorder %s35, 1
      %s742 = scalar_select %p741, %s35, 1
      %s743 = smul.addr %s742, 16
      %s744 = smul.addr %s743, 4
      %s745 = scalar_lea.vmem %s7, %s744
      %p746 = pneg %p245
      %p747 = pneg %p242
      %p748 = scmp.lt.s32.totalorder %s35, 1
      %s749 = scalar_select %p748, %s35, 1
      %s750 = smul.addr %s749, 4
      %s751 = scalar_lea.vmem %s8, %s750
      %p752 = pneg %p271
      %p753 = pneg %p268
      %p754 = scmp.lt.s32.totalorder %s35, 1
      %s755 = scalar_select %p754, %s35, 1
      %s756 = smul.addr %s755, 4
      %s757 = smul.addr %s756, 4
      %s758 = scalar_lea.vmem %s9, %s757
      %p759 = pneg %p297
      %p760 = pneg %p294
      %p761 = scmp.lt.s32.totalorder %s35, 1
      %s762 = scalar_select %p761, %s35, 1
      %s763 = scalar_lea.vmem %s10, %s762
      %p764 = pneg %p323
      %p765 = pneg %p320
      %p766 = scmp.lt.s32.totalorder %s35, 1
      %s767 = scalar_select %p766, %s35, 1
      %s768 = scalar_lea.vmem %s11, %s767
      %p769 = pneg %p349
      %p770 = pneg %p346
      %p771 = scmp.lt.s32.totalorder %s35, 1
      %s772 = scalar_select %p771, %s35, 1
      %s773 = scalar_lea.vmem %s12, %s772
      %p774 = pneg %p375
      %p775 = pneg %p372
      %p776 = scmp.lt.s32.totalorder %s35, 1
      %s777 = scalar_select %p776, %s35, 1
      %s778 = smul.addr %s777, 4
      %s779 = smul.addr %s778, 4
      %s780 = scalar_lea.vmem %s13, %s779
      %p781 = pneg %p401
      %p782 = pneg %p398
      %p783 = scmp.lt.s32.totalorder %s35, 1
      %s784 = scalar_select %p783, %s35, 1
      %s785 = scalar_lea.vmem %s14, %s784
      %p786 = pneg %p427
      %p787 = pneg %p424
      %p788 = scmp.lt.s32.totalorder %s35, 1
      %s789 = scalar_select %p788, %s35, 1
      %s790 = smul.addr %s789, 16
      %s791 = smul.addr %s790, 4
      %s792 = scalar_lea.vmem %s15, %s791
      %p793 = pneg %p453
      %p794 = pneg %p450
      %p795 = scmp.lt.s32.totalorder %s35, 1
      %s796 = scalar_select %p795, %s35, 1
      %s797 = scalar_lea.vmem %s16, %s796
      %p798 = pneg %p479
      %p799 = pneg %p476
      %p800 = pneg %p500
      %p801 = pneg %p497
      %p802 = pneg %p521
      %p803 = pneg %p518
      %p804 = pneg %p547
      %p805 = pneg %p544
      %p806 = scmp.lt.s32.totalorder %s34, 1
      %s807 = scalar_select %p806, %s34, 1
      %s808 = smul.addr %s807, 2
      %s809 = smul.addr %s808, 8
      %s810 = scalar_lea.vmem %s19, %s809
      %p811 = scmp.lt.s32.totalorder %s34, 1
      %s812 = scalar_select %p811, %s34, 1
      %s813 = smul.addr %s812, 2
      %s814 = smul.addr %s813, 8
      %s815 = scalar_lea.vmem %s0, %s814
      %p816 = scmp.lt.s32.totalorder %s35, 1
      %s817 = scalar_select %p816, %s35, 1
      %s818 = scalar_lea.vmem %s1, %s817
      %p819 = scmp.lt.s32.totalorder %s35, 1
      %s820 = scalar_select %p819, %s35, 1
      %s821 = scalar_lea.vmem %s2, %s820
      %p822 = scmp.lt.s32.totalorder %s35, 1
      %s823 = scalar_select %p822, %s35, 1
      %s824 = smul.addr %s823, 16
      %s825 = smul.addr %s824, 4
      %s826 = scalar_lea.vmem %s3, %s825
      %p827 = scmp.lt.s32.totalorder %s35, 1
      %s828 = scalar_select %p827, %s35, 1
      %s829 = smul.addr %s828, 4
      %s830 = scalar_lea.vmem %s4, %s829
      %p831 = scmp.lt.s32.totalorder %s35, 1
      %s832 = scalar_select %p831, %s35, 1
      %s833 = smul.addr %s832, 16
      %s834 = smul.addr %s833, 4
      %s835 = scalar_lea.vmem %s5, %s834
      %p836 = scmp.lt.s32.totalorder %s35, 1
      %s837 = scalar_select %p836, %s35, 1
      %s838 = smul.addr %s837, 4
      %s839 = scalar_lea.vmem %s6, %s838
      %p840 = scmp.lt.s32.totalorder %s35, 1
      %s841 = scalar_select %p840, %s35, 1
      %s842 = smul.addr %s841, 16
      %s843 = smul.addr %s842, 4
      %s844 = scalar_lea.vmem %s7, %s843
      %p845 = scmp.lt.s32.totalorder %s35, 1
      %s846 = scalar_select %p845, %s35, 1
      %s847 = smul.addr %s846, 4
      %s848 = scalar_lea.vmem %s8, %s847
      %p849 = scmp.lt.s32.totalorder %s35, 1
      %s850 = scalar_select %p849, %s35, 1
      %s851 = smul.addr %s850, 4
      %s852 = smul.addr %s851, 4
      %s853 = scalar_lea.vmem %s9, %s852
      %p854 = scmp.lt.s32.totalorder %s35, 1
      %s855 = scalar_select %p854, %s35, 1
      %s856 = scalar_lea.vmem %s10, %s855
      %p857 = scmp.lt.s32.totalorder %s35, 1
      %s858 = scalar_select %p857, %s35, 1
      %s859 = scalar_lea.vmem %s11, %s858
      %p860 = scmp.lt.s32.totalorder %s35, 1
      %s861 = scalar_select %p860, %s35, 1
      %s862 = scalar_lea.vmem %s12, %s861
      %p863 = scmp.lt.s32.totalorder %s35, 1
      %s864 = scalar_select %p863, %s35, 1
      %s865 = smul.addr %s864, 4
      %s866 = smul.addr %s865, 4
      %s867 = scalar_lea.vmem %s13, %s866
      %p868 = scmp.lt.s32.totalorder %s35, 1
      %s869 = scalar_select %p868, %s35, 1
      %s870 = scalar_lea.vmem %s14, %s869
      %p871 = scmp.lt.s32.totalorder %s35, 1
      %s872 = scalar_select %p871, %s35, 1
      %s873 = smul.addr %s872, 16
      %s874 = smul.addr %s873, 4
      %s875 = scalar_lea.vmem %s15, %s874
      %p876 = scmp.lt.s32.totalorder %s35, 1
      %s877 = scalar_select %p876, %s35, 1
      %s878 = scalar_lea.vmem %s16, %s877
      %p879 = scmp.lt.s32.totalorder %s34, 1
      %s880 = scalar_select %p879, %s34, 1
      %s881 = smul.addr %s880, 2
      %s882 = smul.addr %s881, 8
      %s883 = scalar_lea.vmem %s19, %s882
      %p885 = scmp.eq.s32.totalorder %s35, 0
      // Predicated region
      $region97: #{_lambda_.4} parent=95 // pred_check
        %p886 = pneg %p885
      $region98: #{_lambda_.4} parent=95 // pred_check_branch
        %888 = sbr.rel (%p886) target = $region100
      $region99: #{_lambda_.4} parent=95 // pred_region
        %v889 = vld [vmem:[%s815] sm:$0xff]
        %v890 = vld [vmem:[%s815 + $0x8] sm:$0xff]
        %vm891 = vcmask 261120
        %892 = vst.msk [vmem:[%s883] sm:$0xff] %vm891, %v889
        %893 = vst.msk [vmem:[%s883 + $0x8] sm:$0xff] %vm891, %v890
      $region100: #{_lambda_.4} parent=95 // pred_fallthru
        _
      %v894 = vld [vmem:[%s883] sm:$0xff]
      %v895 = vld [vmem:[%s883 + $0x8] sm:$0xff]
      %v896 = vld [vmem:[%s818] sm:$0x1]
      %v897 = vld [vmem:[%s821] sm:$0x1]
      %vm898 = vcmask 261120
      %v899 = vsel %vm898, %v894, 0.0
      %900 = vadd.xlane.f32.xlu0 %v899
      %v901 = vpop.xlane.xlu0 %900
      %v902 = vsel %vm898, %v895, 0.0
      %903 = vadd.xlane.f32.xlu0 %v902
      %v904 = vpop.xlane.xlu0 %903
      %v905 = vrcp.pop 32.0
      %v906 = vmul.f32 %v901, %v905
      %v907 = vmul.f32 %v904, %v905
      %v908 = vsub.f32 %v894, %v906
      %v909 = vsub.f32 %v895, %v907
      %v910 = vmul.f32 %v908, %v908
      %v911 = vmul.f32 %v909, %v909
      %v912 = vsel %vm898, %v910, 0.0
      %913 = vadd.xlane.f32.xlu0 %v912
      %v914 = vpop.xlane.xlu0 %913
      %v915 = vsel %vm898, %v911, 0.0
      %916 = vadd.xlane.f32.xlu0 %v915
      %v917 = vpop.xlane.xlu0 %916
      %v918 = vmul.f32 %v914, %v905
      %v919 = vmul.f32 %v917, %v905
      %v920 = vadd.f32 %v918, 1e-05
      %v921 = vadd.f32 %v919, 1e-05
      %v922 = vrsqrt.pop %v920
      %v923 = vrsqrt.pop %v921
      %v924 = vmul.f32 %v908, %v922
      %v925 = vmul.f32 %v909, %v923
      %v927 = vlaneseq
      %v928 = vshrl.u32 %v927, 7
      %v929 = vsub.s32 0, %v928
      %v930 = vrot.slane %v896, %v929
      %v932 = vmul.f32 %v924, %v930
      %v933 = vmul.f32 %v925, %v930
      %v935 = vlaneseq
      %v936 = vshrl.u32 %v935, 7
      %v937 = vsub.s32 0, %v936
      %v938 = vrot.slane %v897, %v937
      %v940 = vadd.f32 %v932, %v938
      %v941 = vadd.f32 %v933, %v938
      %v942 = vlaneseq
      %v943 = vshrl.u32 %v942, 7
      %v944 = vadd.s32 %v943, 8
      %v945 = vlaneseq
      %v946 = vand.u32 %v945, 127
      %vm947 = vcmp.le.s32.totalorder %v946, %v943
      %vm948 = vcmp.le.s32.totalorder %v946, %v944
      %v949 = vsel %vm947, 0.0, -1e+30
      %v950 = vsel %vm948, 0.0, -1e+30
      %v951 = vld [vmem:[%s826] sm:$0xf]
      %v952 = vld [vmem:[%s826 + $0x4] sm:$0xf]
      %v953 = vld [vmem:[%s826 + $0x8] sm:$0xf]
      %v954 = vld [vmem:[%s826 + $0xc] sm:$0xf]
      %v955 = vpack.c.bf16 %v941, %v940
      %v956 = vld [vmem:[%s830] sm:$0x1]
      %v958 = vlaneseq
      %v959 = vshrl.u32 %v958, 7
      %v960 = vsub.s32 0, %v959
      %v961 = vrot.slane %v956, %v960
      %v967 = vunpack.c.l.b16 %v951
      %v968 = vunpack.c.l.b16 %v952
      %v969 = vunpack.c.l.b16 %v953
      %v970 = vunpack.c.l.b16 %v954
      %v971 = vpack.c.b16 %v968, %v967
      %v972 = vpack.c.b16 %v970, %v969
      %v976 = vsel %vm898, %v955, 0
      %978 = vmatprep.subr.bf16.mxu0 0
      %979 = vmatpush1.bf16.msra.mxu0 %v971
      %980 = vmatprep.subr.bf16.mxu0 0
      %981 = vmatpush1.bf16.msra.mxu0 %v972
      %982 = vmatprep.subr.bf16.mxu0 0
      %983 = vmatpush1.bf16.msra.mxu0 0
      %984 = vmatprep.subr.bf16.mxu0 0
      %985 = vmatpush1.bf16.msra.mxu0 0
      %986 = vmatprep.subr.bf16.mxu0 0
      %987 = vmatpush1.bf16.msra.mxu0 0
      %988 = vmatprep.subr.bf16.mxu0 0
      %989 = vmatpush1.bf16.msra.mxu0 0
      %990 = vmatprep.subr.bf16.mxu0 0
      %991 = vmatpush1.bf16.msra.mxu0 0
      %992 = vmatprep.subr.bf16.mxu0 0
      %993 = vmatpush1.bf16.msra.mxu0 0
      %994 = vmatprep.subr.bf16.mxu0 0
      %995 = vmatpush1.bf16.msra.mxu0 0
      %996 = vmatprep.subr.bf16.mxu0 0
      %997 = vmatpush1.bf16.msra.mxu0 0
      %998 = vmatprep.subr.bf16.mxu0 0
      %999 = vmatpush1.bf16.msra.mxu0 0
      %1000 = vmatprep.subr.bf16.mxu0 0
      %1001 = vmatpush1.bf16.msra.mxu0 0
      %1002 = vmatprep.subr.bf16.mxu0 0
      %1003 = vmatpush1.bf16.msra.mxu0 0
      %1004 = vmatprep.subr.bf16.mxu0 0
      %1005 = vmatpush1.bf16.msra.mxu0 0
      %1006 = vmatprep.subr.bf16.mxu0 0
      %1007 = vmatpush1.bf16.msra.mxu0 0
      %1008 = vmatprep.subr.bf16.mxu0 0
      %1009 = vmatpush1.bf16.msra.mxu0 0
      %1010 = vmatprep.mubr.bf16.mxu0 0
      %1011 = vmatmul.mubr.bf16.gmra.mrb[0].mxu0 %v976
      %v1012 = vpop.f32.mrb[0].mxu0
      %v1013 = vadd.f32 %v961, %v1012
      %v1014 = vpop.f32.mrb[0].mxu0
      %v1015 = vpop.f32.mrb[0].mxu0
      %v1016 = vadd.f32 %v961, %v1015
      %v1017 = vpop.f32.mrb[0].mxu0
      %1018 = vdwg.mxu0
      %v1019 = vld [vmem:[%s835] sm:$0xf]
      %v1020 = vld [vmem:[%s835 + $0x4] sm:$0xf]
      %v1021 = vld [vmem:[%s835 + $0x8] sm:$0xf]
      %v1022 = vld [vmem:[%s835 + $0xc] sm:$0xf]
      %v1023 = vld [vmem:[%s839] sm:$0x1]
      %v1025 = vlaneseq
      %v1026 = vshrl.u32 %v1025, 7
      %v1027 = vsub.s32 0, %v1026
      %v1028 = vrot.slane %v1023, %v1027
      %v1034 = vunpack.c.l.b16 %v1019
      %v1035 = vunpack.c.l.b16 %v1020
      %v1036 = vunpack.c.l.b16 %v1021
      %v1037 = vunpack.c.l.b16 %v1022
      %v1038 = vpack.c.b16 %v1035, %v1034
      %v1039 = vpack.c.b16 %v1037, %v1036
      %1042 = vmatprep.subr.bf16.mxu0 0
      %1043 = vmatpush1.bf16.msra.mxu0 %v1038
      %1044 = vmatprep.subr.bf16.mxu0 0
      %1045 = vmatpush1.bf16.msra.mxu0 %v1039
      %1046 = vmatprep.subr.bf16.mxu0 0
      %1047 = vmatpush1.bf16.msra.mxu0 0
      %1048 = vmatprep.subr.bf16.mxu0 0
      %1049 = vmatpush1.bf16.msra.mxu0 0
      %1050 = vmatprep.subr.bf16.mxu0 0
      %1051 = vmatpush1.bf16.msra.mxu0 0
      %1052 = vmatprep.subr.bf16.mxu0 0
      %1053 = vmatpush1.bf16.msra.mxu0 0
      %1054 = vmatprep.subr.bf16.mxu0 0
      %1055 = vmatpush1.bf16.msra.mxu0 0
      %1056 = vmatprep.subr.bf16.mxu0 0
      %1057 = vmatpush1.bf16.msra.mxu0 0
      %1058 = vmatprep.subr.bf16.mxu0 0
      %1059 = vmatpush1.bf16.msra.mxu0 0
      %1060 = vmatprep.subr.bf16.mxu0 0
      %1061 = vmatpush1.bf16.msra.mxu0 0
      %1062 = vmatprep.subr.bf16.mxu0 0
      %1063 = vmatpush1.bf16.msra.mxu0 0
      %1064 = vmatprep.subr.bf16.mxu0 0
      %1065 = vmatpush1.bf16.msra.mxu0 0
      %1066 = vmatprep.subr.bf16.mxu0 0
      %1067 = vmatpush1.bf16.msra.mxu0 0
      %1068 = vmatprep.subr.bf16.mxu0 0
      %1069 = vmatpush1.bf16.msra.mxu0 0
      %1070 = vmatprep.subr.bf16.mxu0 0
      %1071 = vmatpush1.bf16.msra.mxu0 0
      %1072 = vmatprep.subr.bf16.mxu0 0
      %1073 = vmatpush1.bf16.msra.mxu0 0
      %1074 = vmatprep.mubr.bf16.mxu0 0
      %1075 = vmatmul.mubr.bf16.gmra.mrb[0].mxu0 %v976
      %v1076 = vpop.f32.mrb[0].mxu0
      %v1077 = vadd.f32 %v1028, %v1076
      %v1078 = vpop.f32.mrb[0].mxu0
      %v1079 = vpop.f32.mrb[0].mxu0
      %v1080 = vadd.f32 %v1028, %v1079
      %v1081 = vpop.f32.mrb[0].mxu0
      %1082 = vdwg.mxu0
      %v1083 = vld [vmem:[%s844] sm:$0xf]
      %v1084 = vld [vmem:[%s844 + $0x4] sm:$0xf]
      %v1085 = vld [vmem:[%s844 + $0x8] sm:$0xf]
      %v1086 = vld [vmem:[%s844 + $0xc] sm:$0xf]
      %v1087 = vld [vmem:[%s848] sm:$0x1]
      %v1089 = vlaneseq
      %v1090 = vshrl.u32 %v1089, 7
      %v1091 = vsub.s32 0, %v1090
      %v1092 = vrot.slane %v1087, %v1091
      %v1098 = vunpack.c.l.b16 %v1083
      %v1099 = vunpack.c.l.b16 %v1084
      %v1100 = vunpack.c.l.b16 %v1085
      %v1101 = vunpack.c.l.b16 %v1086
      %v1102 = vpack.c.b16 %v1099, %v1098
      %v1103 = vpack.c.b16 %v1101, %v1100
      %1106 = vmatprep.subr.bf16.mxu0 0
      %1107 = vmatpush1.bf16.msra.mxu0 %v1102
      %1108 = vmatprep.subr.bf16.mxu0 0
      %1109 = vmatpush1.bf16.msra.mxu0 %v1103
      %1110 = vmatprep.subr.bf16.mxu0 0
      %1111 = vmatpush1.bf16.msra.mxu0 0
      %1112 = vmatprep.subr.bf16.mxu0 0
      %1113 = vmatpush1.bf16.msra.mxu0 0
      %1114 = vmatprep.subr.bf16.mxu0 0
      %1115 = vmatpush1.bf16.msra.mxu0 0
      %1116 = vmatprep.subr.bf16.mxu0 0
      %1117 = vmatpush1.bf16.msra.mxu0 0
      %1118 = vmatprep.subr.bf16.mxu0 0
      %1119 = vmatpush1.bf16.msra.mxu0 0
      %1120 = vmatprep.subr.bf16.mxu0 0
      %1121 = vmatpush1.bf16.msra.mxu0 0
      %1122 = vmatprep.subr.bf16.mxu0 0
      %1123 = vmatpush1.bf16.msra.mxu0 0
      %1124 = vmatprep.subr.bf16.mxu0 0
      %1125 = vmatpush1.bf16.msra.mxu0 0
      %1126 = vmatprep.subr.bf16.mxu0 0
      %1127 = vmatpush1.bf16.msra.mxu0 0
      %1128 = vmatprep.subr.bf16.mxu0 0
      %1129 = vmatpush1.bf16.msra.mxu0 0
      %1130 = vmatprep.subr.bf16.mxu0 0
      %1131 = vmatpush1.bf16.msra.mxu0 0
      %1132 = vmatprep.subr.bf16.mxu0 0
      %1133 = vmatpush1.bf16.msra.mxu0 0
      %1134 = vmatprep.subr.bf16.mxu0 0
      %1135 = vmatpush1.bf16.msra.mxu0 0
      %1136 = vmatprep.subr.bf16.mxu0 0
      %1137 = vmatpush1.bf16.msra.mxu0 0
      %1138 = vmatprep.mubr.bf16.mxu0 0
      %1139 = vmatmul.mubr.bf16.gmra.mrb[0].mxu0 %v976
      %v1140 = vpop.f32.mrb[0].mxu0
      %v1141 = vadd.f32 %v1092, %v1140
      %v1142 = vpop.f32.mrb[0].mxu0
      %v1143 = vpop.f32.mrb[0].mxu0
      %v1144 = vadd.f32 %v1092, %v1143
      %v1145 = vpop.f32.mrb[0].mxu0
      %1146 = vdwg.mxu0
      %v1147 = vpack.c.bf16 %v1016, %v1013
      %v1148 = vpack.c.bf16 %v1080, %v1077
      %vm1149 = vcmask 64512
      %v1151 = vsel %vm1149, %v1147, 0
      %v1154 = vsel %vm1149, %v1148, 0
      %1156 = vmatprep.subr.bf16.mxu0 0
      %1157 = vmatpush1.bf16.xpose.msra.mxu0 %v1154
      %1158 = vmatprep.subr.bf16.mxu0 0
      %1159 = vmatpush1.bf16.xpose.msra.mxu0 0
      %1160 = vmatprep.subr.bf16.mxu0 0
      %1161 = vmatpush1.bf16.xpose.msra.mxu0 0
      %1162 = vmatprep.subr.bf16.mxu0 0
      %1163 = vmatpush1.bf16.xpose.msra.mxu0 0
      %1164 = vmatprep.subr.bf16.mxu0 0
      %1165 = vmatpush1.bf16.xpose.msra.mxu0 0
      %1166 = vmatprep.subr.bf16.mxu0 0
      %1167 = vmatpush1.bf16.xpose.msra.mxu0 0
      %1168 = vmatprep.subr.bf16.mxu0 0
      %1169 = vmatpush1.bf16.xpose.msra.mxu0 0
      %1170 = vmatprep.subr.bf16.mxu0 0
      %1171 = vmatpush1.bf16.xpose.msra.mxu0 0
      %1172 = vmatprep.subr.bf16.mxu0 0
      %1173 = vmatpush1.bf16.xpose.msra.mxu0 0
      %1174 = vmatprep.subr.bf16.mxu0 0
      %1175 = vmatpush1.bf16.xpose.msra.mxu0 0
      %1176 = vmatprep.subr.bf16.mxu0 0
      %1177 = vmatpush1.bf16.xpose.msra.mxu0 0
      %1178 = vmatprep.subr.bf16.mxu0 0
      %1179 = vmatpush1.bf16.xpose.msra.mxu0 0
      %1180 = vmatprep.subr.bf16.mxu0 0
      %1181 = vmatpush1.bf16.xpose.msra.mxu0 0
      %1182 = vmatprep.subr.bf16.mxu0 0
      %1183 = vmatpush1.bf16.xpose.msra.mxu0 0
      %1184 = vmatprep.subr.bf16.mxu0 0
      %1185 = vmatpush1.bf16.xpose.msra.mxu0 0
      %1186 = vmatprep.subr.bf16.mxu0 0
      %1187 = vmatpush1.bf16.xpose.msra.mxu0 0
      %1188 = vmatprep.mubr.bf16.mxu0 0
      %1189 = vmatmul.mubr.bf16.gmra.mrb[0].mxu0 %v1151
      %v1190 = vpop.f32.mrb[0].mxu0
      %v1191 = vadd.f32 0.0, %v1190
      %v1192 = vpop.f32.mrb[0].mxu0
      %v1193 = vpop.f32.mrb[0].mxu0
      %v1194 = vadd.f32 0.0, %v1193
      %v1195 = vpop.f32.mrb[0].mxu0
      %1196 = vdwg.mxu0
      %v1197 = vmul.f32 %v1191, 0.35355338
      %v1198 = vmul.f32 %v1194, 0.35355338
      %v1199 = vadd.f32 %v1197, %v949
      %v1200 = vadd.f32 %v1198, %v950
      %vm1201 = vcmask 130048
      %v1202 = vsel %vm1201, %v1199, -inf
      %1203 = vmax.xlane.f32.xlu0 %v1202
      %v1204 = vpop.xlane.xlu0 %1203
      %v1205 = vsel %vm1201, %v1200, -inf
      %1206 = vmax.xlane.f32.xlu0 %v1205
      %v1207 = vpop.xlane.xlu0 %1206
      %v1208 = vsub.f32 %v1199, %v1204
      %v1209 = vsub.f32 %v1200, %v1207
      %v1210 = vmul.f32 %v1208, 1.442695
      %v1211 = vpow.pop %v1210
      %v1212 = vmul.f32 %v1209, 1.442695
      %v1213 = vpow.pop %v1212
      %v1214 = vsel %vm1201, %v1211, 0.0
      %1215 = vadd.xlane.f32.xlu0 %v1214
      %v1216 = vpop.xlane.xlu0 %1215
      %v1217 = vsel %vm1201, %v1213, 0.0
      %1218 = vadd.xlane.f32.xlu0 %v1217
      %v1219 = vpop.xlane.xlu0 %1218
      %v1220 = vrcp.pop %v1216
      %v1221 = vrcp.pop %v1219
      %v1222 = vmul.f32 %v1211, %v1220
      %v1223 = vmul.f32 %v1213, %v1221
      %v1224 = vpack.c.bf16 %v1223, %v1222
      %v1225 = vpack.c.bf16 %v1144, %v1141
      %v1227 = vsel %vm1201, %v1224, 0
      %1229 = vmatprep.subr.bf16.mxu0 0
      %1230 = vmatpush1.bf16.msra.mxu0 %v1225
      %1231 = vmatprep.subr.bf16.mxu0 0
      %1232 = vmatpush1.bf16.msra.mxu0 0
      %1233 = vmatprep.subr.bf16.mxu0 0
      %1234 = vmatpush1.bf16.msra.mxu0 0
      %1235 = vmatprep.subr.bf16.mxu0 0
      %1236 = vmatpush1.bf16.msra.mxu0 0
      %1237 = vmatprep.subr.bf16.mxu0 0
      %1238 = vmatpush1.bf16.msra.mxu0 0
      %1239 = vmatprep.subr.bf16.mxu0 0
      %1240 = vmatpush1.bf16.msra.mxu0 0
      %1241 = vmatprep.subr.bf16.mxu0 0
      %1242 = vmatpush1.bf16.msra.mxu0 0
      %1243 = vmatprep.subr.bf16.mxu0 0
      %1244 = vmatpush1.bf16.msra.mxu0 0
      %1245 = vmatprep.subr.bf16.mxu0 0
      %1246 = vmatpush1.bf16.msra.mxu0 0
      %1247 = vmatprep.subr.bf16.mxu0 0
      %1248 = vmatpush1.bf16.msra.mxu0 0
      %1249 = vmatprep.subr.bf16.mxu0 0
      %1250 = vmatpush1.bf16.msra.mxu0 0
      %1251 = vmatprep.subr.bf16.mxu0 0
      %1252 = vmatpush1.bf16.msra.mxu0 0
      %1253 = vmatprep.subr.bf16.mxu0 0
      %1254 = vmatpush1.bf16.msra.mxu0 0
      %1255 = vmatprep.subr.bf16.mxu0 0
      %1256 = vmatpush1.bf16.msra.mxu0 0
      %1257 = vmatprep.subr.bf16.mxu0 0
      %1258 = vmatpush1.bf16.msra.mxu0 0
      %1259 = vmatprep.subr.bf16.mxu0 0
      %1260 = vmatpush1.bf16.msra.mxu0 0
      %1261 = vmatprep.mubr.bf16.mxu0 0
      %1262 = vmatmul.mubr.bf16.gmra.mrb[0].mxu0 %v1227
      %v1263 = vpop.f32.mrb[0].mxu0
      %v1264 = vadd.f32 0.0, %v1263
      %v1265 = vpop.f32.mrb[0].mxu0
      %v1266 = vpop.f32.mrb[0].mxu0
      %v1267 = vadd.f32 0.0, %v1266
      %v1268 = vpop.f32.mrb[0].mxu0
      %1269 = vdwg.mxu0
      %v1270 = vld [vmem:[%s853] sm:$0xf]
      %v1271 = vpack.c.bf16 %v1267, %v1264
      %s1272 = scalar_lea.vmem %s826, 16
      %v1273 = vld [vmem:[%s1272] sm:$0xf]
      %v1274 = vld [vmem:[%s1272 + $0x4] sm:$0xf]
      %v1275 = vld [vmem:[%s1272 + $0x8] sm:$0xf]
      %v1276 = vld [vmem:[%s1272 + $0xc] sm:$0xf]
      %s1277 = scalar_lea.vmem %s830, 1
      %v1278 = vld [vmem:[%s1277] sm:$0x1]
      %v1280 = vlaneseq
      %v1281 = vshrl.u32 %v1280, 7
      %v1282 = vsub.s32 0, %v1281
      %v1283 = vrot.slane %v1278, %v1282
      %v1289 = vunpack.c.l.b16 %v1273
      %v1290 = vunpack.c.l.b16 %v1274
      %v1291 = vunpack.c.l.b16 %v1275
      %v1292 = vunpack.c.l.b16 %v1276
      %v1293 = vpack.c.b16 %v1290, %v1289
      %v1294 = vpack.c.b16 %v1292, %v1291
      %1297 = vmatprep.subr.bf16.mxu0 0
      %1298 = vmatpush1.bf16.msra.mxu0 %v1293
      %1299 = vmatprep.subr.bf16.mxu0 0
      %1300 = vmatpush1.bf16.msra.mxu0 %v1294
      %1301 = vmatprep.subr.bf16.mxu0 0
      %1302 = vmatpush1.bf16.msra.mxu0 0
      %1303 = vmatprep.subr.bf16.mxu0 0
      %1304 = vmatpush1.bf16.msra.mxu0 0
      %1305 = vmatprep.subr.bf16.mxu0 0
      %1306 = vmatpush1.bf16.msra.mxu0 0
      %1307 = vmatprep.subr.bf16.mxu0 0
      %1308 = vmatpush1.bf16.msra.mxu0 0
      %1309 = vmatprep.subr.bf16.mxu0 0
      %1310 = vmatpush1.bf16.msra.mxu0 0
      %1311 = vmatprep.subr.bf16.mxu0 0
      %1312 = vmatpush1.bf16.msra.mxu0 0
      %1313 = vmatprep.subr.bf16.mxu0 0
      %1314 = vmatpush1.bf16.msra.mxu0 0
      %1315 = vmatprep.subr.bf16.mxu0 0
      %1316 = vmatpush1.bf16.msra.mxu0 0
      %1317 = vmatprep.subr.bf16.mxu0 0
      %1318 = vmatpush1.bf16.msra.mxu0 0
      %1319 = vmatprep.subr.bf16.mxu0 0
      %1320 = vmatpush1.bf16.msra.mxu0 0
      %1321 = vmatprep.subr.bf16.mxu0 0
      %1322 = vmatpush1.bf16.msra.mxu0 0
      %1323 = vmatprep.subr.bf16.mxu0 0
      %1324 = vmatpush1.bf16.msra.mxu0 0
      %1325 = vmatprep.subr.bf16.mxu0 0
      %1326 = vmatpush1.bf16.msra.mxu0 0
      %1327 = vmatprep.subr.bf16.mxu0 0
      %1328 = vmatpush1.bf16.msra.mxu0 0
      %1329 = vmatprep.mubr.bf16.mxu0 0
      %1330 = vmatmul.mubr.bf16.gmra.mrb[0].mxu0 %v976
      %v1331 = vpop.f32.mrb[0].mxu0
      %v1332 = vadd.f32 %v1283, %v1331
      %v1333 = vpop.f32.mrb[0].mxu0
      %v1334 = vpop.f32.mrb[0].mxu0
      %v1335 = vadd.f32 %v1283, %v1334
      %v1336 = vpop.f32.mrb[0].mxu0
      %1337 = vdwg.mxu0
      %s1338 = scalar_lea.vmem %s835, 16
      %v1339 = vld [vmem:[%s1338] sm:$0xf]
      %v1340 = vld [vmem:[%s1338 + $0x4] sm:$0xf]
      %v1341 = vld [vmem:[%s1338 + $0x8] sm:$0xf]
      %v1342 = vld [vmem:[%s1338 + $0xc] sm:$0xf]
      %s1343 = scalar_lea.vmem %s839, 1
      %v1344 = vld [vmem:[%s1343] sm:$0x1]
      %v1346 = vlaneseq
      %v1347 = vshrl.u32 %v1346, 7
      %v1348 = vsub.s32 0, %v1347
      %v1349 = vrot.slane %v1344, %v1348
      %v1355 = vunpack.c.l.b16 %v1339
      %v1356 = vunpack.c.l.b16 %v1340
      %v1357 = vunpack.c.l.b16 %v1341
      %v1358 = vunpack.c.l.b16 %v1342
      %v1359 = vpack.c.b16 %v1356, %v1355
      %v1360 = vpack.c.b16 %v1358, %v1357
      %1363 = vmatprep.subr.bf16.mxu0 0
      %1364 = vmatpush1.bf16.msra.mxu0 %v1359
      %1365 = vmatprep.subr.bf16.mxu0 0
      %1366 = vmatpush1.bf16.msra.mxu0 %v1360
      %1367 = vmatprep.subr.bf16.mxu0 0
      %1368 = vmatpush1.bf16.msra.mxu0 0
      %1369 = vmatprep.subr.bf16.mxu0 0
      %1370 = vmatpush1.bf16.msra.mxu0 0
      %1371 = vmatprep.subr.bf16.mxu0 0
      %1372 = vmatpush1.bf16.msra.mxu0 0
      %1373 = vmatprep.subr.bf16.mxu0 0
      %1374 = vmatpush1.bf16.msra.mxu0 0
      %1375 = vmatprep.subr.bf16.mxu0 0
      %1376 = vmatpush1.bf16.msra.mxu0 0
      %1377 = vmatprep.subr.bf16.mxu0 0
      %1378 = vmatpush1.bf16.msra.mxu0 0
      %1379 = vmatprep.subr.bf16.mxu0 0
      %1380 = vmatpush1.bf16.msra.mxu0 0
      %1381 = vmatprep.subr.bf16.mxu0 0
      %1382 = vmatpush1.bf16.msra.mxu0 0
      %1383 = vmatprep.subr.bf16.mxu0 0
      %1384 = vmatpush1.bf16.msra.mxu0 0
      %1385 = vmatprep.subr.bf16.mxu0 0
      %1386 = vmatpush1.bf16.msra.mxu0 0
      %1387 = vmatprep.subr.bf16.mxu0 0
      %1388 = vmatpush1.bf16.msra.mxu0 0
      %1389 = vmatprep.subr.bf16.mxu0 0
      %1390 = vmatpush1.bf16.msra.mxu0 0
      %1391 = vmatprep.subr.bf16.mxu0 0
      %1392 = vmatpush1.bf16.msra.mxu0 0
      %1393 = vmatprep.subr.bf16.mxu0 0
      %1394 = vmatpush1.bf16.msra.mxu0 0
      %1395 = vmatprep.mubr.bf16.mxu0 0
      %1396 = vmatmul.mubr.bf16.gmra.mrb[0].mxu0 %v976
      %v1397 = vpop.f32.mrb[0].mxu0
      %v1398 = vadd.f32 %v1349, %v1397
      %v1399 = vpop.f32.mrb[0].mxu0
      %v1400 = vpop.f32.mrb[0].mxu0
      %v1401 = vadd.f32 %v1349, %v1400
      %v1402 = vpop.f32.mrb[0].mxu0
      %1403 = vdwg.mxu0
      %s1404 = scalar_lea.vmem %s844, 16
      %v1405 = vld [vmem:[%s1404] sm:$0xf]
      %v1406 = vld [vmem:[%s1404 + $0x4] sm:$0xf]
      %v1407 = vld [vmem:[%s1404 + $0x8] sm:$0xf]
      %v1408 = vld [vmem:[%s1404 + $0xc] sm:$0xf]
      %s1409 = scalar_lea.vmem %s848, 1
      %v1410 = vld [vmem:[%s1409] sm:$0x1]
      %v1412 = vlaneseq
      %v1413 = vshrl.u32 %v1412, 7
      %v1414 = vsub.s32 0, %v1413
      %v1415 = vrot.slane %v1410, %v1414
      %v1421 = vunpack.c.l.b16 %v1405
      %v1422 = vunpack.c.l.b16 %v1406
      %v1423 = vunpack.c.l.b16 %v1407
      %v1424 = vunpack.c.l.b16 %v1408
      %v1425 = vpack.c.b16 %v1422, %v1421
      %v1426 = vpack.c.b16 %v1424, %v1423
      %1429 = vmatprep.subr.bf16.mxu0 0
      %1430 = vmatpush1.bf16.msra.mxu0 %v1425
      %1431 = vmatprep.subr.bf16.mxu0 0
      %1432 = vmatpush1.bf16.msra.mxu0 %v1426
      %1433 = vmatprep.subr.bf16.mxu0 0
      %1434 = vmatpush1.bf16.msra.mxu0 0
      %1435 = vmatprep.subr.bf16.mxu0 0
      %1436 = vmatpush1.bf16.msra.mxu0 0
      %1437 = vmatprep.subr.bf16.mxu0 0
      %1438 = vmatpush1.bf16.msra.mxu0 0
      %1439 = vmatprep.subr.bf16.mxu0 0
      %1440 = vmatpush1.bf16.msra.mxu0 0
      %1441 = vmatprep.subr.bf16.mxu0 0
      %1442 = vmatpush1.bf16.msra.mxu0 0
      %1443 = vmatprep.subr.bf16.mxu0 0
      %1444 = vmatpush1.bf16.msra.mxu0 0
      %1445 = vmatprep.subr.bf16.mxu0 0
      %1446 = vmatpush1.bf16.msra.mxu0 0
      %1447 = vmatprep.subr.bf16.mxu0 0
      %1448 = vmatpush1.bf16.msra.mxu0 0
      %1449 = vmatprep.subr.bf16.mxu0 0
      %1450 = vmatpush1.bf16.msra.mxu0 0
      %1451 = vmatprep.subr.bf16.mxu0 0
      %1452 = vmatpush1.bf16.msra.mxu0 0
      %1453 = vmatprep.subr.bf16.mxu0 0
      %1454 = vmatpush1.bf16.msra.mxu0 0
      %1455 = vmatprep.subr.bf16.mxu0 0
      %1456 = vmatpush1.bf16.msra.mxu0 0
      %1457 = vmatprep.subr.bf16.mxu0 0
      %1458 = vmatpush1.bf16.msra.mxu0 0
      %1459 = vmatprep.subr.bf16.mxu0 0
      %1460 = vmatpush1.bf16.msra.mxu0 0
      %1461 = vmatprep.mubr.bf16.mxu0 0
      %1462 = vmatmul.mubr.bf16.gmra.mrb[0].mxu0 %v976
      %v1463 = vpop.f32.mrb[0].mxu0
      %v1464 = vadd.f32 %v1415, %v1463
      %v1465 = vpop.f32.mrb[0].mxu0
      %v1466 = vpop.f32.mrb[0].mxu0
      %v1467 = vadd.f32 %v1415, %v1466
      %v1468 = vpop.f32.mrb[0].mxu0
      %1469 = vdwg.mxu0
      %v1470 = vpack.c.bf16 %v1335, %v1332
      %v1471 = vpack.c.bf16 %v1401, %v1398
      %v1473 = vsel %vm1149, %v1470, 0
      %v1476 = vsel %vm1149, %v1471, 0
      %1478 = vmatprep.subr.bf16.mxu0 0
      %1479 = vmatpush1.bf16.xpose.msra.mxu0 %v1476
      %1480 = vmatprep.subr.bf16.mxu0 0
      %1481 = vmatpush1.bf16.xpose.msra.mxu0 0
      %1482 = vmatprep.subr.bf16.mxu0 0
      %1483 = vmatpush1.bf16.xpose.msra.mxu0 0
      %1484 = vmatprep.subr.bf16.mxu0 0
      %1485 = vmatpush1.bf16.xpose.msra.mxu0 0
      %1486 = vmatprep.subr.bf16.mxu0 0
      %1487 = vmatpush1.bf16.xpose.msra.mxu0 0
      %1488 = vmatprep.subr.bf16.mxu0 0
      %1489 = vmatpush1.bf16.xpose.msra.mxu0 0
      %1490 = vmatprep.subr.bf16.mxu0 0
      %1491 = vmatpush1.bf16.xpose.msra.mxu0 0
      %1492 = vmatprep.subr.bf16.mxu0 0
      %1493 = vmatpush1.bf16.xpose.msra.mxu0 0
      %1494 = vmatprep.subr.bf16.mxu0 0
      %1495 = vmatpush1.bf16.xpose.msra.mxu0 0
      %1496 = vmatprep.subr.bf16.mxu0 0
      %1497 = vmatpush1.bf16.xpose.msra.mxu0 0
      %1498 = vmatprep.subr.bf16.mxu0 0
      %1499 = vmatpush1.bf16.xpose.msra.mxu0 0
      %1500 = vmatprep.subr.bf16.mxu0 0
      %1501 = vmatpush1.bf16.xpose.msra.mxu0 0
      %1502 = vmatprep.subr.bf16.mxu0 0
      %1503 = vmatpush1.bf16.xpose.msra.mxu0 0
      %1504 = vmatprep.subr.bf16.mxu0 0
      %1505 = vmatpush1.bf16.xpose.msra.mxu0 0
      %1506 = vmatprep.subr.bf16.mxu0 0
      %1507 = vmatpush1.bf16.xpose.msra.mxu0 0
      %1508 = vmatprep.subr.bf16.mxu0 0
      %1509 = vmatpush1.bf16.xpose.msra.mxu0 0
      %1510 = vmatprep.mubr.bf16.mxu0 0
      %1511 = vmatmul.mubr.bf16.gmra.mrb[0].mxu0 %v1473
      %v1512 = vpop.f32.mrb[0].mxu0
      %v1513 = vadd.f32 0.0, %v1512
      %v1514 = vpop.f32.mrb[0].mxu0
      %v1515 = vpop.f32.mrb[0].mxu0
      %v1516 = vadd.f32 0.0, %v1515
      %v1517 = vpop.f32.mrb[0].mxu0
      %1518 = vdwg.mxu0
      %v1519 = vmul.f32 %v1513, 0.35355338
      %v1520 = vmul.f32 %v1516, 0.35355338
      %v1521 = vadd.f32 %v1519, %v949
      %v1522 = vadd.f32 %v1520, %v950
      %v1523 = vsel %vm1201, %v1521, -inf
      %1524 = vmax.xlane.f32.xlu0 %v1523
      %v1525 = vpop.xlane.xlu0 %1524
      %v1526 = vsel %vm1201, %v1522, -inf
      %1527 = vmax.xlane.f32.xlu0 %v1526
      %v1528 = vpop.xlane.xlu0 %1527
      %v1529 = vsub.f32 %v1521, %v1525
      %v1530 = vsub.f32 %v1522, %v1528
      %v1531 = vmul.f32 %v1529, 1.442695
      %v1532 = vpow.pop %v1531
      %v1533 = vmul.f32 %v1530, 1.442695
      %v1534 = vpow.pop %v1533
      %v1535 = vsel %vm1201, %v1532, 0.0
      %1536 = vadd.xlane.f32.xlu0 %v1535
      %v1537 = vpop.xlane.xlu0 %1536
      %v1538 = vsel %vm1201, %v1534, 0.0
      %1539 = vadd.xlane.f32.xlu0 %v1538
      %v1540 = vpop.xlane.xlu0 %1539
      %v1541 = vrcp.pop %v1537
      %v1542 = vrcp.pop %v1540
      %v1543 = vmul.f32 %v1532, %v1541
      %v1544 = vmul.f32 %v1534, %v1542
      %v1545 = vpack.c.bf16 %v1544, %v1543
      %v1546 = vpack.c.bf16 %v1467, %v1464
      %v1548 = vsel %vm1201, %v1545, 0
      %1550 = vmatprep.subr.bf16.mxu0 0
      %1551 = vmatpush1.bf16.msra.mxu0 %v1546
      %1552 = vmatprep.subr.bf16.mxu0 0
      %1553 = vmatpush1.bf16.msra.mxu0 0
      %1554 = vmatprep.subr.bf16.mxu0 0
      %1555 = vmatpush1.bf16.msra.mxu0 0
      %1556 = vmatprep.subr.bf16.mxu0 0
      %1557 = vmatpush1.bf16.msra.mxu0 0
      %1558 = vmatprep.subr.bf16.mxu0 0
      %1559 = vmatpush1.bf16.msra.mxu0 0
      %1560 = vmatprep.subr.bf16.mxu0 0
      %1561 = vmatpush1.bf16.msra.mxu0 0
      %1562 = vmatprep.subr.bf16.mxu0 0
      %1563 = vmatpush1.bf16.msra.mxu0 0
      %1564 = vmatprep.subr.bf16.mxu0 0
      %1565 = vmatpush1.bf16.msra.mxu0 0
      %1566 = vmatprep.subr.bf16.mxu0 0
      %1567 = vmatpush1.bf16.msra.mxu0 0
      %1568 = vmatprep.subr.bf16.mxu0 0
      %1569 = vmatpush1.bf16.msra.mxu0 0
      %1570 = vmatprep.subr.bf16.mxu0 0
      %1571 = vmatpush1.bf16.msra.mxu0 0
      %1572 = vmatprep.subr.bf16.mxu0 0
      %1573 = vmatpush1.bf16.msra.mxu0 0
      %1574 = vmatprep.subr.bf16.mxu0 0
      %1575 = vmatpush1.bf16.msra.mxu0 0
      %1576 = vmatprep.subr.bf16.mxu0 0
      %1577 = vmatpush1.bf16.msra.mxu0 0
      %1578 = vmatprep.subr.bf16.mxu0 0
      %1579 = vmatpush1.bf16.msra.mxu0 0
      %1580 = vmatprep.subr.bf16.mxu0 0
      %1581 = vmatpush1.bf16.msra.mxu0 0
      %1582 = vmatprep.mubr.bf16.mxu0 0
      %1583 = vmatmul.mubr.bf16.gmra.mrb[0].mxu0 %v1548
      %v1584 = vpop.f32.mrb[0].mxu0
      %v1585 = vadd.f32 0.0, %v1584
      %v1586 = vpop.f32.mrb[0].mxu0
      %v1587 = vpop.f32.mrb[0].mxu0
      %v1588 = vadd.f32 0.0, %v1587
      %v1589 = vpop.f32.mrb[0].mxu0
      %1590 = vdwg.mxu0
      %s1591 = scalar_lea.vmem %s853, 4
      %v1592 = vld [vmem:[%s1591] sm:$0xf]
      %v1593 = vpack.c.bf16 %v1588, %v1585
      %v1595 = vsel %vm1149, %v1593, 0
      %vm1597 = vcmask 1043456
      %v1599 = vsel %vm1597, %v1592, 0
      %1601 = vmatprep.subr.bf16.mxu0 0
      %1602 = vmatpush1.bf16.msra.mxu0 %v1599
      %1603 = vmatprep.subr.bf16.mxu0 0
      %1604 = vmatpush1.bf16.msra.mxu0 0
      %1605 = vmatprep.subr.bf16.mxu0 0
      %1606 = vmatpush1.bf16.msra.mxu0 0
      %1607 = vmatprep.subr.bf16.mxu0 0
      %1608 = vmatpush1.bf16.msra.mxu0 0
      %1609 = vmatprep.subr.bf16.mxu0 0
      %1610 = vmatpush1.bf16.msra.mxu0 0
      %1611 = vmatprep.subr.bf16.mxu0 0
      %1612 = vmatpush1.bf16.msra.mxu0 0
      %1613 = vmatprep.subr.bf16.mxu0 0
      %1614 = vmatpush1.bf16.msra.mxu0 0
      %1615 = vmatprep.subr.bf16.mxu0 0
      %1616 = vmatpush1.bf16.msra.mxu0 0
      %1617 = vmatprep.subr.bf16.mxu0 0
      %1618 = vmatpush1.bf16.msra.mxu0 0
      %1619 = vmatprep.subr.bf16.mxu0 0
      %1620 = vmatpush1.bf16.msra.mxu0 0
      %1621 = vmatprep.subr.bf16.mxu0 0
      %1622 = vmatpush1.bf16.msra.mxu0 0
      %1623 = vmatprep.subr.bf16.mxu0 0
      %1624 = vmatpush1.bf16.msra.mxu0 0
      %1625 = vmatprep.subr.bf16.mxu0 0
      %1626 = vmatpush1.bf16.msra.mxu0 0
      %1627 = vmatprep.subr.bf16.mxu0 0
      %1628 = vmatpush1.bf16.msra.mxu0 0
      %1629 = vmatprep.subr.bf16.mxu0 0
      %1630 = vmatpush1.bf16.msra.mxu0 0
      %1631 = vmatprep.subr.bf16.mxu0 0
      %1632 = vmatpush1.bf16.msra.mxu0 0
      %1633 = vmatprep.mubr.bf16.mxu0 0
      %1634 = vmatmul.mubr.bf16.gmra.mrb[0].mxu0 %v1595
      %v1635 = vpop.f32.mrb[0].mxu0
      %v1636 = vadd.f32 0.0, %v1635
      %v1637 = vpop.f32.mrb[0].mxu0
      %v1638 = vpop.f32.mrb[0].mxu0
      %v1639 = vadd.f32 0.0, %v1638
      %v1640 = vpop.f32.mrb[0].mxu0
      %1641 = vdwg.mxu0
      %v1643 = vsel %vm1149, %v1271, 0
      %v1646 = vsel %vm1597, %v1270, 0
      %1648 = vmatprep.subr.bf16.mxu0 0
      %1649 = vmatpush1.bf16.msra.mxu0 %v1646
      %1650 = vmatprep.subr.bf16.mxu0 0
      %1651 = vmatpush1.bf16.msra.mxu0 0
      %1652 = vmatprep.subr.bf16.mxu0 0
      %1653 = vmatpush1.bf16.msra.mxu0 0
      %1654 = vmatprep.subr.bf16.mxu0 0
      %1655 = vmatpush1.bf16.msra.mxu0 0
      %1656 = vmatprep.subr.bf16.mxu0 0
      %1657 = vmatpush1.bf16.msra.mxu0 0
      %1658 = vmatprep.subr.bf16.mxu0 0
      %1659 = vmatpush1.bf16.msra.mxu0 0
      %1660 = vmatprep.subr.bf16.mxu0 0
      %1661 = vmatpush1.bf16.msra.mxu0 0
      %1662 = vmatprep.subr.bf16.mxu0 0
      %1663 = vmatpush1.bf16.msra.mxu0 0
      %1664 = vmatprep.subr.bf16.mxu0 0
      %1665 = vmatpush1.bf16.msra.mxu0 0
      %1666 = vmatprep.subr.bf16.mxu0 0
      %1667 = vmatpush1.bf16.msra.mxu0 0
      %1668 = vmatprep.subr.bf16.mxu0 0
      %1669 = vmatpush1.bf16.msra.mxu0 0
      %1670 = vmatprep.subr.bf16.mxu0 0
      %1671 = vmatpush1.bf16.msra.mxu0 0
      %1672 = vmatprep.subr.bf16.mxu0 0
      %1673 = vmatpush1.bf16.msra.mxu0 0
      %1674 = vmatprep.subr.bf16.mxu0 0
      %1675 = vmatpush1.bf16.msra.mxu0 0
      %1676 = vmatprep.subr.bf16.mxu0 0
      %1677 = vmatpush1.bf16.msra.mxu0 0
      %1678 = vmatprep.subr.bf16.mxu0 0
      %1679 = vmatpush1.bf16.msra.mxu0 0
      %1680 = vmatprep.mubr.bf16.mxu0 0
      %1681 = vmatmul.mubr.bf16.gmra.mrb[0].mxu0 %v1643
      %v1682 = vpop.f32.mrb[0].mxu0
      %v1683 = vadd.f32 %v1636, %v1682
      %v1684 = vpop.f32.mrb[0].mxu0
      %v1685 = vpop.f32.mrb[0].mxu0
      %v1686 = vadd.f32 %v1639, %v1685
      %v1687 = vpop.f32.mrb[0].mxu0
      %1688 = vdwg.mxu0
      %s1689 = scalar_lea.vmem %s826, 32
      %v1690 = vld [vmem:[%s1689] sm:$0xf]
      %v1691 = vld [vmem:[%s1689 + $0x4] sm:$0xf]
      %v1692 = vld [vmem:[%s1689 + $0x8] sm:$0xf]
      %v1693 = vld [vmem:[%s1689 + $0xc] sm:$0xf]
      %s1694 = scalar_lea.vmem %s830, 2
      %v1695 = vld [vmem:[%s1694] sm:$0x1]
      %v1697 = vlaneseq
      %v1698 = vshrl.u32 %v1697, 7
      %v1699 = vsub.s32 0, %v1698
      %v1700 = vrot.slane %v1695, %v1699
      %v1706 = vunpack.c.l.b16 %v1690
      %v1707 = vunpack.c.l.b16 %v1691
      %v1708 = vunpack.c.l.b16 %v1692
      %v1709 = vunpack.c.l.b16 %v1693
      %v1710 = vpack.c.b16 %v1707, %v1706
      %v1711 = vpack.c.b16 %v1709, %v1708
      %1714 = vmatprep.subr.bf16.mxu0 0
      %1715 = vmatpush1.bf16.msra.mxu0 %v1710
      %1716 = vmatprep.subr.bf16.mxu0 0
      %1717 = vmatpush1.bf16.msra.mxu0 %v1711
      %1718 = vmatprep.subr.bf16.mxu0 0
      %1719 = vmatpush1.bf16.msra.mxu0 0
      %1720 = vmatprep.subr.bf16.mxu0 0
      %1721 = vmatpush1.bf16.msra.mxu0 0
      %1722 = vmatprep.subr.bf16.mxu0 0
      %1723 = vmatpush1.bf16.msra.mxu0 0
      %1724 = vmatprep.subr.bf16.mxu0 0
      %1725 = vmatpush1.bf16.msra.mxu0 0
      %1726 = vmatprep.subr.bf16.mxu0 0
      %1727 = vmatpush1.bf16.msra.mxu0 0
      %1728 = vmatprep.subr.bf16.mxu0 0
      %1729 = vmatpush1.bf16.msra.mxu0 0
      %1730 = vmatprep.subr.bf16.mxu0 0
      %1731 = vmatpush1.bf16.msra.mxu0 0
      %1732 = vmatprep.subr.bf16.mxu0 0
      %1733 = vmatpush1.bf16.msra.mxu0 0
      %1734 = vmatprep.subr.bf16.mxu0 0
      %1735 = vmatpush1.bf16.msra.mxu0 0
      %1736 = vmatprep.subr.bf16.mxu0 0
      %1737 = vmatpush1.bf16.msra.mxu0 0
      %1738 = vmatprep.subr.bf16.mxu0 0
      %1739 = vmatpush1.bf16.msra.mxu0 0
      %1740 = vmatprep.subr.bf16.mxu0 0
      %1741 = vmatpush1.bf16.msra.mxu0 0
      %1742 = vmatprep.subr.bf16.mxu0 0
      %1743 = vmatpush1.bf16.msra.mxu0 0
      %1744 = vmatprep.subr.bf16.mxu0 0
      %1745 = vmatpush1.bf16.msra.mxu0 0
      %1746 = vmatprep.mubr.bf16.mxu0 0
      %1747 = vmatmul.mubr.bf16.gmra.mrb[0].mxu0 %v976
      %v1748 = vpop.f32.mrb[0].mxu0
      %v1749 = vadd.f32 %v1700, %v1748
      %v1750 = vpop.f32.mrb[0].mxu0
      %v1751 = vpop.f32.mrb[0].mxu0
      %v1752 = vadd.f32 %v1700, %v1751
      %v1753 = vpop.f32.mrb[0].mxu0
      %1754 = vdwg.mxu0
      %s1755 = scalar_lea.vmem %s835, 32
      %v1756 = vld [vmem:[%s1755] sm:$0xf]
      %v1757 = vld [vmem:[%s1755 + $0x4] sm:$0xf]
      %v1758 = vld [vmem:[%s1755 + $0x8] sm:$0xf]
      %v1759 = vld [vmem:[%s1755 + $0xc] sm:$0xf]
      %s1760 = scalar_lea.vmem %s839, 2
      %v1761 = vld [vmem:[%s1760] sm:$0x1]
      %v1763 = vlaneseq
      %v1764 = vshrl.u32 %v1763, 7
      %v1765 = vsub.s32 0, %v1764
      %v1766 = vrot.slane %v1761, %v1765
      %v1772 = vunpack.c.l.b16 %v1756
      %v1773 = vunpack.c.l.b16 %v1757
      %v1774 = vunpack.c.l.b16 %v1758
      %v1775 = vunpack.c.l.b16 %v1759
      %v1776 = vpack.c.b16 %v1773, %v1772
      %v1777 = vpack.c.b16 %v1775, %v1774
      %1780 = vmatprep.subr.bf16.mxu0 0
      %1781 = vmatpush1.bf16.msra.mxu0 %v1776
      %1782 = vmatprep.subr.bf16.mxu0 0
      %1783 = vmatpush1.bf16.msra.mxu0 %v1777
      %1784 = vmatprep.subr.bf16.mxu0 0
      %1785 = vmatpush1.bf16.msra.mxu0 0
      %1786 = vmatprep.subr.bf16.mxu0 0
      %1787 = vmatpush1.bf16.msra.mxu0 0
      %1788 = vmatprep.subr.bf16.mxu0 0
      %1789 = vmatpush1.bf16.msra.mxu0 0
      %1790 = vmatprep.subr.bf16.mxu0 0
      %1791 = vmatpush1.bf16.msra.mxu0 0
      %1792 = vmatprep.subr.bf16.mxu0 0
      %1793 = vmatpush1.bf16.msra.mxu0 0
      %1794 = vmatprep.subr.bf16.mxu0 0
      %1795 = vmatpush1.bf16.msra.mxu0 0
      %1796 = vmatprep.subr.bf16.mxu0 0
      %1797 = vmatpush1.bf16.msra.mxu0 0
      %1798 = vmatprep.subr.bf16.mxu0 0
      %1799 = vmatpush1.bf16.msra.mxu0 0
      %1800 = vmatprep.subr.bf16.mxu0 0
      %1801 = vmatpush1.bf16.msra.mxu0 0
      %1802 = vmatprep.subr.bf16.mxu0 0
      %1803 = vmatpush1.bf16.msra.mxu0 0
      %1804 = vmatprep.subr.bf16.mxu0 0
      %1805 = vmatpush1.bf16.msra.mxu0 0
      %1806 = vmatprep.subr.bf16.mxu0 0
      %1807 = vmatpush1.bf16.msra.mxu0 0
      %1808 = vmatprep.subr.bf16.mxu0 0
      %1809 = vmatpush1.bf16.msra.mxu0 0
      %1810 = vmatprep.subr.bf16.mxu0 0
      %1811 = vmatpush1.bf16.msra.mxu0 0
      %1812 = vmatprep.mubr.bf16.mxu0 0
      %1813 = vmatmul.mubr.bf16.gmra.mrb[0].mxu0 %v976
      %v1814 = vpop.f32.mrb[0].mxu0
      %v1815 = vadd.f32 %v1766, %v1814
      %v1816 = vpop.f32.mrb[0].mxu0
      %v1817 = vpop.f32.mrb[0].mxu0
      %v1818 = vadd.f32 %v1766, %v1817
      %v1819 = vpop.f32.mrb[0].mxu0
      %1820 = vdwg.mxu0
      %s1821 = scalar_lea.vmem %s844, 32
      %v1822 = vld [vmem:[%s1821] sm:$0xf]
      %v1823 = vld [vmem:[%s1821 + $0x4] sm:$0xf]
      %v1824 = vld [vmem:[%s1821 + $0x8] sm:$0xf]
      %v1825 = vld [vmem:[%s1821 + $0xc] sm:$0xf]
      %s1826 = scalar_lea.vmem %s848, 2
      %v1827 = vld [vmem:[%s1826] sm:$0x1]
      %v1829 = vlaneseq
      %v1830 = vshrl.u32 %v1829, 7
      %v1831 = vsub.s32 0, %v1830
      %v1832 = vrot.slane %v1827, %v1831
      %v1838 = vunpack.c.l.b16 %v1822
      %v1839 = vunpack.c.l.b16 %v1823
      %v1840 = vunpack.c.l.b16 %v1824
      %v1841 = vunpack.c.l.b16 %v1825
      %v1842 = vpack.c.b16 %v1839, %v1838
      %v1843 = vpack.c.b16 %v1841, %v1840
      %1846 = vmatprep.subr.bf16.mxu0 0
      %1847 = vmatpush1.bf16.msra.mxu0 %v1842
      %1848 = vmatprep.subr.bf16.mxu0 0
      %1849 = vmatpush1.bf16.msra.mxu0 %v1843
      %1850 = vmatprep.subr.bf16.mxu0 0
      %1851 = vmatpush1.bf16.msra.mxu0 0
      %1852 = vmatprep.subr.bf16.mxu0 0
      %1853 = vmatpush1.bf16.msra.mxu0 0
      %1854 = vmatprep.subr.bf16.mxu0 0
      %1855 = vmatpush1.bf16.msra.mxu0 0
      %1856 = vmatprep.subr.bf16.mxu0 0
      %1857 = vmatpush1.bf16.msra.mxu0 0
      %1858 = vmatprep.subr.bf16.mxu0 0
      %1859 = vmatpush1.bf16.msra.mxu0 0
      %1860 = vmatprep.subr.bf16.mxu0 0
      %1861 = vmatpush1.bf16.msra.mxu0 0
      %1862 = vmatprep.subr.bf16.mxu0 0
      %1863 = vmatpush1.bf16.msra.mxu0 0
      %1864 = vmatprep.subr.bf16.mxu0 0
      %1865 = vmatpush1.bf16.msra.mxu0 0
      %1866 = vmatprep.subr.bf16.mxu0 0
      %1867 = vmatpush1.bf16.msra.mxu0 0
      %1868 = vmatprep.subr.bf16.mxu0 0
      %1869 = vmatpush1.bf16.msra.mxu0 0
      %1870 = vmatprep.subr.bf16.mxu0 0
      %1871 = vmatpush1.bf16.msra.mxu0 0
      %1872 = vmatprep.subr.bf16.mxu0 0
      %1873 = vmatpush1.bf16.msra.mxu0 0
      %1874 = vmatprep.subr.bf16.mxu0 0
      %1875 = vmatpush1.bf16.msra.mxu0 0
      %1876 = vmatprep.subr.bf16.mxu0 0
      %1877 = vmatpush1.bf16.msra.mxu0 0
      %1878 = vmatprep.mubr.bf16.mxu0 0
      %1879 = vmatmul.mubr.bf16.gmra.mrb[0].mxu0 %v976
      %v1880 = vpop.f32.mrb[0].mxu0
      %v1881 = vadd.f32 %v1832, %v1880
      %v1882 = vpop.f32.mrb[0].mxu0
      %v1883 = vpop.f32.mrb[0].mxu0
      %v1884 = vadd.f32 %v1832, %v1883
      %v1885 = vpop.f32.mrb[0].mxu0
      %1886 = vdwg.mxu0
      %v1887 = vpack.c.bf16 %v1752, %v1749
      %v1888 = vpack.c.bf16 %v1818, %v1815
      %v1890 = vsel %vm1149, %v1887, 0
      %v1893 = vsel %vm1149, %v1888, 0
      %1895 = vmatprep.subr.bf16.mxu0 0
      %1896 = vmatpush1.bf16.xpose.msra.mxu0 %v1893
      %1897 = vmatprep.subr.bf16.mxu0 0
      %1898 = vmatpush1.bf16.xpose.msra.mxu0 0
      %1899 = vmatprep.subr.bf16.mxu0 0
      %1900 = vmatpush1.bf16.xpose.msra.mxu0 0
      %1901 = vmatprep.subr.bf16.mxu0 0
      %1902 = vmatpush1.bf16.xpose.msra.mxu0 0
      %1903 = vmatprep.subr.bf16.mxu0 0
      %1904 = vmatpush1.bf16.xpose.msra.mxu0 0
      %1905 = vmatprep.subr.bf16.mxu0 0
      %1906 = vmatpush1.bf16.xpose.msra.mxu0 0
      %1907 = vmatprep.subr.bf16.mxu0 0
      %1908 = vmatpush1.bf16.xpose.msra.mxu0 0
      %1909 = vmatprep.subr.bf16.mxu0 0
      %1910 = vmatpush1.bf16.xpose.msra.mxu0 0
      %1911 = vmatprep.subr.bf16.mxu0 0
      %1912 = vmatpush1.bf16.xpose.msra.mxu0 0
      %1913 = vmatprep.subr.bf16.mxu0 0
      %1914 = vmatpush1.bf16.xpose.msra.mxu0 0
      %1915 = vmatprep.subr.bf16.mxu0 0
      %1916 = vmatpush1.bf16.xpose.msra.mxu0 0
      %1917 = vmatprep.subr.bf16.mxu0 0
      %1918 = vmatpush1.bf16.xpose.msra.mxu0 0
      %1919 = vmatprep.subr.bf16.mxu0 0
      %1920 = vmatpush1.bf16.xpose.msra.mxu0 0
      %1921 = vmatprep.subr.bf16.mxu0 0
      %1922 = vmatpush1.bf16.xpose.msra.mxu0 0
      %1923 = vmatprep.subr.bf16.mxu0 0
      %1924 = vmatpush1.bf16.xpose.msra.mxu0 0
      %1925 = vmatprep.subr.bf16.mxu0 0
      %1926 = vmatpush1.bf16.xpose.msra.mxu0 0
      %1927 = vmatprep.mubr.bf16.mxu0 0
      %1928 = vmatmul.mubr.bf16.gmra.mrb[0].mxu0 %v1890
      %v1929 = vpop.f32.mrb[0].mxu0
      %v1930 = vadd.f32 0.0, %v1929
      %v1931 = vpop.f32.mrb[0].mxu0
      %v1932 = vpop.f32.mrb[0].mxu0
      %v1933 = vadd.f32 0.0, %v1932
      %v1934 = vpop.f32.mrb[0].mxu0
      %1935 = vdwg.mxu0
      %v1936 = vmul.f32 %v1930, 0.35355338
      %v1937 = vmul.f32 %v1933, 0.35355338
      %v1938 = vadd.f32 %v1936, %v949
      %v1939 = vadd.f32 %v1937, %v950
      %v1940 = vsel %vm1201, %v1938, -inf
      %1941 = vmax.xlane.f32.xlu0 %v1940
      %v1942 = vpop.xlane.xlu0 %1941
      %v1943 = vsel %vm1201, %v1939, -inf
      %1944 = vmax.xlane.f32.xlu0 %v1943
      %v1945 = vpop.xlane.xlu0 %1944
      %v1946 = vsub.f32 %v1938, %v1942
      %v1947 = vsub.f32 %v1939, %v1945
      %v1948 = vmul.f32 %v1946, 1.442695
      %v1949 = vpow.pop %v1948
      %v1950 = vmul.f32 %v1947, 1.442695
      %v1951 = vpow.pop %v1950
      %v1952 = vsel %vm1201, %v1949, 0.0
      %1953 = vadd.xlane.f32.xlu0 %v1952
      %v1954 = vpop.xlane.xlu0 %1953
      %v1955 = vsel %vm1201, %v1951, 0.0
      %1956 = vadd.xlane.f32.xlu0 %v1955
      %v1957 = vpop.xlane.xlu0 %1956
      %v1958 = vrcp.pop %v1954
      %v1959 = vrcp.pop %v1957
      %v1960 = vmul.f32 %v1949, %v1958
      %v1961 = vmul.f32 %v1951, %v1959
      %v1962 = vpack.c.bf16 %v1961, %v1960
      %v1963 = vpack.c.bf16 %v1884, %v1881
      %v1965 = vsel %vm1201, %v1962, 0
      %1967 = vmatprep.subr.bf16.mxu0 0
      %1968 = vmatpush1.bf16.msra.mxu0 %v1963
      %1969 = vmatprep.subr.bf16.mxu0 0
      %1970 = vmatpush1.bf16.msra.mxu0 0
      %1971 = vmatprep.subr.bf16.mxu0 0
      %1972 = vmatpush1.bf16.msra.mxu0 0
      %1973 = vmatprep.subr.bf16.mxu0 0
      %1974 = vmatpush1.bf16.msra.mxu0 0
      %1975 = vmatprep.subr.bf16.mxu0 0
      %1976 = vmatpush1.bf16.msra.mxu0 0
      %1977 = vmatprep.subr.bf16.mxu0 0
      %1978 = vmatpush1.bf16.msra.mxu0 0
      %1979 = vmatprep.subr.bf16.mxu0 0
      %1980 = vmatpush1.bf16.msra.mxu0 0
      %1981 = vmatprep.subr.bf16.mxu0 0
      %1982 = vmatpush1.bf16.msra.mxu0 0
      %1983 = vmatprep.subr.bf16.mxu0 0
      %1984 = vmatpush1.bf16.msra.mxu0 0
      %1985 = vmatprep.subr.bf16.mxu0 0
      %1986 = vmatpush1.bf16.msra.mxu0 0
      %1987 = vmatprep.subr.bf16.mxu0 0
      %1988 = vmatpush1.bf16.msra.mxu0 0
      %1989 = vmatprep.subr.bf16.mxu0 0
      %1990 = vmatpush1.bf16.msra.mxu0 0
      %1991 = vmatprep.subr.bf16.mxu0 0
      %1992 = vmatpush1.bf16.msra.mxu0 0
      %1993 = vmatprep.subr.bf16.mxu0 0
      %1994 = vmatpush1.bf16.msra.mxu0 0
      %1995 = vmatprep.subr.bf16.mxu0 0
      %1996 = vmatpush1.bf16.msra.mxu0 0
      %1997 = vmatprep.subr.bf16.mxu0 0
      %1998 = vmatpush1.bf16.msra.mxu0 0
      %1999 = vmatprep.mubr.bf16.mxu0 0
      %2000 = vmatmul.mubr.bf16.gmra.mrb[0].mxu0 %v1965
      %v2001 = vpop.f32.mrb[0].mxu0
      %v2002 = vadd.f32 0.0, %v2001
      %v2003 = vpop.f32.mrb[0].mxu0
      %v2004 = vpop.f32.mrb[0].mxu0
      %v2005 = vadd.f32 0.0, %v2004
      %v2006 = vpop.f32.mrb[0].mxu0
      %2007 = vdwg.mxu0
      %s2008 = scalar_lea.vmem %s853, 8
      %v2009 = vld [vmem:[%s2008] sm:$0xf]
      %v2010 = vpack.c.bf16 %v2005, %v2002
      %v2012 = vsel %vm1149, %v2010, 0
      %v2015 = vsel %vm1597, %v2009, 0
      %2017 = vmatprep.subr.bf16.mxu0 0
      %2018 = vmatpush1.bf16.msra.mxu0 %v2015
      %2019 = vmatprep.subr.bf16.mxu0 0
      %2020 = vmatpush1.bf16.msra.mxu0 0
      %2021 = vmatprep.subr.bf16.mxu0 0
      %2022 = vmatpush1.bf16.msra.mxu0 0
      %2023 = vmatprep.subr.bf16.mxu0 0
      %2024 = vmatpush1.bf16.msra.mxu0 0
      %2025 = vmatprep.subr.bf16.mxu0 0
      %2026 = vmatpush1.bf16.msra.mxu0 0
      %2027 = vmatprep.subr.bf16.mxu0 0
      %2028 = vmatpush1.bf16.msra.mxu0 0
      %2029 = vmatprep.subr.bf16.mxu0 0
      %2030 = vmatpush1.bf16.msra.mxu0 0
      %2031 = vmatprep.subr.bf16.mxu0 0
      %2032 = vmatpush1.bf16.msra.mxu0 0
      %2033 = vmatprep.subr.bf16.mxu0 0
      %2034 = vmatpush1.bf16.msra.mxu0 0
      %2035 = vmatprep.subr.bf16.mxu0 0
      %2036 = vmatpush1.bf16.msra.mxu0 0
      %2037 = vmatprep.subr.bf16.mxu0 0
      %2038 = vmatpush1.bf16.msra.mxu0 0
      %2039 = vmatprep.subr.bf16.mxu0 0
      %2040 = vmatpush1.bf16.msra.mxu0 0
      %2041 = vmatprep.subr.bf16.mxu0 0
      %2042 = vmatpush1.bf16.msra.mxu0 0
      %2043 = vmatprep.subr.bf16.mxu0 0
      %2044 = vmatpush1.bf16.msra.mxu0 0
      %2045 = vmatprep.subr.bf16.mxu0 0
      %2046 = vmatpush1.bf16.msra.mxu0 0
      %2047 = vmatprep.subr.bf16.mxu0 0
      %2048 = vmatpush1.bf16.msra.mxu0 0
      %2049 = vmatprep.mubr.bf16.mxu0 0
      %2050 = vmatmul.mubr.bf16.gmra.mrb[0].mxu0 %v2012
      %v2051 = vpop.f32.mrb[0].mxu0
      %v2052 = vadd.f32 0.0, %v2051
      %v2053 = vpop.f32.mrb[0].mxu0
      %v2054 = vpop.f32.mrb[0].mxu0
      %v2055 = vadd.f32 0.0, %v2054
      %v2056 = vpop.f32.mrb[0].mxu0
      %2057 = vdwg.mxu0
      %v2058 = vadd.f32 %v1683, %v2052
      %v2059 = vadd.f32 %v1686, %v2055
      %s2060 = scalar_lea.vmem %s826, 48
      %v2061 = vld [vmem:[%s2060] sm:$0xf]
      %v2062 = vld [vmem:[%s2060 + $0x4] sm:$0xf]
      %v2063 = vld [vmem:[%s2060 + $0x8] sm:$0xf]
      %v2064 = vld [vmem:[%s2060 + $0xc] sm:$0xf]
      %s2065 = scalar_lea.vmem %s830, 3
      %v2066 = vld [vmem:[%s2065] sm:$0x1]
      %v2068 = vlaneseq
      %v2069 = vshrl.u32 %v2068, 7
      %v2070 = vsub.s32 0, %v2069
      %v2071 = vrot.slane %v2066, %v2070
      %v2077 = vunpack.c.l.b16 %v2061
      %v2078 = vunpack.c.l.b16 %v2062
      %v2079 = vunpack.c.l.b16 %v2063
      %v2080 = vunpack.c.l.b16 %v2064
      %v2081 = vpack.c.b16 %v2078, %v2077
      %v2082 = vpack.c.b16 %v2080, %v2079
      %2085 = vmatprep.subr.bf16.mxu0 0
      %2086 = vmatpush1.bf16.msra.mxu0 %v2081
      %2087 = vmatprep.subr.bf16.mxu0 0
      %2088 = vmatpush1.bf16.msra.mxu0 %v2082
      %2089 = vmatprep.subr.bf16.mxu0 0
      %2090 = vmatpush1.bf16.msra.mxu0 0
      %2091 = vmatprep.subr.bf16.mxu0 0
      %2092 = vmatpush1.bf16.msra.mxu0 0
      %2093 = vmatprep.subr.bf16.mxu0 0
      %2094 = vmatpush1.bf16.msra.mxu0 0
      %2095 = vmatprep.subr.bf16.mxu0 0
      %2096 = vmatpush1.bf16.msra.mxu0 0
      %2097 = vmatprep.subr.bf16.mxu0 0
      %2098 = vmatpush1.bf16.msra.mxu0 0
      %2099 = vmatprep.subr.bf16.mxu0 0
      %2100 = vmatpush1.bf16.msra.mxu0 0
      %2101 = vmatprep.subr.bf16.mxu0 0
      %2102 = vmatpush1.bf16.msra.mxu0 0
      %2103 = vmatprep.subr.bf16.mxu0 0
      %2104 = vmatpush1.bf16.msra.mxu0 0
      %2105 = vmatprep.subr.bf16.mxu0 0
      %2106 = vmatpush1.bf16.msra.mxu0 0
      %2107 = vmatprep.subr.bf16.mxu0 0
      %2108 = vmatpush1.bf16.msra.mxu0 0
      %2109 = vmatprep.subr.bf16.mxu0 0
      %2110 = vmatpush1.bf16.msra.mxu0 0
      %2111 = vmatprep.subr.bf16.mxu0 0
      %2112 = vmatpush1.bf16.msra.mxu0 0
      %2113 = vmatprep.subr.bf16.mxu0 0
      %2114 = vmatpush1.bf16.msra.mxu0 0
      %2115 = vmatprep.subr.bf16.mxu0 0
      %2116 = vmatpush1.bf16.msra.mxu0 0
      %2117 = vmatprep.mubr.bf16.mxu0 0
      %2118 = vmatmul.mubr.bf16.gmra.mrb[0].mxu0 %v976
      %v2119 = vpop.f32.mrb[0].mxu0
      %v2120 = vadd.f32 %v2071, %v2119
      %v2121 = vpop.f32.mrb[0].mxu0
      %v2122 = vpop.f32.mrb[0].mxu0
      %v2123 = vadd.f32 %v2071, %v2122
      %v2124 = vpop.f32.mrb[0].mxu0
      %2125 = vdwg.mxu0
      %s2126 = scalar_lea.vmem %s835, 48
      %v2127 = vld [vmem:[%s2126] sm:$0xf]
      %v2128 = vld [vmem:[%s2126 + $0x4] sm:$0xf]
      %v2129 = vld [vmem:[%s2126 + $0x8] sm:$0xf]
      %v2130 = vld [vmem:[%s2126 + $0xc] sm:$0xf]
      %s2131 = scalar_lea.vmem %s839, 3
      %v2132 = vld [vmem:[%s2131] sm:$0x1]
      %v2134 = vlaneseq
      %v2135 = vshrl.u32 %v2134, 7
      %v2136 = vsub.s32 0, %v2135
      %v2137 = vrot.slane %v2132, %v2136
      %v2143 = vunpack.c.l.b16 %v2127
      %v2144 = vunpack.c.l.b16 %v2128
      %v2145 = vunpack.c.l.b16 %v2129
      %v2146 = vunpack.c.l.b16 %v2130
      %v2147 = vpack.c.b16 %v2144, %v2143
      %v2148 = vpack.c.b16 %v2146, %v2145
      %2151 = vmatprep.subr.bf16.mxu0 0
      %2152 = vmatpush1.bf16.msra.mxu0 %v2147
      %2153 = vmatprep.subr.bf16.mxu0 0
      %2154 = vmatpush1.bf16.msra.mxu0 %v2148
      %2155 = vmatprep.subr.bf16.mxu0 0
      %2156 = vmatpush1.bf16.msra.mxu0 0
      %2157 = vmatprep.subr.bf16.mxu0 0
      %2158 = vmatpush1.bf16.msra.mxu0 0
      %2159 = vmatprep.subr.bf16.mxu0 0
      %2160 = vmatpush1.bf16.msra.mxu0 0
      %2161 = vmatprep.subr.bf16.mxu0 0
      %2162 = vmatpush1.bf16.msra.mxu0 0
      %2163 = vmatprep.subr.bf16.mxu0 0
      %2164 = vmatpush1.bf16.msra.mxu0 0
      %2165 = vmatprep.subr.bf16.mxu0 0
      %2166 = vmatpush1.bf16.msra.mxu0 0
      %2167 = vmatprep.subr.bf16.mxu0 0
      %2168 = vmatpush1.bf16.msra.mxu0 0
      %2169 = vmatprep.subr.bf16.mxu0 0
      %2170 = vmatpush1.bf16.msra.mxu0 0
      %2171 = vmatprep.subr.bf16.mxu0 0
      %2172 = vmatpush1.bf16.msra.mxu0 0
      %2173 = vmatprep.subr.bf16.mxu0 0
      %2174 = vmatpush1.bf16.msra.mxu0 0
      %2175 = vmatprep.subr.bf16.mxu0 0
      %2176 = vmatpush1.bf16.msra.mxu0 0
      %2177 = vmatprep.subr.bf16.mxu0 0
      %2178 = vmatpush1.bf16.msra.mxu0 0
      %2179 = vmatprep.subr.bf16.mxu0 0
      %2180 = vmatpush1.bf16.msra.mxu0 0
      %2181 = vmatprep.subr.bf16.mxu0 0
      %2182 = vmatpush1.bf16.msra.mxu0 0
      %2183 = vmatprep.mubr.bf16.mxu0 0
      %2184 = vmatmul.mubr.bf16.gmra.mrb[0].mxu0 %v976
      %v2185 = vpop.f32.mrb[0].mxu0
      %v2186 = vadd.f32 %v2137, %v2185
      %v2187 = vpop.f32.mrb[0].mxu0
      %v2188 = vpop.f32.mrb[0].mxu0
      %v2189 = vadd.f32 %v2137, %v2188
      %v2190 = vpop.f32.mrb[0].mxu0
      %2191 = vdwg.mxu0
      %s2192 = scalar_lea.vmem %s844, 48
      %v2193 = vld [vmem:[%s2192] sm:$0xf]
      %v2194 = vld [vmem:[%s2192 + $0x4] sm:$0xf]
      %v2195 = vld [vmem:[%s2192 + $0x8] sm:$0xf]
      %v2196 = vld [vmem:[%s2192 + $0xc] sm:$0xf]
      %s2197 = scalar_lea.vmem %s848, 3
      %v2198 = vld [vmem:[%s2197] sm:$0x1]
      %v2200 = vlaneseq
      %v2201 = vshrl.u32 %v2200, 7
      %v2202 = vsub.s32 0, %v2201
      %v2203 = vrot.slane %v2198, %v2202
      %v2209 = vunpack.c.l.b16 %v2193
      %v2210 = vunpack.c.l.b16 %v2194
      %v2211 = vunpack.c.l.b16 %v2195
      %v2212 = vunpack.c.l.b16 %v2196
      %v2213 = vpack.c.b16 %v2210, %v2209
      %v2214 = vpack.c.b16 %v2212, %v2211
      %2217 = vmatprep.subr.bf16.mxu0 0
      %2218 = vmatpush1.bf16.msra.mxu0 %v2213
      %2219 = vmatprep.subr.bf16.mxu0 0
      %2220 = vmatpush1.bf16.msra.mxu0 %v2214
      %2221 = vmatprep.subr.bf16.mxu0 0
      %2222 = vmatpush1.bf16.msra.mxu0 0
      %2223 = vmatprep.subr.bf16.mxu0 0
      %2224 = vmatpush1.bf16.msra.mxu0 0
      %2225 = vmatprep.subr.bf16.mxu0 0
      %2226 = vmatpush1.bf16.msra.mxu0 0
      %2227 = vmatprep.subr.bf16.mxu0 0
      %2228 = vmatpush1.bf16.msra.mxu0 0
      %2229 = vmatprep.subr.bf16.mxu0 0
      %2230 = vmatpush1.bf16.msra.mxu0 0
      %2231 = vmatprep.subr.bf16.mxu0 0
      %2232 = vmatpush1.bf16.msra.mxu0 0
      %2233 = vmatprep.subr.bf16.mxu0 0
      %2234 = vmatpush1.bf16.msra.mxu0 0
      %2235 = vmatprep.subr.bf16.mxu0 0
      %2236 = vmatpush1.bf16.msra.mxu0 0
      %2237 = vmatprep.subr.bf16.mxu0 0
      %2238 = vmatpush1.bf16.msra.mxu0 0
      %2239 = vmatprep.subr.bf16.mxu0 0
      %2240 = vmatpush1.bf16.msra.mxu0 0
      %2241 = vmatprep.subr.bf16.mxu0 0
      %2242 = vmatpush1.bf16.msra.mxu0 0
      %2243 = vmatprep.subr.bf16.mxu0 0
      %2244 = vmatpush1.bf16.msra.mxu0 0
      %2245 = vmatprep.subr.bf16.mxu0 0
      %2246 = vmatpush1.bf16.msra.mxu0 0
      %2247 = vmatprep.subr.bf16.mxu0 0
      %2248 = vmatpush1.bf16.msra.mxu0 0
      %2249 = vmatprep.mubr.bf16.mxu0 0
      %2250 = vmatmul.mubr.bf16.gmra.mrb[0].mxu0 %v976
      %v2251 = vpop.f32.mrb[0].mxu0
      %v2252 = vadd.f32 %v2203, %v2251
      %v2253 = vpop.f32.mrb[0].mxu0
      %v2254 = vpop.f32.mrb[0].mxu0
      %v2255 = vadd.f32 %v2203, %v2254
      %v2256 = vpop.f32.mrb[0].mxu0
      %2257 = vdwg.mxu0
      %v2258 = vpack.c.bf16 %v2123, %v2120
      %v2259 = vpack.c.bf16 %v2189, %v2186
      %v2261 = vsel %vm1149, %v2258, 0
      %v2264 = vsel %vm1149, %v2259, 0
      %2266 = vmatprep.subr.bf16.mxu0 0
      %2267 = vmatpush1.bf16.xpose.msra.mxu0 %v2264
      %2268 = vmatprep.subr.bf16.mxu0 0
      %2269 = vmatpush1.bf16.xpose.msra.mxu0 0
      %2270 = vmatprep.subr.bf16.mxu0 0
      %2271 = vmatpush1.bf16.xpose.msra.mxu0 0
      %2272 = vmatprep.subr.bf16.mxu0 0
      %2273 = vmatpush1.bf16.xpose.msra.mxu0 0
      %2274 = vmatprep.subr.bf16.mxu0 0
      %2275 = vmatpush1.bf16.xpose.msra.mxu0 0
      %2276 = vmatprep.subr.bf16.mxu0 0
      %2277 = vmatpush1.bf16.xpose.msra.mxu0 0
      %2278 = vmatprep.subr.bf16.mxu0 0
      %2279 = vmatpush1.bf16.xpose.msra.mxu0 0
      %2280 = vmatprep.subr.bf16.mxu0 0
      %2281 = vmatpush1.bf16.xpose.msra.mxu0 0
      %2282 = vmatprep.subr.bf16.mxu0 0
      %2283 = vmatpush1.bf16.xpose.msra.mxu0 0
      %2284 = vmatprep.subr.bf16.mxu0 0
      %2285 = vmatpush1.bf16.xpose.msra.mxu0 0
      %2286 = vmatprep.subr.bf16.mxu0 0
      %2287 = vmatpush1.bf16.xpose.msra.mxu0 0
      %2288 = vmatprep.subr.bf16.mxu0 0
      %2289 = vmatpush1.bf16.xpose.msra.mxu0 0
      %2290 = vmatprep.subr.bf16.mxu0 0
      %2291 = vmatpush1.bf16.xpose.msra.mxu0 0
      %2292 = vmatprep.subr.bf16.mxu0 0
      %2293 = vmatpush1.bf16.xpose.msra.mxu0 0
      %2294 = vmatprep.subr.bf16.mxu0 0
      %2295 = vmatpush1.bf16.xpose.msra.mxu0 0
      %2296 = vmatprep.subr.bf16.mxu0 0
      %2297 = vmatpush1.bf16.xpose.msra.mxu0 0
      %2298 = vmatprep.mubr.bf16.mxu0 0
      %2299 = vmatmul.mubr.bf16.gmra.mrb[0].mxu0 %v2261
      %v2300 = vpop.f32.mrb[0].mxu0
      %v2301 = vadd.f32 0.0, %v2300
      %v2302 = vpop.f32.mrb[0].mxu0
      %v2303 = vpop.f32.mrb[0].mxu0
      %v2304 = vadd.f32 0.0, %v2303
      %v2305 = vpop.f32.mrb[0].mxu0
      %2306 = vdwg.mxu0
      %v2307 = vmul.f32 %v2301, 0.35355338
      %v2308 = vmul.f32 %v2304, 0.35355338
      %v2309 = vadd.f32 %v2307, %v949
      %v2310 = vadd.f32 %v2308, %v950
      %v2311 = vsel %vm1201, %v2309, -inf
      %2312 = vmax.xlane.f32.xlu0 %v2311
      %v2313 = vpop.xlane.xlu0 %2312
      %v2314 = vsel %vm1201, %v2310, -inf
      %2315 = vmax.xlane.f32.xlu0 %v2314
      %v2316 = vpop.xlane.xlu0 %2315
      %v2317 = vsub.f32 %v2309, %v2313
      %v2318 = vsub.f32 %v2310, %v2316
      %v2319 = vmul.f32 %v2317, 1.442695
      %v2320 = vpow.pop %v2319
      %v2321 = vmul.f32 %v2318, 1.442695
      %v2322 = vpow.pop %v2321
      %v2323 = vsel %vm1201, %v2320, 0.0
      %2324 = vadd.xlane.f32.xlu0 %v2323
      %v2325 = vpop.xlane.xlu0 %2324
      %v2326 = vsel %vm1201, %v2322, 0.0
      %2327 = vadd.xlane.f32.xlu0 %v2326
      %v2328 = vpop.xlane.xlu0 %2327
      %v2329 = vrcp.pop %v2325
      %v2330 = vrcp.pop %v2328
      %v2331 = vmul.f32 %v2320, %v2329
      %v2332 = vmul.f32 %v2322, %v2330
      %v2333 = vpack.c.bf16 %v2332, %v2331
      %v2334 = vpack.c.bf16 %v2255, %v2252
      %v2336 = vsel %vm1201, %v2333, 0
      %2338 = vmatprep.subr.bf16.mxu0 0
      %2339 = vmatpush1.bf16.msra.mxu0 %v2334
      %2340 = vmatprep.subr.bf16.mxu0 0
      %2341 = vmatpush1.bf16.msra.mxu0 0
      %2342 = vmatprep.subr.bf16.mxu0 0
      %2343 = vmatpush1.bf16.msra.mxu0 0
      %2344 = vmatprep.subr.bf16.mxu0 0
      %2345 = vmatpush1.bf16.msra.mxu0 0
      %2346 = vmatprep.subr.bf16.mxu0 0
      %2347 = vmatpush1.bf16.msra.mxu0 0
      %2348 = vmatprep.subr.bf16.mxu0 0
      %2349 = vmatpush1.bf16.msra.mxu0 0
      %2350 = vmatprep.subr.bf16.mxu0 0
      %2351 = vmatpush1.bf16.msra.mxu0 0
      %2352 = vmatprep.subr.bf16.mxu0 0
      %2353 = vmatpush1.bf16.msra.mxu0 0
      %2354 = vmatprep.subr.bf16.mxu0 0
      %2355 = vmatpush1.bf16.msra.mxu0 0
      %2356 = vmatprep.subr.bf16.mxu0 0
      %2357 = vmatpush1.bf16.msra.mxu0 0
      %2358 = vmatprep.subr.bf16.mxu0 0
      %2359 = vmatpush1.bf16.msra.mxu0 0
      %2360 = vmatprep.subr.bf16.mxu0 0
      %2361 = vmatpush1.bf16.msra.mxu0 0
      %2362 = vmatprep.subr.bf16.mxu0 0
      %2363 = vmatpush1.bf16.msra.mxu0 0
      %2364 = vmatprep.subr.bf16.mxu0 0
      %2365 = vmatpush1.bf16.msra.mxu0 0
      %2366 = vmatprep.subr.bf16.mxu0 0
      %2367 = vmatpush1.bf16.msra.mxu0 0
      %2368 = vmatprep.subr.bf16.mxu0 0
      %2369 = vmatpush1.bf16.msra.mxu0 0
      %2370 = vmatprep.mubr.bf16.mxu0 0
      %2371 = vmatmul.mubr.bf16.gmra.mrb[0].mxu0 %v2336
      %v2372 = vpop.f32.mrb[0].mxu0
      %v2373 = vadd.f32 0.0, %v2372
      %v2374 = vpop.f32.mrb[0].mxu0
      %v2375 = vpop.f32.mrb[0].mxu0
      %v2376 = vadd.f32 0.0, %v2375
      %v2377 = vpop.f32.mrb[0].mxu0
      %2378 = vdwg.mxu0
      %s2379 = scalar_lea.vmem %s853, 12
      %v2380 = vld [vmem:[%s2379] sm:$0xf]
      %v2381 = vpack.c.bf16 %v2376, %v2373
      %v2383 = vsel %vm1149, %v2381, 0
      %v2386 = vsel %vm1597, %v2380, 0
      %2388 = vmatprep.subr.bf16.mxu0 0
      %2389 = vmatpush1.bf16.msra.mxu0 %v2386
      %2390 = vmatprep.subr.bf16.mxu0 0
      %2391 = vmatpush1.bf16.msra.mxu0 0
      %2392 = vmatprep.subr.bf16.mxu0 0
      %2393 = vmatpush1.bf16.msra.mxu0 0
      %2394 = vmatprep.subr.bf16.mxu0 0
      %2395 = vmatpush1.bf16.msra.mxu0 0
      %2396 = vmatprep.subr.bf16.mxu0 0
      %2397 = vmatpush1.bf16.msra.mxu0 0
      %2398 = vmatprep.subr.bf16.mxu0 0
      %2399 = vmatpush1.bf16.msra.mxu0 0
      %2400 = vmatprep.subr.bf16.mxu0 0
      %2401 = vmatpush1.bf16.msra.mxu0 0
      %2402 = vmatprep.subr.bf16.mxu0 0
      %2403 = vmatpush1.bf16.msra.mxu0 0
      %2404 = vmatprep.subr.bf16.mxu0 0
      %2405 = vmatpush1.bf16.msra.mxu0 0
      %2406 = vmatprep.subr.bf16.mxu0 0
      %2407 = vmatpush1.bf16.msra.mxu0 0
      %2408 = vmatprep.subr.bf16.mxu0 0
      %2409 = vmatpush1.bf16.msra.mxu0 0
      %2410 = vmatprep.subr.bf16.mxu0 0
      %2411 = vmatpush1.bf16.msra.mxu0 0
      %2412 = vmatprep.subr.bf16.mxu0 0
      %2413 = vmatpush1.bf16.msra.mxu0 0
      %2414 = vmatprep.subr.bf16.mxu0 0
      %2415 = vmatpush1.bf16.msra.mxu0 0
      %2416 = vmatprep.subr.bf16.mxu0 0
      %2417 = vmatpush1.bf16.msra.mxu0 0
      %2418 = vmatprep.subr.bf16.mxu0 0
      %2419 = vmatpush1.bf16.msra.mxu0 0
      %2420 = vmatprep.mubr.bf16.mxu0 0
      %2421 = vmatmul.mubr.bf16.gmra.mrb[0].mxu0 %v2383
      %v2422 = vpop.f32.mrb[0].mxu0
      %v2423 = vadd.f32 0.0, %v2422
      %v2424 = vpop.f32.mrb[0].mxu0
      %v2425 = vpop.f32.mrb[0].mxu0
      %v2426 = vadd.f32 0.0, %v2425
      %v2427 = vpop.f32.mrb[0].mxu0
      %2428 = vdwg.mxu0
      %v2429 = vadd.f32 %v2058, %v2423
      %v2430 = vadd.f32 %v2059, %v2426
      %v2431 = vadd.f32 %v894, %v2429
      %v2432 = vadd.f32 %v895, %v2430
      %v2433 = vld [vmem:[%s856] sm:$0x1]
      %v2435 = vlaneseq
      %v2436 = vshrl.u32 %v2435, 7
      %v2437 = vsub.s32 0, %v2436
      %v2438 = vrot.slane %v2433, %v2437
      %v2440 = vadd.f32 %v2431, %v2438
      %v2441 = vadd.f32 %v2432, %v2438
      %v2442 = vld [vmem:[%s859] sm:$0x1]
      %v2443 = vld [vmem:[%s862] sm:$0x1]
      %v2444 = vsel %vm898, %v2440, 0.0
      %2445 = vadd.xlane.f32.xlu0 %v2444
      %v2446 = vpop.xlane.xlu0 %2445
      %v2447 = vsel %vm898, %v2441, 0.0
      %2448 = vadd.xlane.f32.xlu0 %v2447
      %v2449 = vpop.xlane.xlu0 %2448
      %v2450 = vmul.f32 %v2446, %v905
      %v2451 = vmul.f32 %v2449, %v905
      %v2452 = vsub.f32 %v2440, %v2450
      %v2453 = vsub.f32 %v2441, %v2451
      %v2454 = vmul.f32 %v2452, %v2452
      %v2455 = vmul.f32 %v2453, %v2453
      %v2456 = vsel %vm898, %v2454, 0.0
      %2457 = vadd.xlane.f32.xlu0 %v2456
      %v2458 = vpop.xlane.xlu0 %2457
      %v2459 = vsel %vm898, %v2455, 0.0
      %2460 = vadd.xlane.f32.xlu0 %v2459
      %v2461 = vpop.xlane.xlu0 %2460
      %v2462 = vmul.f32 %v2458, %v905
      %v2463 = vmul.f32 %v2461, %v905
      %v2464 = vadd.f32 %v2462, 1e-05
      %v2465 = vadd.f32 %v2463, 1e-05
      %v2466 = vrsqrt.pop %v2464
      %v2467 = vrsqrt.pop %v2465
      %v2468 = vmul.f32 %v2452, %v2466
      %v2469 = vmul.f32 %v2453, %v2467
      %v2471 = vlaneseq
      %v2472 = vshrl.u32 %v2471, 7
      %v2473 = vsub.s32 0, %v2472
      %v2474 = vrot.slane %v2442, %v2473
      %v2476 = vmul.f32 %v2468, %v2474
      %v2477 = vmul.f32 %v2469, %v2474
      %v2479 = vlaneseq
      %v2480 = vshrl.u32 %v2479, 7
      %v2481 = vsub.s32 0, %v2480
      %v2482 = vrot.slane %v2443, %v2481
      %v2484 = vadd.f32 %v2476, %v2482
      %v2485 = vadd.f32 %v2477, %v2482
      %v2486 = vld [vmem:[%s867] sm:$0xf]
      %v2487 = vld [vmem:[%s867 + $0x4] sm:$0xf]
      %v2488 = vld [vmem:[%s867 + $0x8] sm:$0xf]
      %v2489 = vld [vmem:[%s867 + $0xc] sm:$0xf]
      %v2490 = vpack.c.bf16 %v2485, %v2484
      %v2491 = vld [vmem:[%s870] sm:$0x1]
      %v2493 = vlaneseq
      %v2494 = vshrl.u32 %v2493, 7
      %v2495 = vsub.s32 0, %v2494
      %v2496 = vrot.slane %v2491, %v2495
      %v2502 = vunpack.c.l.b16 %v2486
      %v2503 = vunpack.c.l.b16 %v2487
      %v2504 = vunpack.c.l.b16 %v2488
      %v2505 = vunpack.c.l.b16 %v2489
      %v2506 = vpack.c.b16 %v2503, %v2502
      %v2507 = vpack.c.b16 %v2505, %v2504
      %v2511 = vsel %vm898, %v2490, 0
      %2513 = vmatprep.subr.bf16.mxu0 0
      %2514 = vmatpush1.bf16.msra.mxu0 %v2506
      %2515 = vmatprep.subr.bf16.mxu0 0
      %2516 = vmatpush1.bf16.msra.mxu0 %v2507
      %2517 = vmatprep.subr.bf16.mxu0 0
      %2518 = vmatpush1.bf16.msra.mxu0 0
      %2519 = vmatprep.subr.bf16.mxu0 0
      %2520 = vmatpush1.bf16.msra.mxu0 0
      %2521 = vmatprep.subr.bf16.mxu0 0
      %2522 = vmatpush1.bf16.msra.mxu0 0
      %2523 = vmatprep.subr.bf16.mxu0 0
      %2524 = vmatpush1.bf16.msra.mxu0 0
      %2525 = vmatprep.subr.bf16.mxu0 0
      %2526 = vmatpush1.bf16.msra.mxu0 0
      %2527 = vmatprep.subr.bf16.mxu0 0
      %2528 = vmatpush1.bf16.msra.mxu0 0
      %2529 = vmatprep.subr.bf16.mxu0 0
      %2530 = vmatpush1.bf16.msra.mxu0 0
      %2531 = vmatprep.subr.bf16.mxu0 0
      %2532 = vmatpush1.bf16.msra.mxu0 0
      %2533 = vmatprep.subr.bf16.mxu0 0
      %2534 = vmatpush1.bf16.msra.mxu0 0
      %2535 = vmatprep.subr.bf16.mxu0 0
      %2536 = vmatpush1.bf16.msra.mxu0 0
      %2537 = vmatprep.subr.bf16.mxu0 0
      %2538 = vmatpush1.bf16.msra.mxu0 0
      %2539 = vmatprep.subr.bf16.mxu0 0
      %2540 = vmatpush1.bf16.msra.mxu0 0
      %2541 = vmatprep.subr.bf16.mxu0 0
      %2542 = vmatpush1.bf16.msra.mxu0 0
      %2543 = vmatprep.subr.bf16.mxu0 0
      %2544 = vmatpush1.bf16.msra.mxu0 0
      %2545 = vmatprep.mubr.bf16.mxu0 0
      %2546 = vmatmul.mubr.bf16.gmra.mrb[0].mxu0 %v2511
      %v2547 = vpop.f32.mrb[0].mxu0
      %v2548 = vadd.f32 %v2496, %v2547
      %v2549 = vpop.f32.mrb[0].mxu0
      %v2550 = vpop.f32.mrb[0].mxu0
      %v2551 = vadd.f32 %v2496, %v2550
      %v2552 = vpop.f32.mrb[0].mxu0
      %2553 = vdwg.mxu0
      %v2554 = vmul.f32 %v2548, 0.5
      %v2555 = vmul.f32 %v2551, 0.5
      %v2556 = vmul.f32 %v2548, 0.044715
      %v2557 = vmul.f32 %v2551, 0.044715
      %v2558 = vmul.f32 %v2556, %v2548
      %v2559 = vmul.f32 %v2557, %v2551
      %v2560 = vmul.f32 %v2558, %v2548
      %v2561 = vmul.f32 %v2559, %v2551
      %v2562 = vadd.f32 %v2548, %v2560
      %v2563 = vadd.f32 %v2551, %v2561
      %v2564 = vmul.f32 %v2562, 0.7978846
      %v2565 = vmul.f32 %v2563, 0.7978846
      %v2566 = vtanh.pop %v2564
      %v2567 = vtanh.pop %v2565
      %v2568 = vadd.f32 %v2566, 1.0
      %v2569 = vadd.f32 %v2567, 1.0
      %v2570 = vmul.f32 %v2554, %v2568
      %v2571 = vmul.f32 %v2555, %v2569
      %v2572 = vld [vmem:[%s875] sm:$0xf]
      %v2573 = vld [vmem:[%s875 + $0x4] sm:$0xf]
      %v2574 = vld [vmem:[%s875 + $0x8] sm:$0xf]
      %v2575 = vld [vmem:[%s875 + $0xc] sm:$0xf]
      %v2576 = vld [vmem:[%s875 + $0x10] sm:$0xf]
      %v2577 = vld [vmem:[%s875 + $0x14] sm:$0xf]
      %v2578 = vld [vmem:[%s875 + $0x18] sm:$0xf]
      %v2579 = vld [vmem:[%s875 + $0x1c] sm:$0xf]
      %v2580 = vld [vmem:[%s875 + $0x20] sm:$0xf]
      %v2581 = vld [vmem:[%s875 + $0x24] sm:$0xf]
      %v2582 = vld [vmem:[%s875 + $0x28] sm:$0xf]
      %v2583 = vld [vmem:[%s875 + $0x2c] sm:$0xf]
      %v2584 = vld [vmem:[%s875 + $0x30] sm:$0xf]
      %v2585 = vld [vmem:[%s875 + $0x34] sm:$0xf]
      %v2586 = vld [vmem:[%s875 + $0x38] sm:$0xf]
      %v2587 = vld [vmem:[%s875 + $0x3c] sm:$0xf]
      %v2588 = vpack.c.bf16 %v2571, %v2570
      %v2605 = vunpack.c.l.b16 %v2572
      %v2606 = vunpack.c.l.b16 %v2573
      %v2607 = vunpack.c.l.b16 %v2574
      %v2608 = vunpack.c.l.b16 %v2575
      %v2609 = vunpack.c.l.b16 %v2576
      %v2610 = vunpack.c.l.b16 %v2577
      %v2611 = vunpack.c.l.b16 %v2578
      %v2612 = vunpack.c.l.b16 %v2579
      %v2613 = vunpack.c.l.b16 %v2580
      %v2614 = vunpack.c.l.b16 %v2581
      %v2615 = vunpack.c.l.b16 %v2582
      %v2616 = vunpack.c.l.b16 %v2583
      %v2617 = vunpack.c.l.b16 %v2584
      %v2618 = vunpack.c.l.b16 %v2585
      %v2619 = vunpack.c.l.b16 %v2586
      %v2620 = vunpack.c.l.b16 %v2587
      %v2621 = vpack.c.b16 %v2606, %v2605
      %v2622 = vpack.c.b16 %v2608, %v2607
      %v2623 = vpack.c.b16 %v2610, %v2609
      %v2624 = vpack.c.b16 %v2612, %v2611
      %v2625 = vpack.c.b16 %v2614, %v2613
      %v2626 = vpack.c.b16 %v2616, %v2615
      %v2627 = vpack.c.b16 %v2618, %v2617
      %v2628 = vpack.c.b16 %v2620, %v2619
      %2637 = vmatprep.subr.bf16.mxu0 0
      %2638 = vmatpush1.bf16.msra.mxu0 %v2621
      %2639 = vmatprep.subr.bf16.mxu0 0
      %2640 = vmatpush1.bf16.msra.mxu0 %v2622
      %2641 = vmatprep.subr.bf16.mxu0 0
      %2642 = vmatpush1.bf16.msra.mxu0 %v2623
      %2643 = vmatprep.subr.bf16.mxu0 0
      %2644 = vmatpush1.bf16.msra.mxu0 %v2624
      %2645 = vmatprep.subr.bf16.mxu0 0
      %2646 = vmatpush1.bf16.msra.mxu0 %v2625
      %2647 = vmatprep.subr.bf16.mxu0 0
      %2648 = vmatpush1.bf16.msra.mxu0 %v2626
      %2649 = vmatprep.subr.bf16.mxu0 0
      %2650 = vmatpush1.bf16.msra.mxu0 %v2627
      %2651 = vmatprep.subr.bf16.mxu0 0
      %2652 = vmatpush1.bf16.msra.mxu0 %v2628
      %2653 = vmatprep.subr.bf16.mxu0 0
      %2654 = vmatpush1.bf16.msra.mxu0 0
      %2655 = vmatprep.subr.bf16.mxu0 0
      %2656 = vmatpush1.bf16.msra.mxu0 0
      %2657 = vmatprep.subr.bf16.mxu0 0
      %2658 = vmatpush1.bf16.msra.mxu0 0
      %2659 = vmatprep.subr.bf16.mxu0 0
      %2660 = vmatpush1.bf16.msra.mxu0 0
      %2661 = vmatprep.subr.bf16.mxu0 0
      %2662 = vmatpush1.bf16.msra.mxu0 0
      %2663 = vmatprep.subr.bf16.mxu0 0
      %2664 = vmatpush1.bf16.msra.mxu0 0
      %2665 = vmatprep.subr.bf16.mxu0 0
      %2666 = vmatpush1.bf16.msra.mxu0 0
      %2667 = vmatprep.subr.bf16.mxu0 0
      %2668 = vmatpush1.bf16.msra.mxu0 0
      %2669 = vmatprep.mubr.bf16.mxu0 0
      %2670 = vmatmul.mubr.bf16.gmra.mrb[0].mxu0 %v2588
      %v2671 = vpop.f32.mrb[0].mxu0
      %v2672 = vadd.f32 0.0, %v2671
      %v2673 = vpop.f32.mrb[0].mxu0
      %v2674 = vpop.f32.mrb[0].mxu0
      %v2675 = vadd.f32 0.0, %v2674
      %v2676 = vpop.f32.mrb[0].mxu0
      %2677 = vdwg.mxu0
      %v2678 = vadd.f32 %v2440, %v2672
      %v2679 = vadd.f32 %v2441, %v2675
      %v2680 = vld [vmem:[%s878] sm:$0x1]
      %v2682 = vlaneseq
      %v2683 = vshrl.u32 %v2682, 7
      %v2684 = vsub.s32 0, %v2683
      %v2685 = vrot.slane %v2680, %v2684
      %v2687 = vadd.f32 %v2678, %v2685
      %v2688 = vadd.f32 %v2679, %v2685
      %p2689 = scmp.lt.s32.totalorder %s35, 1
      // Predicated region
      $region101: #{_lambda_.4} parent=95 // pred_check
        %p2690 = pneg %p2689
      $region102: #{_lambda_.4} parent=95 // pred_check_branch
        %2692 = sbr.rel (%p2690) target = $region104
      $region103: #{_lambda_.4} parent=95 // pred_region
        %2693 = vst.msk [vmem:[%s883] sm:$0xff] %vm898, %v2687
        %2694 = vst.msk [vmem:[%s883 + $0x8] sm:$0xff] %vm898, %v2688
      $region104: #{_lambda_.4} parent=95 // pred_fallthru
        _
      %p2695 = scmp.eq.s32.totalorder %s35, 1
      // Predicated region
      $region105: #{_lambda_.4} parent=95 // pred_check
        %p2696 = pneg %p2695
      $region106: #{_lambda_.4} parent=95 // pred_check_branch
        %2698 = sbr.rel (%p2696) target = $region108
      $region107: #{_lambda_.4} parent=95 // pred_region
        %v2699 = vld [vmem:[%s17] sm:$0x1]
        %v2700 = vld [vmem:[%s18] sm:$0x1]
        %v2701 = vsel %vm898, %v2687, 0.0
        %2702 = vadd.xlane.f32.xlu0 %v2701
        %v2703 = vpop.xlane.xlu0 %2702
        %v2704 = vsel %vm898, %v2688, 0.0
        %2705 = vadd.xlane.f32.xlu0 %v2704
        %v2706 = vpop.xlane.xlu0 %2705
        %v2707 = vmul.f32 %v2703, %v905
        %v2708 = vmul.f32 %v2706, %v905
        %v2709 = vsub.f32 %v2687, %v2707
        %v2710 = vsub.f32 %v2688, %v2708
        %v2711 = vmul.f32 %v2709, %v2709
        %v2712 = vmul.f32 %v2710, %v2710
        %v2713 = vsel %vm898, %v2711, 0.0
        %2714 = vadd.xlane.f32.xlu0 %v2713
        %v2715 = vpop.xlane.xlu0 %2714
        %v2716 = vsel %vm898, %v2712, 0.0
        %2717 = vadd.xlane.f32.xlu0 %v2716
        %v2718 = vpop.xlane.xlu0 %2717
        %v2719 = vmul.f32 %v2715, %v905
        %v2720 = vmul.f32 %v2718, %v905
        %v2721 = vadd.f32 %v2719, 1e-05
        %v2722 = vadd.f32 %v2720, 1e-05
        %v2723 = vrsqrt.pop %v2721
        %v2724 = vrsqrt.pop %v2722
        %v2725 = vmul.f32 %v2709, %v2723
        %v2726 = vmul.f32 %v2710, %v2724
        %v2728 = vlaneseq
        %v2729 = vshrl.u32 %v2728, 7
        %v2730 = vsub.s32 0, %v2729
        %v2731 = vrot.slane %v2699, %v2730
        %v2733 = vmul.f32 %v2725, %v2731
        %v2734 = vmul.f32 %v2726, %v2731
        %v2736 = vlaneseq
        %v2737 = vshrl.u32 %v2736, 7
        %v2738 = vsub.s32 0, %v2737
        %v2739 = vrot.slane %v2700, %v2738
        %v2741 = vadd.f32 %v2733, %v2739
        %v2742 = vadd.f32 %v2734, %v2739
        %2743 = vst.msk [vmem:[%s883] sm:$0xff] %vm898, %v2741
        %2744 = vst.msk [vmem:[%s883 + $0x8] sm:$0xff] %vm898, %v2742
      $region108: #{_lambda_.4} parent=95 // pred_fallthru
        _
      %p2745 = scmp.lt.s32.totalorder %s34, 1
      %s2746 = scalar_select %p2745, %s34, 1
      %s2747 = smul.addr %s2746, 2
      %s2748 = smul.addr %s2747, 8
      %s2749 = scalar_lea.vmem %s19, %s2748
      // Predicated region
      $region109: #{_lambda_.4} parent=95 // pred_check
        %p2750 = pneg %p544
      $region110: #{_lambda_.4} parent=95 // pred_check_branch
        %2752 = sbr.rel (%p2750) target = $region112
      $region111: #{_lambda_.4} parent=95 // pred_region
        _
      $region112: #{_lambda_.4} parent=95 // pred_fallthru
        _
    $region96: #{_lambda_.4} parent=5 // pred_fallthru
      _
    %p2753 = scmp.le.s32.totalorder 2, %s25
    // Predicated region
    $region113: #{_lambda_.4} parent=5 // pred_check
      %p2754 = pneg %p2753
    $region114: #{_lambda_.4} parent=5 // pred_check_branch
      %2756 = sbr.rel (%p2754) target = $region116
    $region115: #{_lambda_.4} parent=5 // pred_region
      %s2757 = ssub.s32 %s25, 2
      // Predicated region
      $region117: #{_lambda_.4} parent=115 // pred_check
        %p2758 = pneg %p550
      $region118: #{_lambda_.4} parent=115 // pred_check_branch
        %2760 = sbr.rel (%p2758) target = $region120
      $region119: #{_lambda_.4} parent=115 // pred_region
        %p2761 = scmp.lt.s32.totalorder %s36, 1
        %s2762 = scalar_select %p2761, %s36, 1
        %s2763 = smul.addr %s2762, 2
        %s2764 = smul.addr %s2763, 8
        %s2765 = scalar_lea.vmem %s19, %s2764
      $region120: #{_lambda_.4} parent=115 // pred_fallthru
        _
    $region116: #{_lambda_.4} parent=5 // pred_fallthru
      _
  $region6: #{_lambda_.4} parent=0 // loop_footer
    %s29 = sadd.s32 1, %s25
  $region7: #{_lambda_.4} parent=0 // loop_footer_branch
    %24 = sbr.rel target = $region3
  $region8: #{_lambda_.4} parent=0 // loop_exit
    _

</llo_original>
